<compile_context>
chip_gen: v7x
topology: tpu7x:2x2x1
jax: 0.10.0
libtpu: 0.0.40
codegen_flags: <defaults>
</compile_context>

<pallas_src>
import math

import jax
import jax.numpy as jnp
from jax.experimental import pallas as pl
from jax.experimental.pallas import tpu as pltpu

# ----------------------------- configuration --------------------------------
B = 2                    # batch (graphs)
N = 8                    # num_nodes (sequence length)
BN = B * N               # flattened rows
IN_DIM = 16              # input_dim
HID = 32                 # hidden_dim
HEADS = 4                # num_heads
HEAD_DIM = HID // HEADS  # 8
MLP_HID = 2 * HID        # mlp_hidden_multiplier = 2
N_CLASSES = 3
NUM_LAYERS = 2
EPS = 1e-5               # nn.LayerNorm default eps
FACTOR = 1.0 / math.sqrt(HEAD_DIM)
NEG_BIG = -1e30
# TODO(synk): dropout layers (attn / mlp / head) are identity (rate=0, eval);
#             return_attn=False so attention maps are not materialized.

# --------------------------- packed-slab layout -------------------------------
# One f32 slab (SLAB_ROWS, SLAB_W); every tensor placed at lanes [0:width],
# sub-matrix row offsets all multiples of 8 (free sublane slices).
SLAB_W = 3 * HID                                   # 96 lanes (widest = Wqkv)
_LAYER_W_ROWS = HID + HID + MLP_HID                # wqkv(32) + w1(32) + w2(64)
R_PROJ_W = 0                                       # (IN_DIM, HID)
R_BLK_W = [IN_DIM + _LAYER_W_ROWS * l for l in range(NUM_LAYERS)]
R_HEAD_W1 = IN_DIM + _LAYER_W_ROWS * NUM_LAYERS    # (HID, HID)
R_HEAD_W2 = R_HEAD_W1 + HID                        # (HID, N_CLASSES)
R_BIAS = R_HEAD_W2 + HID                           # bias / LN rows start here
# bias rows: R_BIAS+0: proj_b; per layer (base R_BIAS+1+7l):
#   ln1_w, ln1_b, bqkv, ln2_w, ln2_b, b1, b2 ; then head_b1, head_b2
_N_BIAS = 1 + 7 * NUM_LAYERS + 2
R_MASK = ((R_BIAS + _N_BIAS + 7) // 8) * 8         # (HEADS*BN, HEADS*BN) additive mask
R_POOL = R_MASK + HEADS * BN                       # (B, BN) mean-pool matrix
SLAB_ROWS = ((R_POOL + B + 7) // 8) * 8


# ------------------------------ kernel helpers -------------------------------
def _layernorm(x, w, b):
    """Row-wise LayerNorm over the feature (lane) axis."""
    mu = jnp.mean(x, axis=-1, keepdims=True)
    xc = x - mu
    var = jnp.mean(xc * xc, axis=-1, keepdims=True)
    return xc * jax.lax.rsqrt(var + EPS) * w + b


def _transformer_block(h, ln1_w, ln1_b, wqkv, bqkv, ln2_w, ln2_b,
                       w1, b1, w2, b2, mask_add):
    """One TransformerBlock on the (B*N, HID) activation slab."""
    # --- LayerNorm 1 ---
    z1 = _layernorm(h, ln1_w, ln1_b)

    # --- fused QKV projection (FACTOR pre-folded into Wq/bq columns) ---
    qkv = jnp.dot(z1, wqkv, preferred_element_type=jnp.float32) + bqkv     # (16, 96)

    # --- single relayout: (q|k|v) head groups move from lanes to sublanes ---
    # (16, 96) -> (16, 12, 8) -> (12, 16, 8) -> (192, 8); packed row
    # r = c*BN + b*N + n with c = [q heads 0..3 | k heads | v heads].
    HB = HEADS * BN
    qkvp = jnp.transpose(
        qkv.reshape(BN, 3 * HEADS, HEAD_DIM), (1, 0, 2)).reshape(3 * HB, HEAD_DIM)
    qp = qkvp[0:HB]            # (64, 8)
    kp = qkvp[HB:2 * HB]
    vp = qkvp[2 * HB:3 * HB]

    # --- one (64,64) score matmul; contract last dims (no explicit transpose) ---
    s = jax.lax.dot_general(qp, kp, (((1,), (1,)), ((), ())),
                            preferred_element_type=jnp.float32)
    s = s + mask_add                       # additive block-diagonal mask (0 / -1e30)

    # --- stable softmax; reciprocal on the EUP slot ---
    s = s - jnp.max(s, axis=-1, keepdims=True)
    e = jnp.exp(s)
    p = e * pl.reciprocal(jnp.sum(e, axis=-1, keepdims=True), approx=True)

    # --- one PV matmul, then single inverse relayout back to lanes ---
    op = jnp.dot(p, vp, preferred_element_type=jnp.float32)               # (64, 8)
    attn_out = jnp.transpose(
        op.reshape(HEADS, BN, HEAD_DIM), (1, 0, 2)).reshape(BN, HID)      # (16, 32)

    s1 = h + attn_out                                                     # residual 1

    # --- LayerNorm 2 + BasicMLP (Linear -> ReLU -> Linear) ---
    z2 = _layernorm(s1, ln2_w, ln2_b)
    h1 = jnp.maximum(jnp.dot(z2, w1, preferred_element_type=jnp.float32) + b1, 0.0)
    return s1 + jnp.dot(h1, w2, preferred_element_type=jnp.float32) + b2  # residual 2


# ------------------------------ fused kernel ---------------------------------
def fused_forward_kernel(x_ref, p_ref, o_ref):
    """Whole forward; x and the single packed parameter slab live in VMEM."""
    mask_add = p_ref[R_MASK:R_MASK + HEADS * BN, 0:HEADS * BN]   # (64, 64)
    pool = p_ref[R_POOL:R_POOL + B, 0:BN]                        # (B, BN)

    # --- input projection (lin_proj) ---
    h = (jnp.dot(x_ref[...], p_ref[R_PROJ_W:R_PROJ_W + IN_DIM, 0:HID],
                 preferred_element_type=jnp.float32)
         + p_ref[R_BIAS:R_BIAS + 1, 0:HID])

    # --- transformer blocks (static unroll) ---
    for l in range(NUM_LAYERS):
        wb = R_BLK_W[l]
        bb = R_BIAS + 1 + 7 * l
        h = _transformer_block(
            h,
            p_ref[bb + 0:bb + 1, 0:HID], p_ref[bb + 1:bb + 2, 0:HID],       # ln1
            p_ref[wb:wb + HID, 0:3 * HID], p_ref[bb + 2:bb + 3, 0:3 * HID],  # Wqkv,bqkv
            p_ref[bb + 3:bb + 4, 0:HID], p_ref[bb + 4:bb + 5, 0:HID],        # ln2
            p_ref[wb + HID:wb + 2 * HID, 0:MLP_HID],                         # w1
            p_ref[bb + 5:bb + 6, 0:MLP_HID],                                 # b1
            p_ref[wb + 2 * HID:wb + 2 * HID + MLP_HID, 0:HID],               # w2
            p_ref[bb + 6:bb + 7, 0:HID],                                     # b2
            mask_add)

    # --- mean pooling over nodes via a tiny constant pooling matmul ---
    pooled = jnp.dot(pool, h, preferred_element_type=jnp.float32)           # (B, HID)

    # --- head BasicMLP: Linear -> ReLU -> Linear ---
    hb1 = R_BIAS + 1 + 7 * NUM_LAYERS
    hb2 = hb1 + 1
    h1 = jnp.maximum(
        jnp.dot(pooled, p_ref[R_HEAD_W1:R_HEAD_W1 + HID, 0:HID],
                preferred_element_type=jnp.float32)
        + p_ref[hb1:hb1 + 1, 0:HID], 0.0)
    o_ref[...] = (
        jnp.dot(h1, p_ref[R_HEAD_W2:R_HEAD_W2 + HID, 0:N_CLASSES],
                preferred_element_type=jnp.float32)
        + p_ref[hb2:hb2 + 1, 0:N_CLASSES])


# ------------------------------ wrapper --------------------------------------
def transformer_forward(batch, param_slab):
    x, _y = batch                                   # labels unused in forward
    b, n, _ = x.shape
    x2 = x.reshape(b * n, IN_DIM)

    vm = pl.BlockSpec(memory_space=pltpu.MemorySpace.VMEM)
    return pl.pallas_call(
        fused_forward_kernel,
        out_shape=jax.ShapeDtypeStruct((b, N_CLASSES), jnp.float32),
        in_specs=[vm, vm],
        out_specs=vm,
    )(x2, param_slab)


# ------------------------- parameter packing ---------------------------------
def pack_params(params):
    """Pack every weight/bias (+ mask & pool matrices) into one f32 slab."""
    slab = jnp.zeros((SLAB_ROWS, SLAB_W), jnp.float32)

    def put(s, r, a):
        a = jnp.asarray(a, jnp.float32)
        return s.at[r:r + a.shape[0], 0:a.shape[1]].set(a)

    slab = put(slab, R_PROJ_W, params["proj_w"])
    slab = put(slab, R_BIAS + 0, params["proj_b"])
    for l, bp in enumerate(params["blocks"]):
        # fold 1/sqrt(head_dim) into the Q columns of the fused QKV projection
        wqkv = bp["wqkv"].at[:, 0:HID].multiply(FACTOR)
        bqkv = bp["bqkv"].at[:, 0:HID].multiply(FACTOR)
        wb = R_BLK_W[l]
        slab = put(slab, wb, wqkv)
        slab = put(slab, wb + HID, bp["w1"])
        slab = put(slab, wb + 2 * HID, bp["w2"])
        bb = R_BIAS + 1 + 7 * l
        slab = put(slab, bb + 0, bp["ln1_w"])
        slab = put(slab, bb + 1, bp["ln1_b"])
        slab = put(slab, bb + 2, bqkv)
        slab = put(slab, bb + 3, bp["ln2_w"])
        slab = put(slab, bb + 4, bp["ln2_b"])
        slab = put(slab, bb + 5, bp["b1"])
        slab = put(slab, bb + 6, bp["b2"])
    slab = put(slab, R_HEAD_W1, params["head_w1"])
    slab = put(slab, R_HEAD_W2, params["head_w2"])
    slab = put(slab, R_BIAS + 1 + 7 * NUM_LAYERS, params["head_b1"])
    slab = put(slab, R_BIAS + 2 + 7 * NUM_LAYERS, params["head_b2"])

    # additive block-diagonal attention mask over packed (head, batch) blocks
    r = jnp.arange(HEADS * BN)
    mask = jnp.where((r[:, None] // N) == (r[None, :] // N),
                     0.0, NEG_BIG).astype(jnp.float32)
    slab = put(slab, R_MASK, mask)

    # mean-pooling matrix: 1/N within each graph's node rows
    rb = jnp.arange(B)[:, None]
    cb = jnp.arange(BN)[None, :] // N
    pool = jnp.where(rb == cb, 1.0 / N, 0.0).astype(jnp.float32)
    slab = put(slab, R_POOL, pool)
    return slab


# ------------------------- pure-JAX reference --------------------------------
def reference_forward(batch, params):
    x, _y = batch
    b, n, _ = x.shape
    h = x.reshape(b * n, IN_DIM) @ params["proj_w"] + params["proj_b"]
    h = h.reshape(b, n, HID)
    for bp in params["blocks"]:
        mu = h.mean(-1, keepdims=True)
        var = ((h - mu) ** 2).mean(-1, keepdims=True)
        z1 = (h - mu) / jnp.sqrt(var + EPS) * bp["ln1_w"] + bp["ln1_b"]
        qkv = z1 @ bp["wqkv"] + bp["bqkv"]
        q = qkv[..., 0:HID].reshape(b, n, HEADS, HEAD_DIM)
        k = qkv[..., HID:2 * HID].reshape(b, n, HEADS, HEAD_DIM)
        v = qkv[..., 2 * HID:].reshape(b, n, HEADS, HEAD_DIM)
        scores = jnp.einsum('bihp,bjhp->bhij', q, k) * FACTOR
        p = jax.nn.softmax(scores, axis=-1)
        attn = jnp.einsum('bhij,bjhp->bihp', p, v).reshape(b, n, HID)
        s1 = h + attn
        mu2 = s1.mean(-1, keepdims=True)
        var2 = ((s1 - mu2) ** 2).mean(-1, keepdims=True)
        z2 = (s1 - mu2) / jnp.sqrt(var2 + EPS) * bp["ln2_w"] + bp["ln2_b"]
        m = jnp.maximum(z2 @ bp["w1"] + bp["b1"], 0.0) @ bp["w2"] + bp["b2"]
        h = s1 + m
    pooled = h.mean(axis=1)
    h1 = jnp.maximum(pooled @ params["head_w1"] + params["head_b1"], 0.0)
    return h1 @ params["head_w2"] + params["head_b2"]


# --------------------------- deterministic params ----------------------------
def _lin(key, fan_in, fan_out):
    kw, kb = jax.random.split(key)
    bound = 1.0 / math.sqrt(fan_in)
    w = jax.random.uniform(kw, (fan_in, fan_out), jnp.float32, -bound, bound)
    b = jax.random.uniform(kb, (1, fan_out), jnp.float32, -bound, bound)
    return w, b


def make_params(key):
    keys = jax.random.split(key, 2 + NUM_LAYERS)
    params = {}
    params["proj_w"], params["proj_b"] = _lin(keys[0], IN_DIM, HID)
    blocks = []
    for l in range(NUM_LAYERS):
        ks = jax.random.split(keys[1 + l], 5)
        bp = {}
        bp["ln1_w"] = jnp.ones((1, HID), jnp.float32)
        bp["ln1_b"] = jnp.zeros((1, HID), jnp.float32)
        bp["ln2_w"] = jnp.ones((1, HID), jnp.float32)
        bp["ln2_b"] = jnp.zeros((1, HID), jnp.float32)
        wq, bq = _lin(ks[0], HID, HID)
        wk, bk = _lin(ks[1], HID, HID)
        wv, bv = _lin(ks[2], HID, HID)
        bp["wqkv"] = jnp.concatenate([wq, wk, wv], axis=1)   # (HID, 3*HID)
        bp["bqkv"] = jnp.concatenate([bq, bk, bv], axis=1)   # (1, 3*HID)
        bp["w1"], bp["b1"] = _lin(ks[3], HID, MLP_HID)
        bp["w2"], bp["b2"] = _lin(ks[4], MLP_HID, HID)
        blocks.append(bp)
    params["blocks"] = blocks
    kh = jax.random.split(keys[-1], 2)
    params["head_w1"], params["head_b1"] = _lin(kh[0], HID, HID)
    params["head_w2"], params["head_b2"] = _lin(kh[1], HID, N_CLASSES)
    return params


# ---------------------------------- main -------------------------------------
if __name__ == "__main__":
    root = jax.random.PRNGKey(0)
    k_params, k_x = jax.random.split(root)
    params = make_params(k_params)
    param_slab = jax.block_until_ready(pack_params(params))   # packed once, offline

    x = jax.random.normal(k_x, (B, N, IN_DIM), jnp.float32)
    y = jnp.zeros((B,), jnp.int32)        # labels (part of `batch`, unused in forward)

    fwd = jax.jit(transformer_forward)
    out = jax.block_until_ready(fwd((x, y), param_slab))

    assert out.shape == (B, N_CLASSES), out.shape
    assert bool(jnp.all(jnp.isfinite(out)))

    ref = reference_forward((x, y), params)
    assert bool(jnp.allclose(out, ref, atol=5e-2, rtol=5e-2)), (out, ref)

    print("KERNEL_OK")
</pallas_src>

<mosaic_0001>
module attributes {stable_mosaic.version = 11 : i64} {
  func.func @fused_forward_kernel(%arg0: memref<16x16xf32, #tpu.memory_space<vmem>>, %arg1: memref<432x96xf32, #tpu.memory_space<vmem>>, %arg2: memref<2x3xf32, #tpu.memory_space<vmem>>) attributes {dimension_semantics = [], scalar_prefetch = 0 : i64, scratch_operands = 0 : i64, tpu.core_type = #tpu.core_type<tc>} {
    %c360 = arith.constant 360 : index
    %c0 = arith.constant 0 : index
    %0 = vector.load %arg1[%c360, %c0] : memref<432x96xf32, #tpu.memory_space<vmem>>, vector<64x64xf32>
    %c424 = arith.constant 424 : index
    %c0_0 = arith.constant 0 : index
    %1 = vector.load %arg1[%c424, %c0_0] : memref<432x96xf32, #tpu.memory_space<vmem>>, vector<2x16xf32>
    %c0_1 = arith.constant 0 : index
    %c0_2 = arith.constant 0 : index
    %2 = vector.load %arg0[%c0_1, %c0_2] : memref<16x16xf32, #tpu.memory_space<vmem>>, vector<16x16xf32>
    %c0_3 = arith.constant 0 : index
    %c0_4 = arith.constant 0 : index
    %3 = vector.load %arg1[%c0_3, %c0_4] : memref<432x96xf32, #tpu.memory_space<vmem>>, vector<16x32xf32>
    %cst = arith.constant dense<0.000000e+00> : vector<16x32xf32>
    %4 = tpu.matmul %2, %3, %cst {dimension_numbers = #tpu.dot_dimension_numbers<[1], [0], [0], [1], [0, 0, 1, 1], [], []>} : vector<16x16xf32>, vector<16x32xf32>, vector<16x32xf32> -> vector<16x32xf32>
    %c336 = arith.constant 336 : index
    %c0_5 = arith.constant 0 : index
    %5 = vector.load %arg1[%c336, %c0_5] : memref<432x96xf32, #tpu.memory_space<vmem>>, vector<1x32xf32>
    %6 = vector.broadcast %5 : vector<1x32xf32> to vector<16x32xf32>
    %7 = arith.addf %4, %6 : vector<16x32xf32>
    %c337 = arith.constant 337 : index
    %c0_6 = arith.constant 0 : index
    %8 = vector.load %arg1[%c337, %c0_6] : memref<432x96xf32, #tpu.memory_space<vmem>>, vector<1x32xf32>
    %c338 = arith.constant 338 : index
    %c0_7 = arith.constant 0 : index
    %9 = vector.load %arg1[%c338, %c0_7] : memref<432x96xf32, #tpu.memory_space<vmem>>, vector<1x32xf32>
    %c16 = arith.constant 16 : index
    %c0_8 = arith.constant 0 : index
    %10 = vector.load %arg1[%c16, %c0_8] : memref<432x96xf32, #tpu.memory_space<vmem>>, vector<32x96xf32>
    %c339 = arith.constant 339 : index
    %c0_9 = arith.constant 0 : index
    %11 = vector.load %arg1[%c339, %c0_9] : memref<432x96xf32, #tpu.memory_space<vmem>>, vector<1x96xf32>
    %c340 = arith.constant 340 : index
    %c0_10 = arith.constant 0 : index
    %12 = vector.load %arg1[%c340, %c0_10] : memref<432x96xf32, #tpu.memory_space<vmem>>, vector<1x32xf32>
    %c341 = arith.constant 341 : index
    %c0_11 = arith.constant 0 : index
    %13 = vector.load %arg1[%c341, %c0_11] : memref<432x96xf32, #tpu.memory_space<vmem>>, vector<1x32xf32>
    %c48 = arith.constant 48 : index
    %c0_12 = arith.constant 0 : index
    %14 = vector.load %arg1[%c48, %c0_12] : memref<432x96xf32, #tpu.memory_space<vmem>>, vector<32x64xf32>
    %c342 = arith.constant 342 : index
    %c0_13 = arith.constant 0 : index
    %15 = vector.load %arg1[%c342, %c0_13] : memref<432x96xf32, #tpu.memory_space<vmem>>, vector<1x64xf32>
    %c80 = arith.constant 80 : index
    %c0_14 = arith.constant 0 : index
    %16 = vector.load %arg1[%c80, %c0_14] : memref<432x96xf32, #tpu.memory_space<vmem>>, vector<64x32xf32>
    %c343 = arith.constant 343 : index
    %c0_15 = arith.constant 0 : index
    %17 = vector.load %arg1[%c343, %c0_15] : memref<432x96xf32, #tpu.memory_space<vmem>>, vector<1x32xf32>
    %cst_16 = arith.constant dense<0.000000e+00> : vector<16xf32>
    %18 = vector.multi_reduction <add>, %7, %cst_16 [1] : vector<16x32xf32> to vector<16xf32>
    %19 = vector.shape_cast %18 : vector<16xf32> to vector<16x1xf32>
    %cst_17 = arith.constant 3.200000e+01 : f32
    %20 = vector.broadcast %cst_17 : f32 to vector<16x1xf32>
    %21 = arith.divf %19, %20 : vector<16x1xf32>
    %22 = vector.broadcast %21 : vector<16x1xf32> to vector<16x32xf32>
    %23 = arith.subf %7, %22 : vector<16x32xf32>
    %24 = arith.mulf %23, %23 : vector<16x32xf32>
    %cst_18 = arith.constant dense<0.000000e+00> : vector<16xf32>
    %25 = vector.multi_reduction <add>, %24, %cst_18 [1] : vector<16x32xf32> to vector<16xf32>
    %26 = vector.shape_cast %25 : vector<16xf32> to vector<16x1xf32>
    %cst_19 = arith.constant 3.200000e+01 : f32
    %27 = vector.broadcast %cst_19 : f32 to vector<16x1xf32>
    %28 = arith.divf %26, %27 : vector<16x1xf32>
    %cst_20 = arith.constant 9.99999974E-6 : f32
    %29 = vector.broadcast %cst_20 : f32 to vector<16x1xf32>
    %30 = arith.addf %28, %29 : vector<16x1xf32>
    %31 = math.rsqrt %30 : vector<16x1xf32>
    %32 = vector.broadcast %31 : vector<16x1xf32> to vector<16x32xf32>
    %33 = arith.mulf %23, %32 : vector<16x32xf32>
    %34 = vector.broadcast %8 : vector<1x32xf32> to vector<16x32xf32>
    %35 = arith.mulf %33, %34 : vector<16x32xf32>
    %36 = vector.broadcast %9 : vector<1x32xf32> to vector<16x32xf32>
    %37 = arith.addf %35, %36 : vector<16x32xf32>
    %cst_21 = arith.constant dense<0.000000e+00> : vector<16x96xf32>
    %38 = tpu.matmul %37, %10, %cst_21 {dimension_numbers = #tpu.dot_dimension_numbers<[1], [0], [0], [1], [0, 0, 1, 1], [], []>} : vector<16x32xf32>, vector<32x96xf32>, vector<16x96xf32> -> vector<16x96xf32>
    %39 = vector.broadcast %11 : vector<1x96xf32> to vector<16x96xf32>
    %40 = arith.addf %38, %39 : vector<16x96xf32>
    %41 = vector.shape_cast %40 : vector<16x96xf32> to vector<16x12x8xf32>
    %42 = tpu.transpose %41, [1, 0, 2] : vector<16x12x8xf32> -> vector<12x16x8xf32>
    %43 = vector.shape_cast %42 : vector<12x16x8xf32> to vector<192x8xf32>
    %44 = vector.extract_strided_slice %43 {offsets = [0, 0], sizes = [64, 8], strides = [1, 1]} : vector<192x8xf32> to vector<64x8xf32>
    %45 = vector.extract_strided_slice %43 {offsets = [64, 0], sizes = [64, 8], strides = [1, 1]} : vector<192x8xf32> to vector<64x8xf32>
    %46 = vector.extract_strided_slice %43 {offsets = [128, 0], sizes = [64, 8], strides = [1, 1]} : vector<192x8xf32> to vector<64x8xf32>
    %cst_22 = arith.constant dense<0.000000e+00> : vector<64x64xf32>
    %47 = tpu.matmul %44, %45, %cst_22 {dimension_numbers = #tpu.dot_dimension_numbers<[1], [1], [0], [0], [0, 0, 1, 0], [], []>} : vector<64x8xf32>, vector<64x8xf32>, vector<64x64xf32> -> vector<64x64xf32>
    %48 = arith.addf %47, %0 : vector<64x64xf32>
    %cst_23 = arith.constant dense<0xFF800000> : vector<64xf32>
    %49 = vector.multi_reduction <maximumf>, %48, %cst_23 [1] : vector<64x64xf32> to vector<64xf32>
    %50 = vector.shape_cast %49 : vector<64xf32> to vector<64x1xf32>
    %51 = vector.broadcast %50 : vector<64x1xf32> to vector<64x64xf32>
    %52 = arith.subf %48, %51 : vector<64x64xf32>
    %53 = math.exp %52 : vector<64x64xf32>
    %cst_24 = arith.constant dense<0.000000e+00> : vector<64xf32>
    %54 = vector.multi_reduction <add>, %53, %cst_24 [1] : vector<64x64xf32> to vector<64xf32>
    %55 = vector.shape_cast %54 : vector<64xf32> to vector<64x1xf32>
    %56 = tpu.reciprocal %55 {approx = true} : vector<64x1xf32> -> vector<64x1xf32>
    %57 = vector.broadcast %56 : vector<64x1xf32> to vector<64x64xf32>
    %58 = arith.mulf %53, %57 : vector<64x64xf32>
    %cst_25 = arith.constant dense<0.000000e+00> : vector<64x8xf32>
    %59 = tpu.matmul %58, %46, %cst_25 {dimension_numbers = #tpu.dot_dimension_numbers<[1], [0], [0], [1], [0, 0, 1, 1], [], []>} : vector<64x64xf32>, vector<64x8xf32>, vector<64x8xf32> -> vector<64x8xf32>
    %60 = vector.shape_cast %59 : vector<64x8xf32> to vector<4x16x8xf32>
    %61 = tpu.transpose %60, [1, 0, 2] : vector<4x16x8xf32> -> vector<16x4x8xf32>
    %62 = vector.shape_cast %61 : vector<16x4x8xf32> to vector<16x32xf32>
    %63 = arith.addf %7, %62 : vector<16x32xf32>
    %cst_26 = arith.constant dense<0.000000e+00> : vector<16xf32>
    %64 = vector.multi_reduction <add>, %63, %cst_26 [1] : vector<16x32xf32> to vector<16xf32>
    %65 = vector.shape_cast %64 : vector<16xf32> to vector<16x1xf32>
    %cst_27 = arith.constant 3.200000e+01 : f32
    %66 = vector.broadcast %cst_27 : f32 to vector<16x1xf32>
    %67 = arith.divf %65, %66 : vector<16x1xf32>
    %68 = vector.broadcast %67 : vector<16x1xf32> to vector<16x32xf32>
    %69 = arith.subf %63, %68 : vector<16x32xf32>
    %70 = arith.mulf %69, %69 : vector<16x32xf32>
    %cst_28 = arith.constant dense<0.000000e+00> : vector<16xf32>
    %71 = vector.multi_reduction <add>, %70, %cst_28 [1] : vector<16x32xf32> to vector<16xf32>
    %72 = vector.shape_cast %71 : vector<16xf32> to vector<16x1xf32>
    %cst_29 = arith.constant 3.200000e+01 : f32
    %73 = vector.broadcast %cst_29 : f32 to vector<16x1xf32>
    %74 = arith.divf %72, %73 : vector<16x1xf32>
    %cst_30 = arith.constant 9.99999974E-6 : f32
    %75 = vector.broadcast %cst_30 : f32 to vector<16x1xf32>
    %76 = arith.addf %74, %75 : vector<16x1xf32>
    %77 = math.rsqrt %76 : vector<16x1xf32>
    %78 = vector.broadcast %77 : vector<16x1xf32> to vector<16x32xf32>
    %79 = arith.mulf %69, %78 : vector<16x32xf32>
    %80 = vector.broadcast %12 : vector<1x32xf32> to vector<16x32xf32>
    %81 = arith.mulf %79, %80 : vector<16x32xf32>
    %82 = vector.broadcast %13 : vector<1x32xf32> to vector<16x32xf32>
    %83 = arith.addf %81, %82 : vector<16x32xf32>
    %cst_31 = arith.constant dense<0.000000e+00> : vector<16x64xf32>
    %84 = tpu.matmul %83, %14, %cst_31 {dimension_numbers = #tpu.dot_dimension_numbers<[1], [0], [0], [1], [0, 0, 1, 1], [], []>} : vector<16x32xf32>, vector<32x64xf32>, vector<16x64xf32> -> vector<16x64xf32>
    %85 = vector.broadcast %15 : vector<1x64xf32> to vector<16x64xf32>
    %86 = arith.addf %84, %85 : vector<16x64xf32>
    %cst_32 = arith.constant 0.000000e+00 : f32
    %87 = vector.broadcast %cst_32 : f32 to vector<16x64xf32>
    %88 = arith.maximumf %86, %87 : vector<16x64xf32>
    %cst_33 = arith.constant dense<0.000000e+00> : vector<16x32xf32>
    %89 = tpu.matmul %88, %16, %cst_33 {dimension_numbers = #tpu.dot_dimension_numbers<[1], [0], [0], [1], [0, 0, 1, 1], [], []>} : vector<16x64xf32>, vector<64x32xf32>, vector<16x32xf32> -> vector<16x32xf32>
    %90 = arith.addf %63, %89 : vector<16x32xf32>
    %91 = vector.broadcast %17 : vector<1x32xf32> to vector<16x32xf32>
    %92 = arith.addf %90, %91 : vector<16x32xf32>
    %c344 = arith.constant 344 : index
    %c0_34 = arith.constant 0 : index
    %93 = vector.load %arg1[%c344, %c0_34] : memref<432x96xf32, #tpu.memory_space<vmem>>, vector<1x32xf32>
    %c345 = arith.constant 345 : index
    %c0_35 = arith.constant 0 : index
    %94 = vector.load %arg1[%c345, %c0_35] : memref<432x96xf32, #tpu.memory_space<vmem>>, vector<1x32xf32>
    %c144 = arith.constant 144 : index
    %c0_36 = arith.constant 0 : index
    %95 = vector.load %arg1[%c144, %c0_36] : memref<432x96xf32, #tpu.memory_space<vmem>>, vector<32x96xf32>
    %c346 = arith.constant 346 : index
    %c0_37 = arith.constant 0 : index
    %96 = vector.load %arg1[%c346, %c0_37] : memref<432x96xf32, #tpu.memory_space<vmem>>, vector<1x96xf32>
    %c347 = arith.constant 347 : index
    %c0_38 = arith.constant 0 : index
    %97 = vector.load %arg1[%c347, %c0_38] : memref<432x96xf32, #tpu.memory_space<vmem>>, vector<1x32xf32>
    %c348 = arith.constant 348 : index
    %c0_39 = arith.constant 0 : index
    %98 = vector.load %arg1[%c348, %c0_39] : memref<432x96xf32, #tpu.memory_space<vmem>>, vector<1x32xf32>
    %c176 = arith.constant 176 : index
    %c0_40 = arith.constant 0 : index
    %99 = vector.load %arg1[%c176, %c0_40] : memref<432x96xf32, #tpu.memory_space<vmem>>, vector<32x64xf32>
    %c349 = arith.constant 349 : index
    %c0_41 = arith.constant 0 : index
    %100 = vector.load %arg1[%c349, %c0_41] : memref<432x96xf32, #tpu.memory_space<vmem>>, vector<1x64xf32>
    %c208 = arith.constant 208 : index
    %c0_42 = arith.constant 0 : index
    %101 = vector.load %arg1[%c208, %c0_42] : memref<432x96xf32, #tpu.memory_space<vmem>>, vector<64x32xf32>
    %c350 = arith.constant 350 : index
    %c0_43 = arith.constant 0 : index
    %102 = vector.load %arg1[%c350, %c0_43] : memref<432x96xf32, #tpu.memory_space<vmem>>, vector<1x32xf32>
    %cst_44 = arith.constant dense<0.000000e+00> : vector<16xf32>
    %103 = vector.multi_reduction <add>, %92, %cst_44 [1] : vector<16x32xf32> to vector<16xf32>
    %104 = vector.shape_cast %103 : vector<16xf32> to vector<16x1xf32>
    %cst_45 = arith.constant 3.200000e+01 : f32
    %105 = vector.broadcast %cst_45 : f32 to vector<16x1xf32>
    %106 = arith.divf %104, %105 : vector<16x1xf32>
    %107 = vector.broadcast %106 : vector<16x1xf32> to vector<16x32xf32>
    %108 = arith.subf %92, %107 : vector<16x32xf32>
    %109 = arith.mulf %108, %108 : vector<16x32xf32>
    %cst_46 = arith.constant dense<0.000000e+00> : vector<16xf32>
    %110 = vector.multi_reduction <add>, %109, %cst_46 [1] : vector<16x32xf32> to vector<16xf32>
    %111 = vector.shape_cast %110 : vector<16xf32> to vector<16x1xf32>
    %cst_47 = arith.constant 3.200000e+01 : f32
    %112 = vector.broadcast %cst_47 : f32 to vector<16x1xf32>
    %113 = arith.divf %111, %112 : vector<16x1xf32>
    %cst_48 = arith.constant 9.99999974E-6 : f32
    %114 = vector.broadcast %cst_48 : f32 to vector<16x1xf32>
    %115 = arith.addf %113, %114 : vector<16x1xf32>
    %116 = math.rsqrt %115 : vector<16x1xf32>
    %117 = vector.broadcast %116 : vector<16x1xf32> to vector<16x32xf32>
    %118 = arith.mulf %108, %117 : vector<16x32xf32>
    %119 = vector.broadcast %93 : vector<1x32xf32> to vector<16x32xf32>
    %120 = arith.mulf %118, %119 : vector<16x32xf32>
    %121 = vector.broadcast %94 : vector<1x32xf32> to vector<16x32xf32>
    %122 = arith.addf %120, %121 : vector<16x32xf32>
    %cst_49 = arith.constant dense<0.000000e+00> : vector<16x96xf32>
    %123 = tpu.matmul %122, %95, %cst_49 {dimension_numbers = #tpu.dot_dimension_numbers<[1], [0], [0], [1], [0, 0, 1, 1], [], []>} : vector<16x32xf32>, vector<32x96xf32>, vector<16x96xf32> -> vector<16x96xf32>
    %124 = vector.broadcast %96 : vector<1x96xf32> to vector<16x96xf32>
    %125 = arith.addf %123, %124 : vector<16x96xf32>
    %126 = vector.shape_cast %125 : vector<16x96xf32> to vector<16x12x8xf32>
    %127 = tpu.transpose %126, [1, 0, 2] : vector<16x12x8xf32> -> vector<12x16x8xf32>
    %128 = vector.shape_cast %127 : vector<12x16x8xf32> to vector<192x8xf32>
    %129 = vector.extract_strided_slice %128 {offsets = [0, 0], sizes = [64, 8], strides = [1, 1]} : vector<192x8xf32> to vector<64x8xf32>
    %130 = vector.extract_strided_slice %128 {offsets = [64, 0], sizes = [64, 8], strides = [1, 1]} : vector<192x8xf32> to vector<64x8xf32>
    %131 = vector.extract_strided_slice %128 {offsets = [128, 0], sizes = [64, 8], strides = [1, 1]} : vector<192x8xf32> to vector<64x8xf32>
    %cst_50 = arith.constant dense<0.000000e+00> : vector<64x64xf32>
    %132 = tpu.matmul %129, %130, %cst_50 {dimension_numbers = #tpu.dot_dimension_numbers<[1], [1], [0], [0], [0, 0, 1, 0], [], []>} : vector<64x8xf32>, vector<64x8xf32>, vector<64x64xf32> -> vector<64x64xf32>
    %133 = arith.addf %132, %0 : vector<64x64xf32>
    %cst_51 = arith.constant dense<0xFF800000> : vector<64xf32>
    %134 = vector.multi_reduction <maximumf>, %133, %cst_51 [1] : vector<64x64xf32> to vector<64xf32>
    %135 = vector.shape_cast %134 : vector<64xf32> to vector<64x1xf32>
    %136 = vector.broadcast %135 : vector<64x1xf32> to vector<64x64xf32>
    %137 = arith.subf %133, %136 : vector<64x64xf32>
    %138 = math.exp %137 : vector<64x64xf32>
    %cst_52 = arith.constant dense<0.000000e+00> : vector<64xf32>
    %139 = vector.multi_reduction <add>, %138, %cst_52 [1] : vector<64x64xf32> to vector<64xf32>
    %140 = vector.shape_cast %139 : vector<64xf32> to vector<64x1xf32>
    %141 = tpu.reciprocal %140 {approx = true} : vector<64x1xf32> -> vector<64x1xf32>
    %142 = vector.broadcast %141 : vector<64x1xf32> to vector<64x64xf32>
    %143 = arith.mulf %138, %142 : vector<64x64xf32>
    %cst_53 = arith.constant dense<0.000000e+00> : vector<64x8xf32>
    %144 = tpu.matmul %143, %131, %cst_53 {dimension_numbers = #tpu.dot_dimension_numbers<[1], [0], [0], [1], [0, 0, 1, 1], [], []>} : vector<64x64xf32>, vector<64x8xf32>, vector<64x8xf32> -> vector<64x8xf32>
    %145 = vector.shape_cast %144 : vector<64x8xf32> to vector<4x16x8xf32>
    %146 = tpu.transpose %145, [1, 0, 2] : vector<4x16x8xf32> -> vector<16x4x8xf32>
    %147 = vector.shape_cast %146 : vector<16x4x8xf32> to vector<16x32xf32>
    %148 = arith.addf %92, %147 : vector<16x32xf32>
    %cst_54 = arith.constant dense<0.000000e+00> : vector<16xf32>
    %149 = vector.multi_reduction <add>, %148, %cst_54 [1] : vector<16x32xf32> to vector<16xf32>
    %150 = vector.shape_cast %149 : vector<16xf32> to vector<16x1xf32>
    %cst_55 = arith.constant 3.200000e+01 : f32
    %151 = vector.broadcast %cst_55 : f32 to vector<16x1xf32>
    %152 = arith.divf %150, %151 : vector<16x1xf32>
    %153 = vector.broadcast %152 : vector<16x1xf32> to vector<16x32xf32>
    %154 = arith.subf %148, %153 : vector<16x32xf32>
    %155 = arith.mulf %154, %154 : vector<16x32xf32>
    %cst_56 = arith.constant dense<0.000000e+00> : vector<16xf32>
    %156 = vector.multi_reduction <add>, %155, %cst_56 [1] : vector<16x32xf32> to vector<16xf32>
    %157 = vector.shape_cast %156 : vector<16xf32> to vector<16x1xf32>
    %cst_57 = arith.constant 3.200000e+01 : f32
    %158 = vector.broadcast %cst_57 : f32 to vector<16x1xf32>
    %159 = arith.divf %157, %158 : vector<16x1xf32>
    %cst_58 = arith.constant 9.99999974E-6 : f32
    %160 = vector.broadcast %cst_58 : f32 to vector<16x1xf32>
    %161 = arith.addf %159, %160 : vector<16x1xf32>
    %162 = math.rsqrt %161 : vector<16x1xf32>
    %163 = vector.broadcast %162 : vector<16x1xf32> to vector<16x32xf32>
    %164 = arith.mulf %154, %163 : vector<16x32xf32>
    %165 = vector.broadcast %97 : vector<1x32xf32> to vector<16x32xf32>
    %166 = arith.mulf %164, %165 : vector<16x32xf32>
    %167 = vector.broadcast %98 : vector<1x32xf32> to vector<16x32xf32>
    %168 = arith.addf %166, %167 : vector<16x32xf32>
    %cst_59 = arith.constant dense<0.000000e+00> : vector<16x64xf32>
    %169 = tpu.matmul %168, %99, %cst_59 {dimension_numbers = #tpu.dot_dimension_numbers<[1], [0], [0], [1], [0, 0, 1, 1], [], []>} : vector<16x32xf32>, vector<32x64xf32>, vector<16x64xf32> -> vector<16x64xf32>
    %170 = vector.broadcast %100 : vector<1x64xf32> to vector<16x64xf32>
    %171 = arith.addf %169, %170 : vector<16x64xf32>
    %cst_60 = arith.constant 0.000000e+00 : f32
    %172 = vector.broadcast %cst_60 : f32 to vector<16x64xf32>
    %173 = arith.maximumf %171, %172 : vector<16x64xf32>
    %cst_61 = arith.constant dense<0.000000e+00> : vector<16x32xf32>
    %174 = tpu.matmul %173, %101, %cst_61 {dimension_numbers = #tpu.dot_dimension_numbers<[1], [0], [0], [1], [0, 0, 1, 1], [], []>} : vector<16x64xf32>, vector<64x32xf32>, vector<16x32xf32> -> vector<16x32xf32>
    %175 = arith.addf %148, %174 : vector<16x32xf32>
    %176 = vector.broadcast %102 : vector<1x32xf32> to vector<16x32xf32>
    %177 = arith.addf %175, %176 : vector<16x32xf32>
    %cst_62 = arith.constant dense<0.000000e+00> : vector<2x32xf32>
    %178 = tpu.matmul %1, %177, %cst_62 {dimension_numbers = #tpu.dot_dimension_numbers<[1], [0], [0], [1], [0, 0, 1, 1], [], []>} : vector<2x16xf32>, vector<16x32xf32>, vector<2x32xf32> -> vector<2x32xf32>
    %c272 = arith.constant 272 : index
    %c0_63 = arith.constant 0 : index
    %179 = vector.load %arg1[%c272, %c0_63] : memref<432x96xf32, #tpu.memory_space<vmem>>, vector<32x32xf32>
    %cst_64 = arith.constant dense<0.000000e+00> : vector<2x32xf32>
    %180 = tpu.matmul %178, %179, %cst_64 {dimension_numbers = #tpu.dot_dimension_numbers<[1], [0], [0], [1], [0, 0, 1, 1], [], []>} : vector<2x32xf32>, vector<32x32xf32>, vector<2x32xf32> -> vector<2x32xf32>
    %c351 = arith.constant 351 : index
    %c0_65 = arith.constant 0 : index
    %181 = vector.load %arg1[%c351, %c0_65] : memref<432x96xf32, #tpu.memory_space<vmem>>, vector<1x32xf32>
    %182 = vector.broadcast %181 : vector<1x32xf32> to vector<2x32xf32>
    %183 = arith.addf %180, %182 : vector<2x32xf32>
    %cst_66 = arith.constant 0.000000e+00 : f32
    %184 = vector.broadcast %cst_66 : f32 to vector<2x32xf32>
    %185 = arith.maximumf %183, %184 : vector<2x32xf32>
    %c304 = arith.constant 304 : index
    %c0_67 = arith.constant 0 : index
    %186 = vector.load %arg1[%c304, %c0_67] : memref<432x96xf32, #tpu.memory_space<vmem>>, vector<32x3xf32>
    %cst_68 = arith.constant dense<0.000000e+00> : vector<2x3xf32>
    %187 = tpu.matmul %185, %186, %cst_68 {dimension_numbers = #tpu.dot_dimension_numbers<[1], [0], [0], [1], [0, 0, 1, 1], [], []>} : vector<2x32xf32>, vector<32x3xf32>, vector<2x3xf32> -> vector<2x3xf32>
    %c352 = arith.constant 352 : index
    %c0_69 = arith.constant 0 : index
    %188 = vector.load %arg1[%c352, %c0_69] : memref<432x96xf32, #tpu.memory_space<vmem>>, vector<1x3xf32>
    %189 = vector.broadcast %188 : vector<1x3xf32> to vector<2x3xf32>
    %190 = arith.addf %187, %189 : vector<2x3xf32>
    %c0_70 = arith.constant 0 : index
    %c0_71 = arith.constant 0 : index
    %191 = vector.load %arg2[%c0_70, %c0_71] : memref<2x3xf32, #tpu.memory_space<vmem>>, vector<2x3xf32>
    tpu.vector_store %arg2[%c0_70, %c0_71], %190 {strides = array<i32>} : memref<2x3xf32, #tpu.memory_space<vmem>>, vector<2x3xf32>,
    return
  }
}

</mosaic_0001>

<llo_original>
// kernel: transformer_forward.1
$region0: #{transformer_forward.1}
  #allocation0 [shape = 'u32[]', space=smem, size = 0x4, offset = 0x4, fixed_abs, tag = 'smem constant byte address 0x4 - core index']
  #allocation1 [shape = 'u32[144,128]{1,0:T(1,128)}', space=vmem, size = 0x12000, scoped, tag = 'internal scratch']
  %s0 = inlined_call_operand.vmem [shape: f32[16,16], index: 0, kind: input, shape index: {}]
  %s1 = inlined_call_operand.vmem [shape: f32[432,96], index: 1, kind: input, shape index: {}]
  %s2 = inlined_call_operand.hbm [shape: f32[2,3], index: 2, kind: output, shape index: {}]
  %s3 = sld [smem:[#allocation0]]
  $region18: #{transformer_forward.1} parent=0
    _
  %s5 = ssub.s32 1, %s3
  %s6 = scalar_select 0, %s5, %s3
  $region1: #{transformer_forward.1} parent=0
    #allocation2 [shape = 'u8[1024]{0}', space=vmem, size = 0x400, scoped, tag = 'output window, operand 0, single buffered']
    #allocation3 [shape = 's32[1]{0}', space=sflag, size = 0x4, scoped, tag = 'scoped memory for transformer_forward.1']
    %7 = vsyncpa [#allocation3], 0
    // Predicated region
    $region2: #{transformer_forward.1} parent=1 // pred_check
      _
    $region3: #{transformer_forward.1} parent=1 // pred_check_branch
      %9 = sbr.rel (0) target = $region5
    $region4: #{transformer_forward.1} parent=1 // pred_region
      _
    $region5: #{transformer_forward.1} parent=1 // pred_fallthru
      _
    // Predicated region
    $region6: #{transformer_forward.1} parent=1 // pred_check
      _
    $region7: #{transformer_forward.1} parent=1 // pred_check_branch
      %11 = sbr.rel (0) target = $region9
    $region8: #{transformer_forward.1} parent=1 // pred_region
      _
    $region9: #{transformer_forward.1} parent=1 // pred_fallthru
      _
    %v12 = vld [vmem:[%s1 + $0x168] sm:$0xff]
    %v13 = vld [vmem:[%s1 + $0x170] sm:$0xff]
    %v14 = vld [vmem:[%s1 + $0x178] sm:$0xff]
    %v15 = vld [vmem:[%s1 + $0x180] sm:$0xff]
    %v16 = vld [vmem:[%s1 + $0x188] sm:$0xff]
    %v17 = vld [vmem:[%s1 + $0x190] sm:$0xff]
    %v18 = vld [vmem:[%s1 + $0x198] sm:$0xff]
    %v19 = vld [vmem:[%s1 + $0x1a0] sm:$0xff]
    %v20 = vld [vmem:[%s1 + $0x1a8] sm:$0x3]
    %v21 = vld [vmem:[%s0] sm:$0xff]
    %v22 = vld [vmem:[%s0 + $0x8] sm:$0xff]
    %v23 = vld [vmem:[%s1] sm:$0xff]
    %v24 = vld [vmem:[%s1 + $0x8] sm:$0xff]
    %v25 = vld [vmem:[%s1 + $0x150] sm:$0x1]
    %v26 = vlaneseq
    %v27 = vshrl.u32 %v26, 7
    %v28 = vsub.s32 0, %v27
    %v29 = vrot.slane %v25, %v28
    %vm30 = vcmask 130048
    %v32 = vsel %vm30, %v21, 0
    %v35 = vsel %vm30, %v22, 0
    %37 = vmatprep.subr.mxu0 0.0
    %38 = vmatpush1.msra.mxu0 %v23
    %39 = vmatprep.subr.mxu0 0.0
    %40 = vmatpush1.msra.mxu0 %v24
    %41 = vmatprep.subr.mxu0 0.0
    %42 = vmatpush1.msra.mxu0 0.0
    %43 = vmatprep.subr.mxu0 0.0
    %44 = vmatpush1.msra.mxu0 0.0
    %45 = vmatprep.subr.mxu0 0.0
    %46 = vmatpush1.msra.mxu0 0.0
    %47 = vmatprep.subr.mxu0 0.0
    %48 = vmatpush1.msra.mxu0 0.0
    %49 = vmatprep.subr.mxu0 0.0
    %50 = vmatpush1.msra.mxu0 0.0
    %51 = vmatprep.subr.mxu0 0.0
    %52 = vmatpush1.msra.mxu0 0.0
    %53 = vmatprep.subr.mxu0 0.0
    %54 = vmatpush1.msra.mxu0 0.0
    %55 = vmatprep.subr.mxu0 0.0
    %56 = vmatpush1.msra.mxu0 0.0
    %57 = vmatprep.subr.mxu0 0.0
    %58 = vmatpush1.msra.mxu0 0.0
    %59 = vmatprep.subr.mxu0 0.0
    %60 = vmatpush1.msra.mxu0 0.0
    %61 = vmatprep.subr.mxu0 0.0
    %62 = vmatpush1.msra.mxu0 0.0
    %63 = vmatprep.subr.mxu0 0.0
    %64 = vmatpush1.msra.mxu0 0.0
    %65 = vmatprep.subr.mxu0 0.0
    %66 = vmatpush1.msra.mxu0 0.0
    %67 = vmatprep.subr.mxu0 0.0
    %68 = vmatpush1.msra.mxu0 0.0
    %69 = vmatprep.subr.mxu0 0.0
    %70 = vmatpush1.msra.mxu0 0.0
    %71 = vmatprep.subr.mxu0 0.0
    %72 = vmatpush1.msra.mxu0 0.0
    %73 = vmatprep.subr.mxu0 0.0
    %74 = vmatpush1.msra.mxu0 0.0
    %75 = vmatprep.subr.mxu0 0.0
    %76 = vmatpush1.msra.mxu0 0.0
    %77 = vmatprep.subr.mxu0 0.0
    %78 = vmatpush1.msra.mxu0 0.0
    %79 = vmatprep.subr.mxu0 0.0
    %80 = vmatpush1.msra.mxu0 0.0
    %81 = vmatprep.subr.mxu0 0.0
    %82 = vmatpush1.msra.mxu0 0.0
    %83 = vmatprep.subr.mxu0 0.0
    %84 = vmatpush1.msra.mxu0 0.0
    %85 = vmatprep.subr.mxu0 0.0
    %86 = vmatpush1.msra.mxu0 0.0
    %87 = vmatprep.subr.mxu0 0.0
    %88 = vmatpush1.msra.mxu0 0.0
    %89 = vmatprep.subr.mxu0 0.0
    %90 = vmatpush1.msra.mxu0 0.0
    %91 = vmatprep.subr.mxu0 0.0
    %92 = vmatpush1.msra.mxu0 0.0
    %93 = vmatprep.subr.mxu0 0.0
    %94 = vmatpush1.msra.mxu0 0.0
    %95 = vmatprep.subr.mxu0 0.0
    %96 = vmatpush1.msra.mxu0 0.0
    %97 = vmatprep.subr.mxu0 0.0
    %98 = vmatpush1.msra.mxu0 0.0
    %99 = vmatprep.subr.mxu0 0.0
    %100 = vmatpush1.msra.mxu0 0.0
    %101 = vmatprep.mubr.f32.mxu0 0.0
    %102 = vmatmul.mubr.f32.gmra.mrb[0].mxu0 %v32
    %v103 = vpop.f32.mrb[0].mxu0
    %v104 = vadd.f32 %v29, %v103
    %v105 = vpop.f32.mrb[0].mxu0
    %106 = vmatprep.mubr.f32.mxu0 0.0
    %107 = vmatmul.mubr.f32.gmra.mrb[0].mxu0 %v35
    %v108 = vpop.f32.mrb[0].mxu0
    %v109 = vadd.f32 %v29, %v108
    %v110 = vpop.f32.mrb[0].mxu0
    %111 = vdwg.mxu0
    %v112 = vld [vmem:[%s1 + $0x151] sm:$0x1]
    %v113 = vld [vmem:[%s1 + $0x152] sm:$0x1]
    %v114 = vld [vmem:[%s1 + $0x10] sm:$0xff]
    %v115 = vld [vmem:[%s1 + $0x18] sm:$0xff]
    %v116 = vld [vmem:[%s1 + $0x20] sm:$0xff]
    %v117 = vld [vmem:[%s1 + $0x28] sm:$0xff]
    %v118 = vld [vmem:[%s1 + $0x153] sm:$0x1]
    %v119 = vld [vmem:[%s1 + $0x154] sm:$0x1]
    %v120 = vld [vmem:[%s1 + $0x155] sm:$0x1]
    %v121 = vld [vmem:[%s1 + $0x30] sm:$0xff]
    %v122 = vld [vmem:[%s1 + $0x38] sm:$0xff]
    %v123 = vld [vmem:[%s1 + $0x40] sm:$0xff]
    %v124 = vld [vmem:[%s1 + $0x48] sm:$0xff]
    %v125 = vld [vmem:[%s1 + $0x156] sm:$0x1]
    %v126 = vld [vmem:[%s1 + $0x50] sm:$0xff]
    %v127 = vld [vmem:[%s1 + $0x58] sm:$0xff]
    %v128 = vld [vmem:[%s1 + $0x60] sm:$0xff]
    %v129 = vld [vmem:[%s1 + $0x68] sm:$0xff]
    %v130 = vld [vmem:[%s1 + $0x70] sm:$0xff]
    %v131 = vld [vmem:[%s1 + $0x78] sm:$0xff]
    %v132 = vld [vmem:[%s1 + $0x80] sm:$0xff]
    %v133 = vld [vmem:[%s1 + $0x88] sm:$0xff]
    %v134 = vld [vmem:[%s1 + $0x157] sm:$0x1]
    %vm135 = vcmask 261120
    %v136 = vsel %vm135, %v104, 0.0
    %137 = vadd.xlane.f32.xlu0 %v136
    %v138 = vpop.xlane.xlu0 %137
    %v139 = vsel %vm135, %v109, 0.0
    %140 = vadd.xlane.f32.xlu0 %v139
    %v141 = vpop.xlane.xlu0 %140
    %v142 = vrcp.pop 32.0
    %v143 = vmul.f32 %v138, %v142
    %v144 = vmul.f32 %v141, %v142
    %v145 = vsub.f32 %v104, %v143
    %v146 = vsub.f32 %v109, %v144
    %v147 = vmul.f32 %v145, %v145
    %v148 = vmul.f32 %v146, %v146
    %v149 = vsel %vm135, %v147, 0.0
    %150 = vadd.xlane.f32.xlu0 %v149
    %v151 = vpop.xlane.xlu0 %150
    %v152 = vsel %vm135, %v148, 0.0
    %153 = vadd.xlane.f32.xlu0 %v152
    %v154 = vpop.xlane.xlu0 %153
    %v155 = vmul.f32 %v151, %v142
    %v156 = vmul.f32 %v154, %v142
    %v157 = vadd.f32 %v155, 1e-05
    %v158 = vadd.f32 %v156, 1e-05
    %v159 = vrsqrt.pop %v157
    %v160 = vrsqrt.pop %v158
    %v161 = vmul.f32 %v145, %v159
    %v162 = vmul.f32 %v146, %v160
    %v163 = vlaneseq
    %v164 = vshrl.u32 %v163, 7
    %v165 = vsub.s32 0, %v164
    %v166 = vrot.slane %v112, %v165
    %v167 = vmul.f32 %v161, %v166
    %v168 = vmul.f32 %v162, %v166
    %v169 = vlaneseq
    %v170 = vshrl.u32 %v169, 7
    %v171 = vsub.s32 0, %v170
    %v172 = vrot.slane %v113, %v171
    %v173 = vadd.f32 %v167, %v172
    %v174 = vadd.f32 %v168, %v172
    %v175 = vlaneseq
    %v176 = vshrl.u32 %v175, 7
    %v177 = vsub.s32 0, %v176
    %v178 = vrot.slane %v118, %v177
    %v180 = vsel %vm135, %v173, 0
    %v183 = vsel %vm135, %v174, 0
    %185 = vmatprep.subr.mxu0 0.0
    %186 = vmatpush1.msra.mxu0 %v114
    %187 = vmatprep.subr.mxu0 0.0
    %188 = vmatpush1.msra.mxu0 %v115
    %189 = vmatprep.subr.mxu0 0.0
    %190 = vmatpush1.msra.mxu0 %v116
    %191 = vmatprep.subr.mxu0 0.0
    %192 = vmatpush1.msra.mxu0 %v117
    %193 = vmatprep.subr.mxu0 0.0
    %194 = vmatpush1.msra.mxu0 0.0
    %195 = vmatprep.subr.mxu0 0.0
    %196 = vmatpush1.msra.mxu0 0.0
    %197 = vmatprep.subr.mxu0 0.0
    %198 = vmatpush1.msra.mxu0 0.0
    %199 = vmatprep.subr.mxu0 0.0
    %200 = vmatpush1.msra.mxu0 0.0
    %201 = vmatprep.subr.mxu0 0.0
    %202 = vmatpush1.msra.mxu0 0.0
    %203 = vmatprep.subr.mxu0 0.0
    %204 = vmatpush1.msra.mxu0 0.0
    %205 = vmatprep.subr.mxu0 0.0
    %206 = vmatpush1.msra.mxu0 0.0
    %207 = vmatprep.subr.mxu0 0.0
    %208 = vmatpush1.msra.mxu0 0.0
    %209 = vmatprep.subr.mxu0 0.0
    %210 = vmatpush1.msra.mxu0 0.0
    %211 = vmatprep.subr.mxu0 0.0
    %212 = vmatpush1.msra.mxu0 0.0
    %213 = vmatprep.subr.mxu0 0.0
    %214 = vmatpush1.msra.mxu0 0.0
    %215 = vmatprep.subr.mxu0 0.0
    %216 = vmatpush1.msra.mxu0 0.0
    %217 = vmatprep.subr.mxu0 0.0
    %218 = vmatpush1.msra.mxu0 0.0
    %219 = vmatprep.subr.mxu0 0.0
    %220 = vmatpush1.msra.mxu0 0.0
    %221 = vmatprep.subr.mxu0 0.0
    %222 = vmatpush1.msra.mxu0 0.0
    %223 = vmatprep.subr.mxu0 0.0
    %224 = vmatpush1.msra.mxu0 0.0
    %225 = vmatprep.subr.mxu0 0.0
    %226 = vmatpush1.msra.mxu0 0.0
    %227 = vmatprep.subr.mxu0 0.0
    %228 = vmatpush1.msra.mxu0 0.0
    %229 = vmatprep.subr.mxu0 0.0
    %230 = vmatpush1.msra.mxu0 0.0
    %231 = vmatprep.subr.mxu0 0.0
    %232 = vmatpush1.msra.mxu0 0.0
    %233 = vmatprep.subr.mxu0 0.0
    %234 = vmatpush1.msra.mxu0 0.0
    %235 = vmatprep.subr.mxu0 0.0
    %236 = vmatpush1.msra.mxu0 0.0
    %237 = vmatprep.subr.mxu0 0.0
    %238 = vmatpush1.msra.mxu0 0.0
    %239 = vmatprep.subr.mxu0 0.0
    %240 = vmatpush1.msra.mxu0 0.0
    %241 = vmatprep.subr.mxu0 0.0
    %242 = vmatpush1.msra.mxu0 0.0
    %243 = vmatprep.subr.mxu0 0.0
    %244 = vmatpush1.msra.mxu0 0.0
    %245 = vmatprep.subr.mxu0 0.0
    %246 = vmatpush1.msra.mxu0 0.0
    %247 = vmatprep.subr.mxu0 0.0
    %248 = vmatpush1.msra.mxu0 0.0
    %249 = vmatprep.mubr.f32.mxu0 0.0
    %250 = vmatmul.mubr.f32.gmra.mrb[0].mxu0 %v180
    %v251 = vpop.f32.mrb[0].mxu0
    %v252 = vadd.f32 %v178, %v251
    %v253 = vpop.f32.mrb[0].mxu0
    %254 = vmatprep.mubr.f32.mxu0 0.0
    %255 = vmatmul.mubr.f32.gmra.mrb[0].mxu0 %v183
    %v256 = vpop.f32.mrb[0].mxu0
    %v257 = vadd.f32 %v178, %v256
    %v258 = vpop.f32.mrb[0].mxu0
    %259 = vdwg.mxu0
    %262 = vrot.lane.b32.xlu0 %v252, 120
    %v263 = vpop.permute.xlu0 %262
    %264 = vrot.lane.b32.xlu0 %v257, 120
    %v265 = vpop.permute.xlu0 %264
    %268 = vrot.lane.b32.xlu0 %v252, 112
    %v269 = vpop.permute.xlu0 %268
    %270 = vrot.lane.b32.xlu0 %v257, 112
    %v271 = vpop.permute.xlu0 %270
    %274 = vrot.lane.b32.xlu0 %v252, 104
    %v275 = vpop.permute.xlu0 %274
    %276 = vrot.lane.b32.xlu0 %v257, 104
    %v277 = vpop.permute.xlu0 %276
    %280 = vrot.lane.b32.xlu0 %v252, 96
    %v281 = vpop.permute.xlu0 %280
    %282 = vrot.lane.b32.xlu0 %v257, 96
    %v283 = vpop.permute.xlu0 %282
    %286 = vrot.lane.b32.xlu0 %v252, 88
    %v287 = vpop.permute.xlu0 %286
    %288 = vrot.lane.b32.xlu0 %v257, 88
    %v289 = vpop.permute.xlu0 %288
    %292 = vrot.lane.b32.xlu0 %v252, 80
    %v293 = vpop.permute.xlu0 %292
    %294 = vrot.lane.b32.xlu0 %v257, 80
    %v295 = vpop.permute.xlu0 %294
    %298 = vrot.lane.b32.xlu0 %v252, 72
    %v299 = vpop.permute.xlu0 %298
    %300 = vrot.lane.b32.xlu0 %v257, 72
    %v301 = vpop.permute.xlu0 %300
    %304 = vrot.lane.b32.xlu0 %v252, 64
    %v305 = vpop.permute.xlu0 %304
    %306 = vrot.lane.b32.xlu0 %v257, 64
    %v307 = vpop.permute.xlu0 %306
    %310 = vrot.lane.b32.xlu0 %v252, 56
    %v311 = vpop.permute.xlu0 %310
    %312 = vrot.lane.b32.xlu0 %v257, 56
    %v313 = vpop.permute.xlu0 %312
    %316 = vrot.lane.b32.xlu0 %v252, 48
    %v317 = vpop.permute.xlu0 %316
    %318 = vrot.lane.b32.xlu0 %v257, 48
    %v319 = vpop.permute.xlu0 %318
    %322 = vrot.lane.b32.xlu0 %v252, 40
    %v323 = vpop.permute.xlu0 %322
    %324 = vrot.lane.b32.xlu0 %v257, 40
    %v325 = vpop.permute.xlu0 %324
    %v328 = vcombine.low %v252, %v269
    %v329 = vcombine.high %v252, %v269
    %v331 = vunpack.c.l.s4 1983009808
    %v332 = vunpack.c.0.s8 %v331
    %v333 = vlaneseq
    %v334 = vshrl.u32 %v333, 7
    %v335 = vsub.s32 %v332, %v334
    %v336 = vrot.slane %v328, %v335
    %v338 = vunpack.c.l.s4 1983009808
    %v339 = vunpack.c.0.s8 %v338
    %v340 = vlaneseq
    %v341 = vshrl.u32 %v340, 7
    %v342 = vsub.s32 %v339, %v341
    %v343 = vrot.slane %v329, %v342
    %v344 = vcombine.low %v263, %v275
    %v345 = vcombine.high %v263, %v275
    %v347 = vunpack.c.l.s4 1983009808
    %v348 = vunpack.c.0.s8 %v347
    %v349 = vlaneseq
    %v350 = vshrl.u32 %v349, 7
    %v351 = vsub.s32 %v348, %v350
    %v352 = vrot.slane %v344, %v351
    %v354 = vunpack.c.l.s4 1983009808
    %v355 = vunpack.c.0.s8 %v354
    %v356 = vlaneseq
    %v357 = vshrl.u32 %v356, 7
    %v358 = vsub.s32 %v355, %v357
    %v359 = vrot.slane %v345, %v358
    %v360 = vcombine.low %v281, %v293
    %v361 = vcombine.high %v281, %v293
    %v363 = vunpack.c.l.s4 1983009808
    %v364 = vunpack.c.0.s8 %v363
    %v365 = vlaneseq
    %v366 = vshrl.u32 %v365, 7
    %v367 = vsub.s32 %v364, %v366
    %v368 = vrot.slane %v360, %v367
    %v370 = vunpack.c.l.s4 1983009808
    %v371 = vunpack.c.0.s8 %v370
    %v372 = vlaneseq
    %v373 = vshrl.u32 %v372, 7
    %v374 = vsub.s32 %v371, %v373
    %v375 = vrot.slane %v361, %v374
    %v376 = vcombine.low %v287, %v299
    %v377 = vcombine.high %v287, %v299
    %v379 = vunpack.c.l.s4 1983009808
    %v380 = vunpack.c.0.s8 %v379
    %v381 = vlaneseq
    %v382 = vshrl.u32 %v381, 7
    %v383 = vsub.s32 %v380, %v382
    %v384 = vrot.slane %v376, %v383
    %v386 = vunpack.c.l.s4 1983009808
    %v387 = vunpack.c.0.s8 %v386
    %v388 = vlaneseq
    %v389 = vshrl.u32 %v388, 7
    %v390 = vsub.s32 %v387, %v389
    %v391 = vrot.slane %v377, %v390
    %v392 = vcombine.low %v336, %v352
    %v393 = vcombine.high %v336, %v352
    %v395 = vunpack.c.l.s4 1934713408
    %v396 = vunpack.c.0.s8 %v395
    %v397 = vlaneseq
    %v398 = vshrl.u32 %v397, 7
    %v399 = vsub.s32 %v396, %v398
    %v400 = vrot.slane %v392, %v399
    %v402 = vunpack.c.l.s4 1934713408
    %v403 = vunpack.c.0.s8 %v402
    %v404 = vlaneseq
    %v405 = vshrl.u32 %v404, 7
    %v406 = vsub.s32 %v403, %v405
    %v407 = vrot.slane %v393, %v406
    %v408 = vcombine.low %v343, %v359
    %v409 = vcombine.high %v343, %v359
    %v411 = vunpack.c.l.s4 1934713408
    %v412 = vunpack.c.0.s8 %v411
    %v413 = vlaneseq
    %v414 = vshrl.u32 %v413, 7
    %v415 = vsub.s32 %v412, %v414
    %v416 = vrot.slane %v408, %v415
    %v418 = vunpack.c.l.s4 1934713408
    %v419 = vunpack.c.0.s8 %v418
    %v420 = vlaneseq
    %v421 = vshrl.u32 %v420, 7
    %v422 = vsub.s32 %v419, %v421
    %v423 = vrot.slane %v409, %v422
    %v424 = vcombine.low %v368, %v384
    %v425 = vcombine.high %v368, %v384
    %v427 = vunpack.c.l.s4 1934713408
    %v428 = vunpack.c.0.s8 %v427
    %v429 = vlaneseq
    %v430 = vshrl.u32 %v429, 7
    %v431 = vsub.s32 %v428, %v430
    %v432 = vrot.slane %v424, %v431
    %v434 = vunpack.c.l.s4 1934713408
    %v435 = vunpack.c.0.s8 %v434
    %v436 = vlaneseq
    %v437 = vshrl.u32 %v436, 7
    %v438 = vsub.s32 %v435, %v437
    %v439 = vrot.slane %v425, %v438
    %v440 = vcombine.low %v375, %v391
    %v441 = vcombine.high %v375, %v391
    %v443 = vunpack.c.l.s4 1934713408
    %v444 = vunpack.c.0.s8 %v443
    %v445 = vlaneseq
    %v446 = vshrl.u32 %v445, 7
    %v447 = vsub.s32 %v444, %v446
    %v448 = vrot.slane %v440, %v447
    %v450 = vunpack.c.l.s4 1934713408
    %v451 = vunpack.c.0.s8 %v450
    %v452 = vlaneseq
    %v453 = vshrl.u32 %v452, 7
    %v454 = vsub.s32 %v451, %v453
    %v455 = vrot.slane %v441, %v454
    %v456 = vcombine.low %v400, %v432
    %v457 = vcombine.high %v400, %v432
    %v458 = vcombine.low %v407, %v439
    %v459 = vcombine.high %v407, %v439
    %v460 = vcombine.low %v416, %v448
    %v461 = vcombine.high %v416, %v448
    %v462 = vcombine.low %v423, %v455
    %v463 = vcombine.high %v423, %v455
    %v464 = vcombine.low %v305, %v317
    %v465 = vcombine.high %v305, %v317
    %v467 = vunpack.c.l.s4 1983009808
    %v468 = vunpack.c.0.s8 %v467
    %v469 = vlaneseq
    %v470 = vshrl.u32 %v469, 7
    %v471 = vsub.s32 %v468, %v470
    %v472 = vrot.slane %v464, %v471
    %v474 = vunpack.c.l.s4 1983009808
    %v475 = vunpack.c.0.s8 %v474
    %v476 = vlaneseq
    %v477 = vshrl.u32 %v476, 7
    %v478 = vsub.s32 %v475, %v477
    %v479 = vrot.slane %v465, %v478
    %v480 = vcombine.low %v311, %v323
    %v481 = vcombine.high %v311, %v323
    %v483 = vunpack.c.l.s4 1983009808
    %v484 = vunpack.c.0.s8 %v483
    %v485 = vlaneseq
    %v486 = vshrl.u32 %v485, 7
    %v487 = vsub.s32 %v484, %v486
    %v488 = vrot.slane %v480, %v487
    %v490 = vunpack.c.l.s4 1983009808
    %v491 = vunpack.c.0.s8 %v490
    %v492 = vlaneseq
    %v493 = vshrl.u32 %v492, 7
    %v494 = vsub.s32 %v491, %v493
    %v495 = vrot.slane %v481, %v494
    %v496 = vcombine.low %v472, %v488
    %v497 = vcombine.high %v472, %v488
    %v499 = vunpack.c.l.s4 1934713408
    %v500 = vunpack.c.0.s8 %v499
    %v501 = vlaneseq
    %v502 = vshrl.u32 %v501, 7
    %v503 = vsub.s32 %v500, %v502
    %v504 = vrot.slane %v496, %v503
    %v506 = vunpack.c.l.s4 1934713408
    %v507 = vunpack.c.0.s8 %v506
    %v508 = vlaneseq
    %v509 = vshrl.u32 %v508, 7
    %v510 = vsub.s32 %v507, %v509
    %v511 = vrot.slane %v497, %v510
    %v512 = vcombine.low %v479, %v495
    %v513 = vcombine.high %v479, %v495
    %v515 = vunpack.c.l.s4 1934713408
    %v516 = vunpack.c.0.s8 %v515
    %v517 = vlaneseq
    %v518 = vshrl.u32 %v517, 7
    %v519 = vsub.s32 %v516, %v518
    %v520 = vrot.slane %v512, %v519
    %v522 = vunpack.c.l.s4 1934713408
    %v523 = vunpack.c.0.s8 %v522
    %v524 = vlaneseq
    %v525 = vshrl.u32 %v524, 7
    %v526 = vsub.s32 %v523, %v525
    %v527 = vrot.slane %v513, %v526
    %v528 = vcombine.high %v504, 0.0
    %v529 = vcombine.high %v511, 0.0
    %v530 = vcombine.high %v520, 0.0
    %v531 = vcombine.high %v527, 0.0
    %v532 = vcombine.low %v257, %v271
    %v533 = vcombine.high %v257, %v271
    %v535 = vunpack.c.l.s4 1983009808
    %v536 = vunpack.c.0.s8 %v535
    %v537 = vlaneseq
    %v538 = vshrl.u32 %v537, 7
    %v539 = vsub.s32 %v536, %v538
    %v540 = vrot.slane %v532, %v539
    %v542 = vunpack.c.l.s4 1983009808
    %v543 = vunpack.c.0.s8 %v542
    %v544 = vlaneseq
    %v545 = vshrl.u32 %v544, 7
    %v546 = vsub.s32 %v543, %v545
    %v547 = vrot.slane %v533, %v546
    %v548 = vcombine.low %v265, %v277
    %v549 = vcombine.high %v265, %v277
    %v551 = vunpack.c.l.s4 1983009808
    %v552 = vunpack.c.0.s8 %v551
    %v553 = vlaneseq
    %v554 = vshrl.u32 %v553, 7
    %v555 = vsub.s32 %v552, %v554
    %v556 = vrot.slane %v548, %v555
    %v558 = vunpack.c.l.s4 1983009808
    %v559 = vunpack.c.0.s8 %v558
    %v560 = vlaneseq
    %v561 = vshrl.u32 %v560, 7
    %v562 = vsub.s32 %v559, %v561
    %v563 = vrot.slane %v549, %v562
    %v564 = vcombine.low %v283, %v295
    %v565 = vcombine.high %v283, %v295
    %v567 = vunpack.c.l.s4 1983009808
    %v568 = vunpack.c.0.s8 %v567
    %v569 = vlaneseq
    %v570 = vshrl.u32 %v569, 7
    %v571 = vsub.s32 %v568, %v570
    %v572 = vrot.slane %v564, %v571
    %v574 = vunpack.c.l.s4 1983009808
    %v575 = vunpack.c.0.s8 %v574
    %v576 = vlaneseq
    %v577 = vshrl.u32 %v576, 7
    %v578 = vsub.s32 %v575, %v577
    %v579 = vrot.slane %v565, %v578
    %v580 = vcombine.low %v289, %v301
    %v581 = vcombine.high %v289, %v301
    %v583 = vunpack.c.l.s4 1983009808
    %v584 = vunpack.c.0.s8 %v583
    %v585 = vlaneseq
    %v586 = vshrl.u32 %v585, 7
    %v587 = vsub.s32 %v584, %v586
    %v588 = vrot.slane %v580, %v587
    %v590 = vunpack.c.l.s4 1983009808
    %v591 = vunpack.c.0.s8 %v590
    %v592 = vlaneseq
    %v593 = vshrl.u32 %v592, 7
    %v594 = vsub.s32 %v591, %v593
    %v595 = vrot.slane %v581, %v594
    %v596 = vcombine.low %v540, %v556
    %v597 = vcombine.high %v540, %v556
    %v599 = vunpack.c.l.s4 1934713408
    %v600 = vunpack.c.0.s8 %v599
    %v601 = vlaneseq
    %v602 = vshrl.u32 %v601, 7
    %v603 = vsub.s32 %v600, %v602
    %v604 = vrot.slane %v596, %v603
    %v606 = vunpack.c.l.s4 1934713408
    %v607 = vunpack.c.0.s8 %v606
    %v608 = vlaneseq
    %v609 = vshrl.u32 %v608, 7
    %v610 = vsub.s32 %v607, %v609
    %v611 = vrot.slane %v597, %v610
    %v612 = vcombine.low %v547, %v563
    %v613 = vcombine.high %v547, %v563
    %v615 = vunpack.c.l.s4 1934713408
    %v616 = vunpack.c.0.s8 %v615
    %v617 = vlaneseq
    %v618 = vshrl.u32 %v617, 7
    %v619 = vsub.s32 %v616, %v618
    %v620 = vrot.slane %v612, %v619
    %v622 = vunpack.c.l.s4 1934713408
    %v623 = vunpack.c.0.s8 %v622
    %v624 = vlaneseq
    %v625 = vshrl.u32 %v624, 7
    %v626 = vsub.s32 %v623, %v625
    %v627 = vrot.slane %v613, %v626
    %v628 = vcombine.low %v572, %v588
    %v629 = vcombine.high %v572, %v588
    %v631 = vunpack.c.l.s4 1934713408
    %v632 = vunpack.c.0.s8 %v631
    %v633 = vlaneseq
    %v634 = vshrl.u32 %v633, 7
    %v635 = vsub.s32 %v632, %v634
    %v636 = vrot.slane %v628, %v635
    %v638 = vunpack.c.l.s4 1934713408
    %v639 = vunpack.c.0.s8 %v638
    %v640 = vlaneseq
    %v641 = vshrl.u32 %v640, 7
    %v642 = vsub.s32 %v639, %v641
    %v643 = vrot.slane %v629, %v642
    %v644 = vcombine.low %v579, %v595
    %v645 = vcombine.high %v579, %v595
    %v647 = vunpack.c.l.s4 1934713408
    %v648 = vunpack.c.0.s8 %v647
    %v649 = vlaneseq
    %v650 = vshrl.u32 %v649, 7
    %v651 = vsub.s32 %v648, %v650
    %v652 = vrot.slane %v644, %v651
    %v654 = vunpack.c.l.s4 1934713408
    %v655 = vunpack.c.0.s8 %v654
    %v656 = vlaneseq
    %v657 = vshrl.u32 %v656, 7
    %v658 = vsub.s32 %v655, %v657
    %v659 = vrot.slane %v645, %v658
    %v660 = vcombine.low %v604, %v636
    %v661 = vcombine.high %v604, %v636
    %v662 = vcombine.low %v611, %v643
    %v663 = vcombine.high %v611, %v643
    %v664 = vcombine.low %v620, %v652
    %v665 = vcombine.high %v620, %v652
    %v666 = vcombine.low %v627, %v659
    %v667 = vcombine.high %v627, %v659
    %v668 = vcombine.low %v307, %v319
    %v669 = vcombine.high %v307, %v319
    %v671 = vunpack.c.l.s4 1983009808
    %v672 = vunpack.c.0.s8 %v671
    %v673 = vlaneseq
    %v674 = vshrl.u32 %v673, 7
    %v675 = vsub.s32 %v672, %v674
    %v676 = vrot.slane %v668, %v675
    %v678 = vunpack.c.l.s4 1983009808
    %v679 = vunpack.c.0.s8 %v678
    %v680 = vlaneseq
    %v681 = vshrl.u32 %v680, 7
    %v682 = vsub.s32 %v679, %v681
    %v683 = vrot.slane %v669, %v682
    %v684 = vcombine.low %v313, %v325
    %v685 = vcombine.high %v313, %v325
    %v687 = vunpack.c.l.s4 1983009808
    %v688 = vunpack.c.0.s8 %v687
    %v689 = vlaneseq
    %v690 = vshrl.u32 %v689, 7
    %v691 = vsub.s32 %v688, %v690
    %v692 = vrot.slane %v684, %v691
    %v694 = vunpack.c.l.s4 1983009808
    %v695 = vunpack.c.0.s8 %v694
    %v696 = vlaneseq
    %v697 = vshrl.u32 %v696, 7
    %v698 = vsub.s32 %v695, %v697
    %v699 = vrot.slane %v685, %v698
    %v700 = vcombine.low %v676, %v692
    %v701 = vcombine.high %v676, %v692
    %v703 = vunpack.c.l.s4 1934713408
    %v704 = vunpack.c.0.s8 %v703
    %v705 = vlaneseq
    %v706 = vshrl.u32 %v705, 7
    %v707 = vsub.s32 %v704, %v706
    %v708 = vrot.slane %v700, %v707
    %v710 = vunpack.c.l.s4 1934713408
    %v711 = vunpack.c.0.s8 %v710
    %v712 = vlaneseq
    %v713 = vshrl.u32 %v712, 7
    %v714 = vsub.s32 %v711, %v713
    %v715 = vrot.slane %v701, %v714
    %v716 = vcombine.low %v683, %v699
    %v717 = vcombine.high %v683, %v699
    %v719 = vunpack.c.l.s4 1934713408
    %v720 = vunpack.c.0.s8 %v719
    %v721 = vlaneseq
    %v722 = vshrl.u32 %v721, 7
    %v723 = vsub.s32 %v720, %v722
    %v724 = vrot.slane %v716, %v723
    %v726 = vunpack.c.l.s4 1934713408
    %v727 = vunpack.c.0.s8 %v726
    %v728 = vlaneseq
    %v729 = vshrl.u32 %v728, 7
    %v730 = vsub.s32 %v727, %v729
    %v731 = vrot.slane %v717, %v730
    %v732 = vcombine.high %v708, 0.0
    %v733 = vcombine.high %v715, 0.0
    %v734 = vcombine.high %v724, 0.0
    %v735 = vcombine.high %v731, 0.0
    %v736 = vcombine.low %v456, %v458
    %v737 = vcombine.high %v456, %v458
    %v739 = vunpack.c.l.s4 1983009808
    %v740 = vunpack.c.0.s8 %v739
    %v741 = vlaneseq
    %v742 = vshrl.u32 %v741, 7
    %v743 = vsub.s32 %v740, %v742
    %v744 = vrot.slane %v736, %v743
    %v746 = vunpack.c.l.s4 1983009808
    %v747 = vunpack.c.0.s8 %v746
    %v748 = vlaneseq
    %v749 = vshrl.u32 %v748, 7
    %v750 = vsub.s32 %v747, %v749
    %v751 = vrot.slane %v737, %v750
    %v752 = vcombine.low %v457, %v459
    %v753 = vcombine.high %v457, %v459
    %v755 = vunpack.c.l.s4 1983009808
    %v756 = vunpack.c.0.s8 %v755
    %v757 = vlaneseq
    %v758 = vshrl.u32 %v757, 7
    %v759 = vsub.s32 %v756, %v758
    %v760 = vrot.slane %v752, %v759
    %v762 = vunpack.c.l.s4 1983009808
    %v763 = vunpack.c.0.s8 %v762
    %v764 = vlaneseq
    %v765 = vshrl.u32 %v764, 7
    %v766 = vsub.s32 %v763, %v765
    %v767 = vrot.slane %v753, %v766
    %v768 = vcombine.low %v460, %v462
    %v769 = vcombine.high %v460, %v462
    %v771 = vunpack.c.l.s4 1983009808
    %v772 = vunpack.c.0.s8 %v771
    %v773 = vlaneseq
    %v774 = vshrl.u32 %v773, 7
    %v775 = vsub.s32 %v772, %v774
    %v776 = vrot.slane %v768, %v775
    %v778 = vunpack.c.l.s4 1983009808
    %v779 = vunpack.c.0.s8 %v778
    %v780 = vlaneseq
    %v781 = vshrl.u32 %v780, 7
    %v782 = vsub.s32 %v779, %v781
    %v783 = vrot.slane %v769, %v782
    %v784 = vcombine.low %v461, %v463
    %v785 = vcombine.high %v461, %v463
    %v787 = vunpack.c.l.s4 1983009808
    %v788 = vunpack.c.0.s8 %v787
    %v789 = vlaneseq
    %v790 = vshrl.u32 %v789, 7
    %v791 = vsub.s32 %v788, %v790
    %v792 = vrot.slane %v784, %v791
    %v794 = vunpack.c.l.s4 1983009808
    %v795 = vunpack.c.0.s8 %v794
    %v796 = vlaneseq
    %v797 = vshrl.u32 %v796, 7
    %v798 = vsub.s32 %v795, %v797
    %v799 = vrot.slane %v785, %v798
    %v800 = vcombine.low %v744, %v760
    %v801 = vcombine.high %v744, %v760
    %v803 = vunpack.c.l.s4 1934713408
    %v804 = vunpack.c.0.s8 %v803
    %v805 = vlaneseq
    %v806 = vshrl.u32 %v805, 7
    %v807 = vsub.s32 %v804, %v806
    %v808 = vrot.slane %v800, %v807
    %v810 = vunpack.c.l.s4 1934713408
    %v811 = vunpack.c.0.s8 %v810
    %v812 = vlaneseq
    %v813 = vshrl.u32 %v812, 7
    %v814 = vsub.s32 %v811, %v813
    %v815 = vrot.slane %v801, %v814
    %v816 = vcombine.low %v751, %v767
    %v817 = vcombine.high %v751, %v767
    %v819 = vunpack.c.l.s4 1934713408
    %v820 = vunpack.c.0.s8 %v819
    %v821 = vlaneseq
    %v822 = vshrl.u32 %v821, 7
    %v823 = vsub.s32 %v820, %v822
    %v824 = vrot.slane %v816, %v823
    %v826 = vunpack.c.l.s4 1934713408
    %v827 = vunpack.c.0.s8 %v826
    %v828 = vlaneseq
    %v829 = vshrl.u32 %v828, 7
    %v830 = vsub.s32 %v827, %v829
    %v831 = vrot.slane %v817, %v830
    %v832 = vcombine.low %v776, %v792
    %v833 = vcombine.high %v776, %v792
    %v835 = vunpack.c.l.s4 1934713408
    %v836 = vunpack.c.0.s8 %v835
    %v837 = vlaneseq
    %v838 = vshrl.u32 %v837, 7
    %v839 = vsub.s32 %v836, %v838
    %v840 = vrot.slane %v832, %v839
    %v842 = vunpack.c.l.s4 1934713408
    %v843 = vunpack.c.0.s8 %v842
    %v844 = vlaneseq
    %v845 = vshrl.u32 %v844, 7
    %v846 = vsub.s32 %v843, %v845
    %v847 = vrot.slane %v833, %v846
    %v848 = vcombine.low %v783, %v799
    %v849 = vcombine.high %v783, %v799
    %v851 = vunpack.c.l.s4 1934713408
    %v852 = vunpack.c.0.s8 %v851
    %v853 = vlaneseq
    %v854 = vshrl.u32 %v853, 7
    %v855 = vsub.s32 %v852, %v854
    %v856 = vrot.slane %v848, %v855
    %v858 = vunpack.c.l.s4 1934713408
    %v859 = vunpack.c.0.s8 %v858
    %v860 = vlaneseq
    %v861 = vshrl.u32 %v860, 7
    %v862 = vsub.s32 %v859, %v861
    %v863 = vrot.slane %v849, %v862
    %v864 = vcombine.low %v808, %v840
    %v865 = vcombine.high %v808, %v840
    %v866 = vcombine.low %v815, %v847
    %v867 = vcombine.high %v815, %v847
    %v868 = vcombine.low %v824, %v856
    %v869 = vcombine.high %v824, %v856
    %v870 = vcombine.low %v831, %v863
    %v871 = vcombine.high %v831, %v863
    %v872 = vcombine.low %v660, %v662
    %v873 = vcombine.high %v660, %v662
    %v875 = vunpack.c.l.s4 1983009808
    %v876 = vunpack.c.0.s8 %v875
    %v877 = vlaneseq
    %v878 = vshrl.u32 %v877, 7
    %v879 = vsub.s32 %v876, %v878
    %v880 = vrot.slane %v872, %v879
    %v882 = vunpack.c.l.s4 1983009808
    %v883 = vunpack.c.0.s8 %v882
    %v884 = vlaneseq
    %v885 = vshrl.u32 %v884, 7
    %v886 = vsub.s32 %v883, %v885
    %v887 = vrot.slane %v873, %v886
    %v888 = vcombine.low %v661, %v663
    %v889 = vcombine.high %v661, %v663
    %v891 = vunpack.c.l.s4 1983009808
    %v892 = vunpack.c.0.s8 %v891
    %v893 = vlaneseq
    %v894 = vshrl.u32 %v893, 7
    %v895 = vsub.s32 %v892, %v894
    %v896 = vrot.slane %v888, %v895
    %v898 = vunpack.c.l.s4 1983009808
    %v899 = vunpack.c.0.s8 %v898
    %v900 = vlaneseq
    %v901 = vshrl.u32 %v900, 7
    %v902 = vsub.s32 %v899, %v901
    %v903 = vrot.slane %v889, %v902
    %v904 = vcombine.low %v664, %v666
    %v905 = vcombine.high %v664, %v666
    %v907 = vunpack.c.l.s4 1983009808
    %v908 = vunpack.c.0.s8 %v907
    %v909 = vlaneseq
    %v910 = vshrl.u32 %v909, 7
    %v911 = vsub.s32 %v908, %v910
    %v912 = vrot.slane %v904, %v911
    %v914 = vunpack.c.l.s4 1983009808
    %v915 = vunpack.c.0.s8 %v914
    %v916 = vlaneseq
    %v917 = vshrl.u32 %v916, 7
    %v918 = vsub.s32 %v915, %v917
    %v919 = vrot.slane %v905, %v918
    %v920 = vcombine.low %v665, %v667
    %v921 = vcombine.high %v665, %v667
    %v923 = vunpack.c.l.s4 1983009808
    %v924 = vunpack.c.0.s8 %v923
    %v925 = vlaneseq
    %v926 = vshrl.u32 %v925, 7
    %v927 = vsub.s32 %v924, %v926
    %v928 = vrot.slane %v920, %v927
    %v930 = vunpack.c.l.s4 1983009808
    %v931 = vunpack.c.0.s8 %v930
    %v932 = vlaneseq
    %v933 = vshrl.u32 %v932, 7
    %v934 = vsub.s32 %v931, %v933
    %v935 = vrot.slane %v921, %v934
    %v936 = vcombine.low %v880, %v896
    %v937 = vcombine.high %v880, %v896
    %v939 = vunpack.c.l.s4 1934713408
    %v940 = vunpack.c.0.s8 %v939
    %v941 = vlaneseq
    %v942 = vshrl.u32 %v941, 7
    %v943 = vsub.s32 %v940, %v942
    %v944 = vrot.slane %v936, %v943
    %v946 = vunpack.c.l.s4 1934713408
    %v947 = vunpack.c.0.s8 %v946
    %v948 = vlaneseq
    %v949 = vshrl.u32 %v948, 7
    %v950 = vsub.s32 %v947, %v949
    %v951 = vrot.slane %v937, %v950
    %v952 = vcombine.low %v887, %v903
    %v953 = vcombine.high %v887, %v903
    %v955 = vunpack.c.l.s4 1934713408
    %v956 = vunpack.c.0.s8 %v955
    %v957 = vlaneseq
    %v958 = vshrl.u32 %v957, 7
    %v959 = vsub.s32 %v956, %v958
    %v960 = vrot.slane %v952, %v959
    %v962 = vunpack.c.l.s4 1934713408
    %v963 = vunpack.c.0.s8 %v962
    %v964 = vlaneseq
    %v965 = vshrl.u32 %v964, 7
    %v966 = vsub.s32 %v963, %v965
    %v967 = vrot.slane %v953, %v966
    %v968 = vcombine.low %v912, %v928
    %v969 = vcombine.high %v912, %v928
    %v971 = vunpack.c.l.s4 1934713408
    %v972 = vunpack.c.0.s8 %v971
    %v973 = vlaneseq
    %v974 = vshrl.u32 %v973, 7
    %v975 = vsub.s32 %v972, %v974
    %v976 = vrot.slane %v968, %v975
    %v978 = vunpack.c.l.s4 1934713408
    %v979 = vunpack.c.0.s8 %v978
    %v980 = vlaneseq
    %v981 = vshrl.u32 %v980, 7
    %v982 = vsub.s32 %v979, %v981
    %v983 = vrot.slane %v969, %v982
    %v984 = vcombine.low %v919, %v935
    %v985 = vcombine.high %v919, %v935
    %v987 = vunpack.c.l.s4 1934713408
    %v988 = vunpack.c.0.s8 %v987
    %v989 = vlaneseq
    %v990 = vshrl.u32 %v989, 7
    %v991 = vsub.s32 %v988, %v990
    %v992 = vrot.slane %v984, %v991
    %v994 = vunpack.c.l.s4 1934713408
    %v995 = vunpack.c.0.s8 %v994
    %v996 = vlaneseq
    %v997 = vshrl.u32 %v996, 7
    %v998 = vsub.s32 %v995, %v997
    %v999 = vrot.slane %v985, %v998
    %v1000 = vcombine.low %v944, %v976
    %v1001 = vcombine.high %v944, %v976
    %v1002 = vcombine.low %v951, %v983
    %v1003 = vcombine.high %v951, %v983
    %v1004 = vcombine.low %v960, %v992
    %v1005 = vcombine.high %v960, %v992
    %v1006 = vcombine.low %v967, %v999
    %v1007 = vcombine.high %v967, %v999
    %v1008 = vcombine.low %v504, %v511
    %v1010 = vunpack.c.l.s4 1983009808
    %v1011 = vunpack.c.0.s8 %v1010
    %v1012 = vlaneseq
    %v1013 = vshrl.u32 %v1012, 7
    %v1014 = vsub.s32 %v1011, %v1013
    %v1015 = vrot.slane %v1008, %v1014
    %v1016 = vcombine.low %v528, %v529
    %v1018 = vunpack.c.l.s4 1983009808
    %v1019 = vunpack.c.0.s8 %v1018
    %v1020 = vlaneseq
    %v1021 = vshrl.u32 %v1020, 7
    %v1022 = vsub.s32 %v1019, %v1021
    %v1023 = vrot.slane %v1016, %v1022
    %v1024 = vcombine.low %v520, %v527
    %v1026 = vunpack.c.l.s4 1983009808
    %v1027 = vunpack.c.0.s8 %v1026
    %v1028 = vlaneseq
    %v1029 = vshrl.u32 %v1028, 7
    %v1030 = vsub.s32 %v1027, %v1029
    %v1031 = vrot.slane %v1024, %v1030
    %v1032 = vcombine.low %v530, %v531
    %v1034 = vunpack.c.l.s4 1983009808
    %v1035 = vunpack.c.0.s8 %v1034
    %v1036 = vlaneseq
    %v1037 = vshrl.u32 %v1036, 7
    %v1038 = vsub.s32 %v1035, %v1037
    %v1039 = vrot.slane %v1032, %v1038
    %v1040 = vcombine.low %v1015, %v1023
    %v1041 = vcombine.high %v1015, %v1023
    %v1043 = vunpack.c.l.s4 1934713408
    %v1044 = vunpack.c.0.s8 %v1043
    %v1045 = vlaneseq
    %v1046 = vshrl.u32 %v1045, 7
    %v1047 = vsub.s32 %v1044, %v1046
    %v1048 = vrot.slane %v1040, %v1047
    %v1050 = vunpack.c.l.s4 1934713408
    %v1051 = vunpack.c.0.s8 %v1050
    %v1052 = vlaneseq
    %v1053 = vshrl.u32 %v1052, 7
    %v1054 = vsub.s32 %v1051, %v1053
    %v1055 = vrot.slane %v1041, %v1054
    %v1056 = vcombine.low %v1031, %v1039
    %v1057 = vcombine.high %v1031, %v1039
    %v1059 = vunpack.c.l.s4 1934713408
    %v1060 = vunpack.c.0.s8 %v1059
    %v1061 = vlaneseq
    %v1062 = vshrl.u32 %v1061, 7
    %v1063 = vsub.s32 %v1060, %v1062
    %v1064 = vrot.slane %v1056, %v1063
    %v1066 = vunpack.c.l.s4 1934713408
    %v1067 = vunpack.c.0.s8 %v1066
    %v1068 = vlaneseq
    %v1069 = vshrl.u32 %v1068, 7
    %v1070 = vsub.s32 %v1067, %v1069
    %v1071 = vrot.slane %v1057, %v1070
    %v1072 = vcombine.low %v1048, %v1064
    %v1073 = vcombine.high %v1048, %v1064
    %v1074 = vcombine.low %v1055, %v1071
    %v1075 = vcombine.high %v1055, %v1071
    %v1076 = vcombine.low %v708, %v715
    %v1078 = vunpack.c.l.s4 1983009808
    %v1079 = vunpack.c.0.s8 %v1078
    %v1080 = vlaneseq
    %v1081 = vshrl.u32 %v1080, 7
    %v1082 = vsub.s32 %v1079, %v1081
    %v1083 = vrot.slane %v1076, %v1082
    %v1084 = vcombine.low %v732, %v733
    %v1086 = vunpack.c.l.s4 1983009808
    %v1087 = vunpack.c.0.s8 %v1086
    %v1088 = vlaneseq
    %v1089 = vshrl.u32 %v1088, 7
    %v1090 = vsub.s32 %v1087, %v1089
    %v1091 = vrot.slane %v1084, %v1090
    %v1092 = vcombine.low %v724, %v731
    %v1094 = vunpack.c.l.s4 1983009808
    %v1095 = vunpack.c.0.s8 %v1094
    %v1096 = vlaneseq
    %v1097 = vshrl.u32 %v1096, 7
    %v1098 = vsub.s32 %v1095, %v1097
    %v1099 = vrot.slane %v1092, %v1098
    %v1100 = vcombine.low %v734, %v735
    %v1102 = vunpack.c.l.s4 1983009808
    %v1103 = vunpack.c.0.s8 %v1102
    %v1104 = vlaneseq
    %v1105 = vshrl.u32 %v1104, 7
    %v1106 = vsub.s32 %v1103, %v1105
    %v1107 = vrot.slane %v1100, %v1106
    %v1108 = vcombine.low %v1083, %v1091
    %v1109 = vcombine.high %v1083, %v1091
    %v1111 = vunpack.c.l.s4 1934713408
    %v1112 = vunpack.c.0.s8 %v1111
    %v1113 = vlaneseq
    %v1114 = vshrl.u32 %v1113, 7
    %v1115 = vsub.s32 %v1112, %v1114
    %v1116 = vrot.slane %v1108, %v1115
    %v1118 = vunpack.c.l.s4 1934713408
    %v1119 = vunpack.c.0.s8 %v1118
    %v1120 = vlaneseq
    %v1121 = vshrl.u32 %v1120, 7
    %v1122 = vsub.s32 %v1119, %v1121
    %v1123 = vrot.slane %v1109, %v1122
    %v1124 = vcombine.low %v1099, %v1107
    %v1125 = vcombine.high %v1099, %v1107
    %v1127 = vunpack.c.l.s4 1934713408
    %v1128 = vunpack.c.0.s8 %v1127
    %v1129 = vlaneseq
    %v1130 = vshrl.u32 %v1129, 7
    %v1131 = vsub.s32 %v1128, %v1130
    %v1132 = vrot.slane %v1124, %v1131
    %v1134 = vunpack.c.l.s4 1934713408
    %v1135 = vunpack.c.0.s8 %v1134
    %v1136 = vlaneseq
    %v1137 = vshrl.u32 %v1136, 7
    %v1138 = vsub.s32 %v1135, %v1137
    %v1139 = vrot.slane %v1125, %v1138
    %v1140 = vcombine.low %v1116, %v1132
    %v1141 = vcombine.high %v1116, %v1132
    %v1142 = vcombine.low %v1123, %v1139
    %v1143 = vcombine.high %v1123, %v1139
    %vm1144 = vcmask 64512
    %v1146 = vsel %vm1144, %v864, 0
    %v1149 = vsel %vm1144, %v1000, 0
    %v1152 = vsel %vm1144, %v865, 0
    %v1155 = vsel %vm1144, %v1001, 0
    %v1158 = vsel %vm1144, %v866, 0
    %v1161 = vsel %vm1144, %v1002, 0
    %v1164 = vsel %vm1144, %v867, 0
    %v1167 = vsel %vm1144, %v1003, 0
    %v1170 = vsel %vm1144, %v868, 0
    %v1173 = vsel %vm1144, %v1004, 0
    %v1176 = vsel %vm1144, %v869, 0
    %v1179 = vsel %vm1144, %v1005, 0
    %v1182 = vsel %vm1144, %v870, 0
    %v1185 = vsel %vm1144, %v1006, 0
    %v1188 = vsel %vm1144, %v871, 0
    %v1191 = vsel %vm1144, %v1007, 0
    %1193 = vmatprep.subr.mxu0 0.0
    %1194 = vmatpush1.xpose.msra.mxu0 %v1170
    %1195 = vmatprep.subr.mxu0 0.0
    %1196 = vmatpush1.xpose.msra.mxu0 %v1173
    %1197 = vmatprep.subr.mxu0 0.0
    %1198 = vmatpush1.xpose.msra.mxu0 %v1176
    %1199 = vmatprep.subr.mxu0 0.0
    %1200 = vmatpush1.xpose.msra.mxu0 %v1179
    %1201 = vmatprep.subr.mxu0 0.0
    %1202 = vmatpush1.xpose.msra.mxu0 %v1182
    %1203 = vmatprep.subr.mxu0 0.0
    %1204 = vmatpush1.xpose.msra.mxu0 %v1185
    %1205 = vmatprep.subr.mxu0 0.0
    %1206 = vmatpush1.xpose.msra.mxu0 %v1188
    %1207 = vmatprep.subr.mxu0 0.0
    %1208 = vmatpush1.xpose.msra.mxu0 %v1191
    %1209 = vmatprep.subr.mxu0 0.0
    %1210 = vmatpush1.xpose.msra.mxu0 0.0
    %1211 = vmatprep.subr.mxu0 0.0
    %1212 = vmatpush1.xpose.msra.mxu0 0.0
    %1213 = vmatprep.subr.mxu0 0.0
    %1214 = vmatpush1.xpose.msra.mxu0 0.0
    %1215 = vmatprep.subr.mxu0 0.0
    %1216 = vmatpush1.xpose.msra.mxu0 0.0
    %1217 = vmatprep.subr.mxu0 0.0
    %1218 = vmatpush1.xpose.msra.mxu0 0.0
    %1219 = vmatprep.subr.mxu0 0.0
    %1220 = vmatpush1.xpose.msra.mxu0 0.0
    %1221 = vmatprep.subr.mxu0 0.0
    %1222 = vmatpush1.xpose.msra.mxu0 0.0
    %1223 = vmatprep.subr.mxu0 0.0
    %1224 = vmatpush1.xpose.msra.mxu0 0.0
    %1225 = vmatprep.subr.mxu0 0.0
    %1226 = vmatpush1.xpose.msra.mxu0 0.0
    %1227 = vmatprep.subr.mxu0 0.0
    %1228 = vmatpush1.xpose.msra.mxu0 0.0
    %1229 = vmatprep.subr.mxu0 0.0
    %1230 = vmatpush1.xpose.msra.mxu0 0.0
    %1231 = vmatprep.subr.mxu0 0.0
    %1232 = vmatpush1.xpose.msra.mxu0 0.0
    %1233 = vmatprep.subr.mxu0 0.0
    %1234 = vmatpush1.xpose.msra.mxu0 0.0
    %1235 = vmatprep.subr.mxu0 0.0
    %1236 = vmatpush1.xpose.msra.mxu0 0.0
    %1237 = vmatprep.subr.mxu0 0.0
    %1238 = vmatpush1.xpose.msra.mxu0 0.0
    %1239 = vmatprep.subr.mxu0 0.0
    %1240 = vmatpush1.xpose.msra.mxu0 0.0
    %1241 = vmatprep.subr.mxu0 0.0
    %1242 = vmatpush1.xpose.msra.mxu0 0.0
    %1243 = vmatprep.subr.mxu0 0.0
    %1244 = vmatpush1.xpose.msra.mxu0 0.0
    %1245 = vmatprep.subr.mxu0 0.0
    %1246 = vmatpush1.xpose.msra.mxu0 0.0
    %1247 = vmatprep.subr.mxu0 0.0
    %1248 = vmatpush1.xpose.msra.mxu0 0.0
    %1249 = vmatprep.subr.mxu0 0.0
    %1250 = vmatpush1.xpose.msra.mxu0 0.0
    %1251 = vmatprep.subr.mxu0 0.0
    %1252 = vmatpush1.xpose.msra.mxu0 0.0
    %1253 = vmatprep.subr.mxu0 0.0
    %1254 = vmatpush1.xpose.msra.mxu0 0.0
    %1255 = vmatprep.subr.mxu0 0.0
    %1256 = vmatpush1.xpose.msra.mxu0 0.0
    %1257 = vmatprep.mubr.f32.mxu0 0.0
    %1258 = vmatmul.mubr.f32.gmra.mrb[0].mxu0 %v1146
    %v1259 = vpop.f32.mrb[0].mxu0
    %v1260 = vadd.f32 %v12, %v1259
    %v1261 = vpop.f32.mrb[0].mxu0
    %1262 = vmatprep.mubr.f32.mxu0 0.0
    %1263 = vmatmul.mubr.f32.gmra.mrb[0].mxu0 %v1149
    %v1264 = vpop.f32.mrb[0].mxu0
    %v1265 = vadd.f32 %v13, %v1264
    %v1266 = vpop.f32.mrb[0].mxu0
    %1267 = vmatprep.mubr.f32.mxu0 0.0
    %1268 = vmatmul.mubr.f32.gmra.mrb[0].mxu0 %v1152
    %v1269 = vpop.f32.mrb[0].mxu0
    %v1270 = vadd.f32 %v14, %v1269
    %v1271 = vpop.f32.mrb[0].mxu0
    %1272 = vmatprep.mubr.f32.mxu0 0.0
    %1273 = vmatmul.mubr.f32.gmra.mrb[0].mxu0 %v1155
    %v1274 = vpop.f32.mrb[0].mxu0
    %v1275 = vadd.f32 %v15, %v1274
    %v1276 = vpop.f32.mrb[0].mxu0
    %1277 = vmatprep.mubr.f32.mxu0 0.0
    %1278 = vmatmul.mubr.f32.gmra.mrb[0].mxu0 %v1158
    %v1279 = vpop.f32.mrb[0].mxu0
    %v1280 = vadd.f32 %v16, %v1279
    %v1281 = vpop.f32.mrb[0].mxu0
    %1282 = vmatprep.mubr.f32.mxu0 0.0
    %1283 = vmatmul.mubr.f32.gmra.mrb[0].mxu0 %v1161
    %v1284 = vpop.f32.mrb[0].mxu0
    %v1285 = vadd.f32 %v17, %v1284
    %v1286 = vpop.f32.mrb[0].mxu0
    %1287 = vmatprep.mubr.f32.mxu0 0.0
    %1288 = vmatmul.mubr.f32.gmra.mrb[0].mxu0 %v1164
    %v1289 = vpop.f32.mrb[0].mxu0
    %v1290 = vadd.f32 %v18, %v1289
    %v1291 = vpop.f32.mrb[0].mxu0
    %1292 = vmatprep.mubr.f32.mxu0 0.0
    %1293 = vmatmul.mubr.f32.gmra.mrb[0].mxu0 %v1167
    %v1294 = vpop.f32.mrb[0].mxu0
    %v1295 = vadd.f32 %v19, %v1294
    %v1296 = vpop.f32.mrb[0].mxu0
    %1297 = vdwg.mxu0
    %vm1298 = vcmask 523264
    %v1299 = vsel %vm1298, %v1260, -inf
    %1300 = vmax.xlane.f32.xlu0 %v1299
    %v1301 = vpop.xlane.xlu0 %1300
    %v1302 = vsel %vm1298, %v1265, -inf
    %1303 = vmax.xlane.f32.xlu0 %v1302
    %v1304 = vpop.xlane.xlu0 %1303
    %v1305 = vsel %vm1298, %v1270, -inf
    %1306 = vmax.xlane.f32.xlu0 %v1305
    %v1307 = vpop.xlane.xlu0 %1306
    %v1308 = vsel %vm1298, %v1275, -inf
    %1309 = vmax.xlane.f32.xlu0 %v1308
    %v1310 = vpop.xlane.xlu0 %1309
    %v1311 = vsel %vm1298, %v1280, -inf
    %1312 = vmax.xlane.f32.xlu0 %v1311
    %v1313 = vpop.xlane.xlu0 %1312
    %v1314 = vsel %vm1298, %v1285, -inf
    %1315 = vmax.xlane.f32.xlu0 %v1314
    %v1316 = vpop.xlane.xlu0 %1315
    %v1317 = vsel %vm1298, %v1290, -inf
    %1318 = vmax.xlane.f32.xlu0 %v1317
    %v1319 = vpop.xlane.xlu0 %1318
    %v1320 = vsel %vm1298, %v1295, -inf
    %1321 = vmax.xlane.f32.xlu0 %v1320
    %v1322 = vpop.xlane.xlu0 %1321
    %v1323 = vsub.f32 %v1260, %v1301
    %v1324 = vsub.f32 %v1265, %v1304
    %v1325 = vsub.f32 %v1270, %v1307
    %v1326 = vsub.f32 %v1275, %v1310
    %v1327 = vsub.f32 %v1280, %v1313
    %v1328 = vsub.f32 %v1285, %v1316
    %v1329 = vsub.f32 %v1290, %v1319
    %v1330 = vsub.f32 %v1295, %v1322
    %v1331 = vmul.f32 %v1323, 1.442695
    %v1332 = vpow.pop %v1331
    %v1333 = vmul.f32 %v1324, 1.442695
    %v1334 = vpow.pop %v1333
    %v1335 = vmul.f32 %v1325, 1.442695
    %v1336 = vpow.pop %v1335
    %v1337 = vmul.f32 %v1326, 1.442695
    %v1338 = vpow.pop %v1337
    %v1339 = vmul.f32 %v1327, 1.442695
    %v1340 = vpow.pop %v1339
    %v1341 = vmul.f32 %v1328, 1.442695
    %v1342 = vpow.pop %v1341
    %v1343 = vmul.f32 %v1329, 1.442695
    %v1344 = vpow.pop %v1343
    %v1345 = vmul.f32 %v1330, 1.442695
    %v1346 = vpow.pop %v1345
    %v1347 = vsel %vm1298, %v1332, 0.0
    %1348 = vadd.xlane.f32.xlu0 %v1347
    %v1349 = vpop.xlane.xlu0 %1348
    %v1350 = vsel %vm1298, %v1334, 0.0
    %1351 = vadd.xlane.f32.xlu0 %v1350
    %v1352 = vpop.xlane.xlu0 %1351
    %v1353 = vsel %vm1298, %v1336, 0.0
    %1354 = vadd.xlane.f32.xlu0 %v1353
    %v1355 = vpop.xlane.xlu0 %1354
    %v1356 = vsel %vm1298, %v1338, 0.0
    %1357 = vadd.xlane.f32.xlu0 %v1356
    %v1358 = vpop.xlane.xlu0 %1357
    %v1359 = vsel %vm1298, %v1340, 0.0
    %1360 = vadd.xlane.f32.xlu0 %v1359
    %v1361 = vpop.xlane.xlu0 %1360
    %v1362 = vsel %vm1298, %v1342, 0.0
    %1363 = vadd.xlane.f32.xlu0 %v1362
    %v1364 = vpop.xlane.xlu0 %1363
    %v1365 = vsel %vm1298, %v1344, 0.0
    %1366 = vadd.xlane.f32.xlu0 %v1365
    %v1367 = vpop.xlane.xlu0 %1366
    %v1368 = vsel %vm1298, %v1346, 0.0
    %1369 = vadd.xlane.f32.xlu0 %v1368
    %v1370 = vpop.xlane.xlu0 %1369
    %v1371 = vrcp.pop %v1349
    %v1372 = vrcp.pop %v1352
    %v1373 = vrcp.pop %v1355
    %v1374 = vrcp.pop %v1358
    %v1375 = vrcp.pop %v1361
    %v1376 = vrcp.pop %v1364
    %v1377 = vrcp.pop %v1367
    %v1378 = vrcp.pop %v1370
    %v1379 = vmul.f32 %v1332, %v1371
    %v1380 = vmul.f32 %v1334, %v1372
    %v1381 = vmul.f32 %v1336, %v1373
    %v1382 = vmul.f32 %v1338, %v1374
    %v1383 = vmul.f32 %v1340, %v1375
    %v1384 = vmul.f32 %v1342, %v1376
    %v1385 = vmul.f32 %v1344, %v1377
    %v1386 = vmul.f32 %v1346, %v1378
    %v1388 = vsel %vm1298, %v1379, 0
    %v1391 = vsel %vm1298, %v1380, 0
    %v1394 = vsel %vm1298, %v1381, 0
    %v1397 = vsel %vm1298, %v1382, 0
    %v1400 = vsel %vm1298, %v1383, 0
    %v1403 = vsel %vm1298, %v1384, 0
    %v1406 = vsel %vm1298, %v1385, 0
    %v1409 = vsel %vm1298, %v1386, 0
    %1411 = vmatprep.subr.mxu0 0.0
    %1412 = vmatpush1.msra.mxu0 %v1072
    %1413 = vmatprep.subr.mxu0 0.0
    %1414 = vmatpush1.msra.mxu0 %v1140
    %1415 = vmatprep.subr.mxu0 0.0
    %1416 = vmatpush1.msra.mxu0 %v1073
    %1417 = vmatprep.subr.mxu0 0.0
    %1418 = vmatpush1.msra.mxu0 %v1141
    %1419 = vmatprep.subr.mxu0 0.0
    %1420 = vmatpush1.msra.mxu0 %v1074
    %1421 = vmatprep.subr.mxu0 0.0
    %1422 = vmatpush1.msra.mxu0 %v1142
    %1423 = vmatprep.subr.mxu0 0.0
    %1424 = vmatpush1.msra.mxu0 %v1075
    %1425 = vmatprep.subr.mxu0 0.0
    %1426 = vmatpush1.msra.mxu0 %v1143
    %1427 = vmatprep.subr.mxu0 0.0
    %1428 = vmatpush1.msra.mxu0 0.0
    %1429 = vmatprep.subr.mxu0 0.0
    %1430 = vmatpush1.msra.mxu0 0.0
    %1431 = vmatprep.subr.mxu0 0.0
    %1432 = vmatpush1.msra.mxu0 0.0
    %1433 = vmatprep.subr.mxu0 0.0
    %1434 = vmatpush1.msra.mxu0 0.0
    %1435 = vmatprep.subr.mxu0 0.0
    %1436 = vmatpush1.msra.mxu0 0.0
    %1437 = vmatprep.subr.mxu0 0.0
    %1438 = vmatpush1.msra.mxu0 0.0
    %1439 = vmatprep.subr.mxu0 0.0
    %1440 = vmatpush1.msra.mxu0 0.0
    %1441 = vmatprep.subr.mxu0 0.0
    %1442 = vmatpush1.msra.mxu0 0.0
    %1443 = vmatprep.subr.mxu0 0.0
    %1444 = vmatpush1.msra.mxu0 0.0
    %1445 = vmatprep.subr.mxu0 0.0
    %1446 = vmatpush1.msra.mxu0 0.0
    %1447 = vmatprep.subr.mxu0 0.0
    %1448 = vmatpush1.msra.mxu0 0.0
    %1449 = vmatprep.subr.mxu0 0.0
    %1450 = vmatpush1.msra.mxu0 0.0
    %1451 = vmatprep.subr.mxu0 0.0
    %1452 = vmatpush1.msra.mxu0 0.0
    %1453 = vmatprep.subr.mxu0 0.0
    %1454 = vmatpush1.msra.mxu0 0.0
    %1455 = vmatprep.subr.mxu0 0.0
    %1456 = vmatpush1.msra.mxu0 0.0
    %1457 = vmatprep.subr.mxu0 0.0
    %1458 = vmatpush1.msra.mxu0 0.0
    %1459 = vmatprep.subr.mxu0 0.0
    %1460 = vmatpush1.msra.mxu0 0.0
    %1461 = vmatprep.subr.mxu0 0.0
    %1462 = vmatpush1.msra.mxu0 0.0
    %1463 = vmatprep.subr.mxu0 0.0
    %1464 = vmatpush1.msra.mxu0 0.0
    %1465 = vmatprep.subr.mxu0 0.0
    %1466 = vmatpush1.msra.mxu0 0.0
    %1467 = vmatprep.subr.mxu0 0.0
    %1468 = vmatpush1.msra.mxu0 0.0
    %1469 = vmatprep.subr.mxu0 0.0
    %1470 = vmatpush1.msra.mxu0 0.0
    %1471 = vmatprep.subr.mxu0 0.0
    %1472 = vmatpush1.msra.mxu0 0.0
    %1473 = vmatprep.subr.mxu0 0.0
    %1474 = vmatpush1.msra.mxu0 0.0
    %1475 = vmatprep.mubr.f32.mxu0 0.0
    %1476 = vmatmul.mubr.f32.gmra.mrb[0].mxu0 %v1388
    %v1477 = vpop.f32.mrb[0].mxu0
    %v1478 = vadd.f32 0.0, %v1477
    %v1479 = vpop.f32.mrb[0].mxu0
    %1480 = vmatprep.mubr.f32.mxu0 0.0
    %1481 = vmatmul.mubr.f32.gmra.mrb[0].mxu0 %v1391
    %v1482 = vpop.f32.mrb[0].mxu0
    %v1483 = vadd.f32 0.0, %v1482
    %v1484 = vpop.f32.mrb[0].mxu0
    %1485 = vmatprep.mubr.f32.mxu0 0.0
    %1486 = vmatmul.mubr.f32.gmra.mrb[0].mxu0 %v1394
    %v1487 = vpop.f32.mrb[0].mxu0
    %v1488 = vadd.f32 0.0, %v1487
    %v1489 = vpop.f32.mrb[0].mxu0
    %1490 = vmatprep.mubr.f32.mxu0 0.0
    %1491 = vmatmul.mubr.f32.gmra.mrb[0].mxu0 %v1397
    %v1492 = vpop.f32.mrb[0].mxu0
    %v1493 = vadd.f32 0.0, %v1492
    %v1494 = vpop.f32.mrb[0].mxu0
    %1495 = vmatprep.mubr.f32.mxu0 0.0
    %1496 = vmatmul.mubr.f32.gmra.mrb[0].mxu0 %v1400
    %v1497 = vpop.f32.mrb[0].mxu0
    %v1498 = vadd.f32 0.0, %v1497
    %v1499 = vpop.f32.mrb[0].mxu0
    %1500 = vmatprep.mubr.f32.mxu0 0.0
    %1501 = vmatmul.mubr.f32.gmra.mrb[0].mxu0 %v1403
    %v1502 = vpop.f32.mrb[0].mxu0
    %v1503 = vadd.f32 0.0, %v1502
    %v1504 = vpop.f32.mrb[0].mxu0
    %1505 = vmatprep.mubr.f32.mxu0 0.0
    %1506 = vmatmul.mubr.f32.gmra.mrb[0].mxu0 %v1406
    %v1507 = vpop.f32.mrb[0].mxu0
    %v1508 = vadd.f32 0.0, %v1507
    %v1509 = vpop.f32.mrb[0].mxu0
    %1510 = vmatprep.mubr.f32.mxu0 0.0
    %1511 = vmatmul.mubr.f32.gmra.mrb[0].mxu0 %v1409
    %v1512 = vpop.f32.mrb[0].mxu0
    %v1513 = vadd.f32 0.0, %v1512
    %v1514 = vpop.f32.mrb[0].mxu0
    %1515 = vdwg.mxu0
    %v1516 = vcombine.low %v1478, %v1498
    %v1517 = vcombine.high %v1478, %v1498
    %v1519 = vunpack.c.l.s4 1983009808
    %v1520 = vunpack.c.0.s8 %v1519
    %v1521 = vlaneseq
    %v1522 = vshrl.u32 %v1521, 7
    %v1523 = vsub.s32 %v1520, %v1522
    %v1524 = vrot.slane %v1516, %v1523
    %v1526 = vunpack.c.l.s4 1983009808
    %v1527 = vunpack.c.0.s8 %v1526
    %v1528 = vlaneseq
    %v1529 = vshrl.u32 %v1528, 7
    %v1530 = vsub.s32 %v1527, %v1529
    %v1531 = vrot.slane %v1517, %v1530
    %v1532 = vcombine.low %v1488, %v1508
    %v1533 = vcombine.high %v1488, %v1508
    %v1535 = vunpack.c.l.s4 1983009808
    %v1536 = vunpack.c.0.s8 %v1535
    %v1537 = vlaneseq
    %v1538 = vshrl.u32 %v1537, 7
    %v1539 = vsub.s32 %v1536, %v1538
    %v1540 = vrot.slane %v1532, %v1539
    %v1542 = vunpack.c.l.s4 1983009808
    %v1543 = vunpack.c.0.s8 %v1542
    %v1544 = vlaneseq
    %v1545 = vshrl.u32 %v1544, 7
    %v1546 = vsub.s32 %v1543, %v1545
    %v1547 = vrot.slane %v1533, %v1546
    %v1548 = vcombine.low %v1524, %v1540
    %v1549 = vcombine.high %v1524, %v1540
    %v1551 = vunpack.c.l.s4 1934713408
    %v1552 = vunpack.c.0.s8 %v1551
    %v1553 = vlaneseq
    %v1554 = vshrl.u32 %v1553, 7
    %v1555 = vsub.s32 %v1552, %v1554
    %v1556 = vrot.slane %v1548, %v1555
    %v1558 = vunpack.c.l.s4 1934713408
    %v1559 = vunpack.c.0.s8 %v1558
    %v1560 = vlaneseq
    %v1561 = vshrl.u32 %v1560, 7
    %v1562 = vsub.s32 %v1559, %v1561
    %v1563 = vrot.slane %v1549, %v1562
    %v1564 = vcombine.low %v1531, %v1547
    %v1565 = vcombine.high %v1531, %v1547
    %v1567 = vunpack.c.l.s4 1934713408
    %v1568 = vunpack.c.0.s8 %v1567
    %v1569 = vlaneseq
    %v1570 = vshrl.u32 %v1569, 7
    %v1571 = vsub.s32 %v1568, %v1570
    %v1572 = vrot.slane %v1564, %v1571
    %v1574 = vunpack.c.l.s4 1934713408
    %v1575 = vunpack.c.0.s8 %v1574
    %v1576 = vlaneseq
    %v1577 = vshrl.u32 %v1576, 7
    %v1578 = vsub.s32 %v1575, %v1577
    %v1579 = vrot.slane %v1565, %v1578
    %v1580 = vcombine.high %v1556, 0.0
    %v1581 = vcombine.high %v1563, 0.0
    %v1582 = vcombine.high %v1572, 0.0
    %v1583 = vcombine.high %v1579, 0.0
    %v1584 = vcombine.low %v1483, %v1503
    %v1585 = vcombine.high %v1483, %v1503
    %v1587 = vunpack.c.l.s4 1983009808
    %v1588 = vunpack.c.0.s8 %v1587
    %v1589 = vlaneseq
    %v1590 = vshrl.u32 %v1589, 7
    %v1591 = vsub.s32 %v1588, %v1590
    %v1592 = vrot.slane %v1584, %v1591
    %v1594 = vunpack.c.l.s4 1983009808
    %v1595 = vunpack.c.0.s8 %v1594
    %v1596 = vlaneseq
    %v1597 = vshrl.u32 %v1596, 7
    %v1598 = vsub.s32 %v1595, %v1597
    %v1599 = vrot.slane %v1585, %v1598
    %v1600 = vcombine.low %v1493, %v1513
    %v1601 = vcombine.high %v1493, %v1513
    %v1603 = vunpack.c.l.s4 1983009808
    %v1604 = vunpack.c.0.s8 %v1603
    %v1605 = vlaneseq
    %v1606 = vshrl.u32 %v1605, 7
    %v1607 = vsub.s32 %v1604, %v1606
    %v1608 = vrot.slane %v1600, %v1607
    %v1610 = vunpack.c.l.s4 1983009808
    %v1611 = vunpack.c.0.s8 %v1610
    %v1612 = vlaneseq
    %v1613 = vshrl.u32 %v1612, 7
    %v1614 = vsub.s32 %v1611, %v1613
    %v1615 = vrot.slane %v1601, %v1614
    %v1616 = vcombine.low %v1592, %v1608
    %v1617 = vcombine.high %v1592, %v1608
    %v1619 = vunpack.c.l.s4 1934713408
    %v1620 = vunpack.c.0.s8 %v1619
    %v1621 = vlaneseq
    %v1622 = vshrl.u32 %v1621, 7
    %v1623 = vsub.s32 %v1620, %v1622
    %v1624 = vrot.slane %v1616, %v1623
    %v1626 = vunpack.c.l.s4 1934713408
    %v1627 = vunpack.c.0.s8 %v1626
    %v1628 = vlaneseq
    %v1629 = vshrl.u32 %v1628, 7
    %v1630 = vsub.s32 %v1627, %v1629
    %v1631 = vrot.slane %v1617, %v1630
    %v1632 = vcombine.low %v1599, %v1615
    %v1633 = vcombine.high %v1599, %v1615
    %v1635 = vunpack.c.l.s4 1934713408
    %v1636 = vunpack.c.0.s8 %v1635
    %v1637 = vlaneseq
    %v1638 = vshrl.u32 %v1637, 7
    %v1639 = vsub.s32 %v1636, %v1638
    %v1640 = vrot.slane %v1632, %v1639
    %v1642 = vunpack.c.l.s4 1934713408
    %v1643 = vunpack.c.0.s8 %v1642
    %v1644 = vlaneseq
    %v1645 = vshrl.u32 %v1644, 7
    %v1646 = vsub.s32 %v1643, %v1645
    %v1647 = vrot.slane %v1633, %v1646
    %v1648 = vcombine.high %v1624, 0.0
    %v1649 = vcombine.high %v1631, 0.0
    %v1650 = vcombine.high %v1640, 0.0
    %v1651 = vcombine.high %v1647, 0.0
    %v1652 = vcombine.low %v1556, %v1563
    %v1654 = vunpack.c.l.s4 1983009808
    %v1655 = vunpack.c.0.s8 %v1654
    %v1656 = vlaneseq
    %v1657 = vshrl.u32 %v1656, 7
    %v1658 = vsub.s32 %v1655, %v1657
    %v1659 = vrot.slane %v1652, %v1658
    %v1660 = vcombine.low %v1580, %v1581
    %v1662 = vunpack.c.l.s4 1983009808
    %v1663 = vunpack.c.0.s8 %v1662
    %v1664 = vlaneseq
    %v1665 = vshrl.u32 %v1664, 7
    %v1666 = vsub.s32 %v1663, %v1665
    %v1667 = vrot.slane %v1660, %v1666
    %v1668 = vcombine.low %v1572, %v1579
    %v1670 = vunpack.c.l.s4 1983009808
    %v1671 = vunpack.c.0.s8 %v1670
    %v1672 = vlaneseq
    %v1673 = vshrl.u32 %v1672, 7
    %v1674 = vsub.s32 %v1671, %v1673
    %v1675 = vrot.slane %v1668, %v1674
    %v1676 = vcombine.low %v1582, %v1583
    %v1678 = vunpack.c.l.s4 1983009808
    %v1679 = vunpack.c.0.s8 %v1678
    %v1680 = vlaneseq
    %v1681 = vshrl.u32 %v1680, 7
    %v1682 = vsub.s32 %v1679, %v1681
    %v1683 = vrot.slane %v1676, %v1682
    %v1684 = vcombine.low %v1659, %v1667
    %v1685 = vcombine.high %v1659, %v1667
    %v1687 = vunpack.c.l.s4 1934713408
    %v1688 = vunpack.c.0.s8 %v1687
    %v1689 = vlaneseq
    %v1690 = vshrl.u32 %v1689, 7
    %v1691 = vsub.s32 %v1688, %v1690
    %v1692 = vrot.slane %v1684, %v1691
    %v1694 = vunpack.c.l.s4 1934713408
    %v1695 = vunpack.c.0.s8 %v1694
    %v1696 = vlaneseq
    %v1697 = vshrl.u32 %v1696, 7
    %v1698 = vsub.s32 %v1695, %v1697
    %v1699 = vrot.slane %v1685, %v1698
    %v1700 = vcombine.low %v1675, %v1683
    %v1701 = vcombine.high %v1675, %v1683
    %v1703 = vunpack.c.l.s4 1934713408
    %v1704 = vunpack.c.0.s8 %v1703
    %v1705 = vlaneseq
    %v1706 = vshrl.u32 %v1705, 7
    %v1707 = vsub.s32 %v1704, %v1706
    %v1708 = vrot.slane %v1700, %v1707
    %v1710 = vunpack.c.l.s4 1934713408
    %v1711 = vunpack.c.0.s8 %v1710
    %v1712 = vlaneseq
    %v1713 = vshrl.u32 %v1712, 7
    %v1714 = vsub.s32 %v1711, %v1713
    %v1715 = vrot.slane %v1701, %v1714
    %v1716 = vcombine.low %v1692, %v1708
    %v1717 = vcombine.high %v1692, %v1708
    %v1718 = vcombine.low %v1699, %v1715
    %v1719 = vcombine.high %v1699, %v1715
    %v1720 = vcombine.low %v1624, %v1631
    %v1722 = vunpack.c.l.s4 1983009808
    %v1723 = vunpack.c.0.s8 %v1722
    %v1724 = vlaneseq
    %v1725 = vshrl.u32 %v1724, 7
    %v1726 = vsub.s32 %v1723, %v1725
    %v1727 = vrot.slane %v1720, %v1726
    %v1728 = vcombine.low %v1648, %v1649
    %v1730 = vunpack.c.l.s4 1983009808
    %v1731 = vunpack.c.0.s8 %v1730
    %v1732 = vlaneseq
    %v1733 = vshrl.u32 %v1732, 7
    %v1734 = vsub.s32 %v1731, %v1733
    %v1735 = vrot.slane %v1728, %v1734
    %v1736 = vcombine.low %v1640, %v1647
    %v1738 = vunpack.c.l.s4 1983009808
    %v1739 = vunpack.c.0.s8 %v1738
    %v1740 = vlaneseq
    %v1741 = vshrl.u32 %v1740, 7
    %v1742 = vsub.s32 %v1739, %v1741
    %v1743 = vrot.slane %v1736, %v1742
    %v1744 = vcombine.low %v1650, %v1651
    %v1746 = vunpack.c.l.s4 1983009808
    %v1747 = vunpack.c.0.s8 %v1746
    %v1748 = vlaneseq
    %v1749 = vshrl.u32 %v1748, 7
    %v1750 = vsub.s32 %v1747, %v1749
    %v1751 = vrot.slane %v1744, %v1750
    %v1752 = vcombine.low %v1727, %v1735
    %v1753 = vcombine.high %v1727, %v1735
    %v1755 = vunpack.c.l.s4 1934713408
    %v1756 = vunpack.c.0.s8 %v1755
    %v1757 = vlaneseq
    %v1758 = vshrl.u32 %v1757, 7
    %v1759 = vsub.s32 %v1756, %v1758
    %v1760 = vrot.slane %v1752, %v1759
    %v1762 = vunpack.c.l.s4 1934713408
    %v1763 = vunpack.c.0.s8 %v1762
    %v1764 = vlaneseq
    %v1765 = vshrl.u32 %v1764, 7
    %v1766 = vsub.s32 %v1763, %v1765
    %v1767 = vrot.slane %v1753, %v1766
    %v1768 = vcombine.low %v1743, %v1751
    %v1769 = vcombine.high %v1743, %v1751
    %v1771 = vunpack.c.l.s4 1934713408
    %v1772 = vunpack.c.0.s8 %v1771
    %v1773 = vlaneseq
    %v1774 = vshrl.u32 %v1773, 7
    %v1775 = vsub.s32 %v1772, %v1774
    %v1776 = vrot.slane %v1768, %v1775
    %v1778 = vunpack.c.l.s4 1934713408
    %v1779 = vunpack.c.0.s8 %v1778
    %v1780 = vlaneseq
    %v1781 = vshrl.u32 %v1780, 7
    %v1782 = vsub.s32 %v1779, %v1781
    %v1783 = vrot.slane %v1769, %v1782
    %v1784 = vcombine.low %v1760, %v1776
    %v1785 = vcombine.high %v1760, %v1776
    %v1786 = vcombine.low %v1767, %v1783
    %v1787 = vcombine.high %v1767, %v1783
    %1790 = vrot.lane.b32.xlu0 %v1717, 8
    %v1791 = vpop.permute.xlu0 %1790
    %1792 = vrot.lane.b32.xlu0 %v1785, 8
    %v1793 = vpop.permute.xlu0 %1792
    %1798 = vrot.lane.b32.xlu0 %v1718, 16
    %v1799 = vpop.permute.xlu0 %1798
    %1800 = vrot.lane.b32.xlu0 %v1786, 16
    %v1801 = vpop.permute.xlu0 %1800
    %1806 = vrot.lane.b32.xlu0 %v1719, 24
    %v1807 = vpop.permute.xlu0 %1806
    %1808 = vrot.lane.b32.xlu0 %v1787, 24
    %v1809 = vpop.permute.xlu0 %1808
    %v1812 = vsel %vm1144, %v1716, %v1791
    %v1813 = vsel %vm1144, %v1784, %v1793
    %v1814 = vsel %vm30, %v1812, %v1799
    %v1815 = vsel %vm30, %v1813, %v1801
    %vm1816 = vcmask 195584
    %v1817 = vsel %vm1816, %v1814, %v1807
    %v1818 = vsel %vm1816, %v1815, %v1809
    %v1819 = vadd.f32 %v104, %v1817
    %v1820 = vadd.f32 %v109, %v1818
    %v1821 = vsel %vm135, %v1819, 0.0
    %1822 = vadd.xlane.f32.xlu0 %v1821
    %v1823 = vpop.xlane.xlu0 %1822
    %v1824 = vsel %vm135, %v1820, 0.0
    %1825 = vadd.xlane.f32.xlu0 %v1824
    %v1826 = vpop.xlane.xlu0 %1825
    %v1827 = vmul.f32 %v1823, %v142
    %v1828 = vmul.f32 %v1826, %v142
    %v1829 = vsub.f32 %v1819, %v1827
    %v1830 = vsub.f32 %v1820, %v1828
    %v1831 = vmul.f32 %v1829, %v1829
    %v1832 = vmul.f32 %v1830, %v1830
    %v1833 = vsel %vm135, %v1831, 0.0
    %1834 = vadd.xlane.f32.xlu0 %v1833
    %v1835 = vpop.xlane.xlu0 %1834
    %v1836 = vsel %vm135, %v1832, 0.0
    %1837 = vadd.xlane.f32.xlu0 %v1836
    %v1838 = vpop.xlane.xlu0 %1837
    %v1839 = vmul.f32 %v1835, %v142
    %v1840 = vmul.f32 %v1838, %v142
    %v1841 = vadd.f32 %v1839, 1e-05
    %v1842 = vadd.f32 %v1840, 1e-05
    %v1843 = vrsqrt.pop %v1841
    %v1844 = vrsqrt.pop %v1842
    %v1845 = vmul.f32 %v1829, %v1843
    %v1846 = vmul.f32 %v1830, %v1844
    %v1847 = vlaneseq
    %v1848 = vshrl.u32 %v1847, 7
    %v1849 = vsub.s32 0, %v1848
    %v1850 = vrot.slane %v119, %v1849
    %v1851 = vmul.f32 %v1845, %v1850
    %v1852 = vmul.f32 %v1846, %v1850
    %v1853 = vlaneseq
    %v1854 = vshrl.u32 %v1853, 7
    %v1855 = vsub.s32 0, %v1854
    %v1856 = vrot.slane %v120, %v1855
    %v1857 = vadd.f32 %v1851, %v1856
    %v1858 = vadd.f32 %v1852, %v1856
    %v1859 = vlaneseq
    %v1860 = vshrl.u32 %v1859, 7
    %v1861 = vsub.s32 0, %v1860
    %v1862 = vrot.slane %v125, %v1861
    %v1864 = vsel %vm135, %v1857, 0
    %v1867 = vsel %vm135, %v1858, 0
    %1869 = vmatprep.subr.mxu0 0.0
    %1870 = vmatpush1.msra.mxu0 %v121
    %1871 = vmatprep.subr.mxu0 0.0
    %1872 = vmatpush1.msra.mxu0 %v122
    %1873 = vmatprep.subr.mxu0 0.0
    %1874 = vmatpush1.msra.mxu0 %v123
    %1875 = vmatprep.subr.mxu0 0.0
    %1876 = vmatpush1.msra.mxu0 %v124
    %1877 = vmatprep.subr.mxu0 0.0
    %1878 = vmatpush1.msra.mxu0 0.0
    %1879 = vmatprep.subr.mxu0 0.0
    %1880 = vmatpush1.msra.mxu0 0.0
    %1881 = vmatprep.subr.mxu0 0.0
    %1882 = vmatpush1.msra.mxu0 0.0
    %1883 = vmatprep.subr.mxu0 0.0
    %1884 = vmatpush1.msra.mxu0 0.0
    %1885 = vmatprep.subr.mxu0 0.0
    %1886 = vmatpush1.msra.mxu0 0.0
    %1887 = vmatprep.subr.mxu0 0.0
    %1888 = vmatpush1.msra.mxu0 0.0
    %1889 = vmatprep.subr.mxu0 0.0
    %1890 = vmatpush1.msra.mxu0 0.0
    %1891 = vmatprep.subr.mxu0 0.0
    %1892 = vmatpush1.msra.mxu0 0.0
    %1893 = vmatprep.subr.mxu0 0.0
    %1894 = vmatpush1.msra.mxu0 0.0
    %1895 = vmatprep.subr.mxu0 0.0
    %1896 = vmatpush1.msra.mxu0 0.0
    %1897 = vmatprep.subr.mxu0 0.0
    %1898 = vmatpush1.msra.mxu0 0.0
    %1899 = vmatprep.subr.mxu0 0.0
    %1900 = vmatpush1.msra.mxu0 0.0
    %1901 = vmatprep.subr.mxu0 0.0
    %1902 = vmatpush1.msra.mxu0 0.0
    %1903 = vmatprep.subr.mxu0 0.0
    %1904 = vmatpush1.msra.mxu0 0.0
    %1905 = vmatprep.subr.mxu0 0.0
    %1906 = vmatpush1.msra.mxu0 0.0
    %1907 = vmatprep.subr.mxu0 0.0
    %1908 = vmatpush1.msra.mxu0 0.0
    %1909 = vmatprep.subr.mxu0 0.0
    %1910 = vmatpush1.msra.mxu0 0.0
    %1911 = vmatprep.subr.mxu0 0.0
    %1912 = vmatpush1.msra.mxu0 0.0
    %1913 = vmatprep.subr.mxu0 0.0
    %1914 = vmatpush1.msra.mxu0 0.0
    %1915 = vmatprep.subr.mxu0 0.0
    %1916 = vmatpush1.msra.mxu0 0.0
    %1917 = vmatprep.subr.mxu0 0.0
    %1918 = vmatpush1.msra.mxu0 0.0
    %1919 = vmatprep.subr.mxu0 0.0
    %1920 = vmatpush1.msra.mxu0 0.0
    %1921 = vmatprep.subr.mxu0 0.0
    %1922 = vmatpush1.msra.mxu0 0.0
    %1923 = vmatprep.subr.mxu0 0.0
    %1924 = vmatpush1.msra.mxu0 0.0
    %1925 = vmatprep.subr.mxu0 0.0
    %1926 = vmatpush1.msra.mxu0 0.0
    %1927 = vmatprep.subr.mxu0 0.0
    %1928 = vmatpush1.msra.mxu0 0.0
    %1929 = vmatprep.subr.mxu0 0.0
    %1930 = vmatpush1.msra.mxu0 0.0
    %1931 = vmatprep.subr.mxu0 0.0
    %1932 = vmatpush1.msra.mxu0 0.0
    %1933 = vmatprep.mubr.f32.mxu0 0.0
    %1934 = vmatmul.mubr.f32.gmra.mrb[0].mxu0 %v1864
    %v1935 = vpop.f32.mrb[0].mxu0
    %v1936 = vadd.f32 %v1862, %v1935
    %v1937 = vpop.f32.mrb[0].mxu0
    %1938 = vmatprep.mubr.f32.mxu0 0.0
    %1939 = vmatmul.mubr.f32.gmra.mrb[0].mxu0 %v1867
    %v1940 = vpop.f32.mrb[0].mxu0
    %v1941 = vadd.f32 %v1862, %v1940
    %v1942 = vpop.f32.mrb[0].mxu0
    %1943 = vdwg.mxu0
    %v1944 = vmax.f32 %v1936, 0.0
    %v1945 = vmax.f32 %v1941, 0.0
    %v1947 = vsel %vm1298, %v1944, 0
    %v1950 = vsel %vm1298, %v1945, 0
    %1952 = vmatprep.subr.mxu0 0.0
    %1953 = vmatpush1.msra.mxu0 %v126
    %1954 = vmatprep.subr.mxu0 0.0
    %1955 = vmatpush1.msra.mxu0 %v127
    %1956 = vmatprep.subr.mxu0 0.0
    %1957 = vmatpush1.msra.mxu0 %v128
    %1958 = vmatprep.subr.mxu0 0.0
    %1959 = vmatpush1.msra.mxu0 %v129
    %1960 = vmatprep.subr.mxu0 0.0
    %1961 = vmatpush1.msra.mxu0 %v130
    %1962 = vmatprep.subr.mxu0 0.0
    %1963 = vmatpush1.msra.mxu0 %v131
    %1964 = vmatprep.subr.mxu0 0.0
    %1965 = vmatpush1.msra.mxu0 %v132
    %1966 = vmatprep.subr.mxu0 0.0
    %1967 = vmatpush1.msra.mxu0 %v133
    %1968 = vmatprep.subr.mxu0 0.0
    %1969 = vmatpush1.msra.mxu0 0.0
    %1970 = vmatprep.subr.mxu0 0.0
    %1971 = vmatpush1.msra.mxu0 0.0
    %1972 = vmatprep.subr.mxu0 0.0
    %1973 = vmatpush1.msra.mxu0 0.0
    %1974 = vmatprep.subr.mxu0 0.0
    %1975 = vmatpush1.msra.mxu0 0.0
    %1976 = vmatprep.subr.mxu0 0.0
    %1977 = vmatpush1.msra.mxu0 0.0
    %1978 = vmatprep.subr.mxu0 0.0
    %1979 = vmatpush1.msra.mxu0 0.0
    %1980 = vmatprep.subr.mxu0 0.0
    %1981 = vmatpush1.msra.mxu0 0.0
    %1982 = vmatprep.subr.mxu0 0.0
    %1983 = vmatpush1.msra.mxu0 0.0
    %1984 = vmatprep.subr.mxu0 0.0
    %1985 = vmatpush1.msra.mxu0 0.0
    %1986 = vmatprep.subr.mxu0 0.0
    %1987 = vmatpush1.msra.mxu0 0.0
    %1988 = vmatprep.subr.mxu0 0.0
    %1989 = vmatpush1.msra.mxu0 0.0
    %1990 = vmatprep.subr.mxu0 0.0
    %1991 = vmatpush1.msra.mxu0 0.0
    %1992 = vmatprep.subr.mxu0 0.0
    %1993 = vmatpush1.msra.mxu0 0.0
    %1994 = vmatprep.subr.mxu0 0.0
    %1995 = vmatpush1.msra.mxu0 0.0
    %1996 = vmatprep.subr.mxu0 0.0
    %1997 = vmatpush1.msra.mxu0 0.0
    %1998 = vmatprep.subr.mxu0 0.0
    %1999 = vmatpush1.msra.mxu0 0.0
    %2000 = vmatprep.subr.mxu0 0.0
    %2001 = vmatpush1.msra.mxu0 0.0
    %2002 = vmatprep.subr.mxu0 0.0
    %2003 = vmatpush1.msra.mxu0 0.0
    %2004 = vmatprep.subr.mxu0 0.0
    %2005 = vmatpush1.msra.mxu0 0.0
    %2006 = vmatprep.subr.mxu0 0.0
    %2007 = vmatpush1.msra.mxu0 0.0
    %2008 = vmatprep.subr.mxu0 0.0
    %2009 = vmatpush1.msra.mxu0 0.0
    %2010 = vmatprep.subr.mxu0 0.0
    %2011 = vmatpush1.msra.mxu0 0.0
    %2012 = vmatprep.subr.mxu0 0.0
    %2013 = vmatpush1.msra.mxu0 0.0
    %2014 = vmatprep.subr.mxu0 0.0
    %2015 = vmatpush1.msra.mxu0 0.0
    %2016 = vmatprep.mubr.f32.mxu0 0.0
    %2017 = vmatmul.mubr.f32.gmra.mrb[0].mxu0 %v1947
    %v2018 = vpop.f32.mrb[0].mxu0
    %v2019 = vadd.f32 0.0, %v2018
    %v2020 = vpop.f32.mrb[0].mxu0
    %2021 = vmatprep.mubr.f32.mxu0 0.0
    %2022 = vmatmul.mubr.f32.gmra.mrb[0].mxu0 %v1950
    %v2023 = vpop.f32.mrb[0].mxu0
    %v2024 = vadd.f32 0.0, %v2023
    %v2025 = vpop.f32.mrb[0].mxu0
    %2026 = vdwg.mxu0
    %v2027 = vadd.f32 %v1819, %v2019
    %v2028 = vadd.f32 %v1820, %v2024
    %v2029 = vlaneseq
    %v2030 = vshrl.u32 %v2029, 7
    %v2031 = vsub.s32 0, %v2030
    %v2032 = vrot.slane %v134, %v2031
    %v2033 = vadd.f32 %v2027, %v2032
    %v2034 = vadd.f32 %v2028, %v2032
    %v2035 = vld [vmem:[%s1 + $0x158] sm:$0x1]
    %v2036 = vld [vmem:[%s1 + $0x159] sm:$0x1]
    %v2037 = vld [vmem:[%s1 + $0x90] sm:$0xff]
    %v2038 = vld [vmem:[%s1 + $0x98] sm:$0xff]
    %v2039 = vld [vmem:[%s1 + $0xa0] sm:$0xff]
    %v2040 = vld [vmem:[%s1 + $0xa8] sm:$0xff]
    %v2041 = vld [vmem:[%s1 + $0x15a] sm:$0x1]
    %v2042 = vld [vmem:[%s1 + $0x15b] sm:$0x1]
    %v2043 = vld [vmem:[%s1 + $0x15c] sm:$0x1]
    %v2044 = vld [vmem:[%s1 + $0xb0] sm:$0xff]
    %v2045 = vld [vmem:[%s1 + $0xb8] sm:$0xff]
    %v2046 = vld [vmem:[%s1 + $0xc0] sm:$0xff]
    %v2047 = vld [vmem:[%s1 + $0xc8] sm:$0xff]
    %v2048 = vld [vmem:[%s1 + $0x15d] sm:$0x1]
    %v2049 = vld [vmem:[%s1 + $0xd0] sm:$0xff]
    %v2050 = vld [vmem:[%s1 + $0xd8] sm:$0xff]
    %v2051 = vld [vmem:[%s1 + $0xe0] sm:$0xff]
    %v2052 = vld [vmem:[%s1 + $0xe8] sm:$0xff]
    %v2053 = vld [vmem:[%s1 + $0xf0] sm:$0xff]
    %v2054 = vld [vmem:[%s1 + $0xf8] sm:$0xff]
    %v2055 = vld [vmem:[%s1 + $0x100] sm:$0xff]
    %v2056 = vld [vmem:[%s1 + $0x108] sm:$0xff]
    %v2057 = vld [vmem:[%s1 + $0x15e] sm:$0x1]
    %v2058 = vsel %vm135, %v2033, 0.0
    %2059 = vadd.xlane.f32.xlu0 %v2058
    %v2060 = vpop.xlane.xlu0 %2059
    %v2061 = vsel %vm135, %v2034, 0.0
    %2062 = vadd.xlane.f32.xlu0 %v2061
    %v2063 = vpop.xlane.xlu0 %2062
    %v2064 = vmul.f32 %v2060, %v142
    %v2065 = vmul.f32 %v2063, %v142
    %v2066 = vsub.f32 %v2033, %v2064
    %v2067 = vsub.f32 %v2034, %v2065
    %v2068 = vmul.f32 %v2066, %v2066
    %v2069 = vmul.f32 %v2067, %v2067
    %v2070 = vsel %vm135, %v2068, 0.0
    %2071 = vadd.xlane.f32.xlu0 %v2070
    %v2072 = vpop.xlane.xlu0 %2071
    %v2073 = vsel %vm135, %v2069, 0.0
    %2074 = vadd.xlane.f32.xlu0 %v2073
    %v2075 = vpop.xlane.xlu0 %2074
    %v2076 = vmul.f32 %v2072, %v142
    %v2077 = vmul.f32 %v2075, %v142
    %v2078 = vadd.f32 %v2076, 1e-05
    %v2079 = vadd.f32 %v2077, 1e-05
    %v2080 = vrsqrt.pop %v2078
    %v2081 = vrsqrt.pop %v2079
    %v2082 = vmul.f32 %v2066, %v2080
    %v2083 = vmul.f32 %v2067, %v2081
    %v2084 = vlaneseq
    %v2085 = vshrl.u32 %v2084, 7
    %v2086 = vsub.s32 0, %v2085
    %v2087 = vrot.slane %v2035, %v2086
    %v2088 = vmul.f32 %v2082, %v2087
    %v2089 = vmul.f32 %v2083, %v2087
    %v2090 = vlaneseq
    %v2091 = vshrl.u32 %v2090, 7
    %v2092 = vsub.s32 0, %v2091
    %v2093 = vrot.slane %v2036, %v2092
    %v2094 = vadd.f32 %v2088, %v2093
    %v2095 = vadd.f32 %v2089, %v2093
    %v2096 = vlaneseq
    %v2097 = vshrl.u32 %v2096, 7
    %v2098 = vsub.s32 0, %v2097
    %v2099 = vrot.slane %v2041, %v2098
    %v2101 = vsel %vm135, %v2094, 0
    %v2104 = vsel %vm135, %v2095, 0
    %2106 = vmatprep.subr.mxu0 0.0
    %2107 = vmatpush1.msra.mxu0 %v2037
    %2108 = vmatprep.subr.mxu0 0.0
    %2109 = vmatpush1.msra.mxu0 %v2038
    %2110 = vmatprep.subr.mxu0 0.0
    %2111 = vmatpush1.msra.mxu0 %v2039
    %2112 = vmatprep.subr.mxu0 0.0
    %2113 = vmatpush1.msra.mxu0 %v2040
    %2114 = vmatprep.subr.mxu0 0.0
    %2115 = vmatpush1.msra.mxu0 0.0
    %2116 = vmatprep.subr.mxu0 0.0
    %2117 = vmatpush1.msra.mxu0 0.0
    %2118 = vmatprep.subr.mxu0 0.0
    %2119 = vmatpush1.msra.mxu0 0.0
    %2120 = vmatprep.subr.mxu0 0.0
    %2121 = vmatpush1.msra.mxu0 0.0
    %2122 = vmatprep.subr.mxu0 0.0
    %2123 = vmatpush1.msra.mxu0 0.0
    %2124 = vmatprep.subr.mxu0 0.0
    %2125 = vmatpush1.msra.mxu0 0.0
    %2126 = vmatprep.subr.mxu0 0.0
    %2127 = vmatpush1.msra.mxu0 0.0
    %2128 = vmatprep.subr.mxu0 0.0
    %2129 = vmatpush1.msra.mxu0 0.0
    %2130 = vmatprep.subr.mxu0 0.0
    %2131 = vmatpush1.msra.mxu0 0.0
    %2132 = vmatprep.subr.mxu0 0.0
    %2133 = vmatpush1.msra.mxu0 0.0
    %2134 = vmatprep.subr.mxu0 0.0
    %2135 = vmatpush1.msra.mxu0 0.0
    %2136 = vmatprep.subr.mxu0 0.0
    %2137 = vmatpush1.msra.mxu0 0.0
    %2138 = vmatprep.subr.mxu0 0.0
    %2139 = vmatpush1.msra.mxu0 0.0
    %2140 = vmatprep.subr.mxu0 0.0
    %2141 = vmatpush1.msra.mxu0 0.0
    %2142 = vmatprep.subr.mxu0 0.0
    %2143 = vmatpush1.msra.mxu0 0.0
    %2144 = vmatprep.subr.mxu0 0.0
    %2145 = vmatpush1.msra.mxu0 0.0
    %2146 = vmatprep.subr.mxu0 0.0
    %2147 = vmatpush1.msra.mxu0 0.0
    %2148 = vmatprep.subr.mxu0 0.0
    %2149 = vmatpush1.msra.mxu0 0.0
    %2150 = vmatprep.subr.mxu0 0.0
    %2151 = vmatpush1.msra.mxu0 0.0
    %2152 = vmatprep.subr.mxu0 0.0
    %2153 = vmatpush1.msra.mxu0 0.0
    %2154 = vmatprep.subr.mxu0 0.0
    %2155 = vmatpush1.msra.mxu0 0.0
    %2156 = vmatprep.subr.mxu0 0.0
    %2157 = vmatpush1.msra.mxu0 0.0
    %2158 = vmatprep.subr.mxu0 0.0
    %2159 = vmatpush1.msra.mxu0 0.0
    %2160 = vmatprep.subr.mxu0 0.0
    %2161 = vmatpush1.msra.mxu0 0.0
    %2162 = vmatprep.subr.mxu0 0.0
    %2163 = vmatpush1.msra.mxu0 0.0
    %2164 = vmatprep.subr.mxu0 0.0
    %2165 = vmatpush1.msra.mxu0 0.0
    %2166 = vmatprep.subr.mxu0 0.0
    %2167 = vmatpush1.msra.mxu0 0.0
    %2168 = vmatprep.subr.mxu0 0.0
    %2169 = vmatpush1.msra.mxu0 0.0
    %2170 = vmatprep.mubr.f32.mxu0 0.0
    %2171 = vmatmul.mubr.f32.gmra.mrb[0].mxu0 %v2101
    %v2172 = vpop.f32.mrb[0].mxu0
    %v2173 = vadd.f32 %v2099, %v2172
    %v2174 = vpop.f32.mrb[0].mxu0
    %2175 = vmatprep.mubr.f32.mxu0 0.0
    %2176 = vmatmul.mubr.f32.gmra.mrb[0].mxu0 %v2104
    %v2177 = vpop.f32.mrb[0].mxu0
    %v2178 = vadd.f32 %v2099, %v2177
    %v2179 = vpop.f32.mrb[0].mxu0
    %2180 = vdwg.mxu0
    %2183 = vrot.lane.b32.xlu0 %v2173, 120
    %v2184 = vpop.permute.xlu0 %2183
    %2185 = vrot.lane.b32.xlu0 %v2178, 120
    %v2186 = vpop.permute.xlu0 %2185
    %2189 = vrot.lane.b32.xlu0 %v2173, 112
    %v2190 = vpop.permute.xlu0 %2189
    %2191 = vrot.lane.b32.xlu0 %v2178, 112
    %v2192 = vpop.permute.xlu0 %2191
    %2195 = vrot.lane.b32.xlu0 %v2173, 104
    %v2196 = vpop.permute.xlu0 %2195
    %2197 = vrot.lane.b32.xlu0 %v2178, 104
    %v2198 = vpop.permute.xlu0 %2197
    %2201 = vrot.lane.b32.xlu0 %v2173, 96
    %v2202 = vpop.permute.xlu0 %2201
    %2203 = vrot.lane.b32.xlu0 %v2178, 96
    %v2204 = vpop.permute.xlu0 %2203
    %2207 = vrot.lane.b32.xlu0 %v2173, 88
    %v2208 = vpop.permute.xlu0 %2207
    %2209 = vrot.lane.b32.xlu0 %v2178, 88
    %v2210 = vpop.permute.xlu0 %2209
    %2213 = vrot.lane.b32.xlu0 %v2173, 80
    %v2214 = vpop.permute.xlu0 %2213
    %2215 = vrot.lane.b32.xlu0 %v2178, 80
    %v2216 = vpop.permute.xlu0 %2215
    %2219 = vrot.lane.b32.xlu0 %v2173, 72
    %v2220 = vpop.permute.xlu0 %2219
    %2221 = vrot.lane.b32.xlu0 %v2178, 72
    %v2222 = vpop.permute.xlu0 %2221
    %2225 = vrot.lane.b32.xlu0 %v2173, 64
    %v2226 = vpop.permute.xlu0 %2225
    %2227 = vrot.lane.b32.xlu0 %v2178, 64
    %v2228 = vpop.permute.xlu0 %2227
    %2231 = vrot.lane.b32.xlu0 %v2173, 56
    %v2232 = vpop.permute.xlu0 %2231
    %2233 = vrot.lane.b32.xlu0 %v2178, 56
    %v2234 = vpop.permute.xlu0 %2233
    %2237 = vrot.lane.b32.xlu0 %v2173, 48
    %v2238 = vpop.permute.xlu0 %2237
    %2239 = vrot.lane.b32.xlu0 %v2178, 48
    %v2240 = vpop.permute.xlu0 %2239
    %2243 = vrot.lane.b32.xlu0 %v2173, 40
    %v2244 = vpop.permute.xlu0 %2243
    %2245 = vrot.lane.b32.xlu0 %v2178, 40
    %v2246 = vpop.permute.xlu0 %2245
    %v2249 = vcombine.low %v2173, %v2190
    %v2250 = vcombine.high %v2173, %v2190
    %v2252 = vunpack.c.l.s4 1983009808
    %v2253 = vunpack.c.0.s8 %v2252
    %v2254 = vlaneseq
    %v2255 = vshrl.u32 %v2254, 7
    %v2256 = vsub.s32 %v2253, %v2255
    %v2257 = vrot.slane %v2249, %v2256
    %v2259 = vunpack.c.l.s4 1983009808
    %v2260 = vunpack.c.0.s8 %v2259
    %v2261 = vlaneseq
    %v2262 = vshrl.u32 %v2261, 7
    %v2263 = vsub.s32 %v2260, %v2262
    %v2264 = vrot.slane %v2250, %v2263
    %v2265 = vcombine.low %v2184, %v2196
    %v2266 = vcombine.high %v2184, %v2196
    %v2268 = vunpack.c.l.s4 1983009808
    %v2269 = vunpack.c.0.s8 %v2268
    %v2270 = vlaneseq
    %v2271 = vshrl.u32 %v2270, 7
    %v2272 = vsub.s32 %v2269, %v2271
    %v2273 = vrot.slane %v2265, %v2272
    %v2275 = vunpack.c.l.s4 1983009808
    %v2276 = vunpack.c.0.s8 %v2275
    %v2277 = vlaneseq
    %v2278 = vshrl.u32 %v2277, 7
    %v2279 = vsub.s32 %v2276, %v2278
    %v2280 = vrot.slane %v2266, %v2279
    %v2281 = vcombine.low %v2202, %v2214
    %v2282 = vcombine.high %v2202, %v2214
    %v2284 = vunpack.c.l.s4 1983009808
    %v2285 = vunpack.c.0.s8 %v2284
    %v2286 = vlaneseq
    %v2287 = vshrl.u32 %v2286, 7
    %v2288 = vsub.s32 %v2285, %v2287
    %v2289 = vrot.slane %v2281, %v2288
    %v2291 = vunpack.c.l.s4 1983009808
    %v2292 = vunpack.c.0.s8 %v2291
    %v2293 = vlaneseq
    %v2294 = vshrl.u32 %v2293, 7
    %v2295 = vsub.s32 %v2292, %v2294
    %v2296 = vrot.slane %v2282, %v2295
    %v2297 = vcombine.low %v2208, %v2220
    %v2298 = vcombine.high %v2208, %v2220
    %v2300 = vunpack.c.l.s4 1983009808
    %v2301 = vunpack.c.0.s8 %v2300
    %v2302 = vlaneseq
    %v2303 = vshrl.u32 %v2302, 7
    %v2304 = vsub.s32 %v2301, %v2303
    %v2305 = vrot.slane %v2297, %v2304
    %v2307 = vunpack.c.l.s4 1983009808
    %v2308 = vunpack.c.0.s8 %v2307
    %v2309 = vlaneseq
    %v2310 = vshrl.u32 %v2309, 7
    %v2311 = vsub.s32 %v2308, %v2310
    %v2312 = vrot.slane %v2298, %v2311
    %v2313 = vcombine.low %v2257, %v2273
    %v2314 = vcombine.high %v2257, %v2273
    %v2316 = vunpack.c.l.s4 1934713408
    %v2317 = vunpack.c.0.s8 %v2316
    %v2318 = vlaneseq
    %v2319 = vshrl.u32 %v2318, 7
    %v2320 = vsub.s32 %v2317, %v2319
    %v2321 = vrot.slane %v2313, %v2320
    %v2323 = vunpack.c.l.s4 1934713408
    %v2324 = vunpack.c.0.s8 %v2323
    %v2325 = vlaneseq
    %v2326 = vshrl.u32 %v2325, 7
    %v2327 = vsub.s32 %v2324, %v2326
    %v2328 = vrot.slane %v2314, %v2327
    %v2329 = vcombine.low %v2264, %v2280
    %v2330 = vcombine.high %v2264, %v2280
    %v2332 = vunpack.c.l.s4 1934713408
    %v2333 = vunpack.c.0.s8 %v2332
    %v2334 = vlaneseq
    %v2335 = vshrl.u32 %v2334, 7
    %v2336 = vsub.s32 %v2333, %v2335
    %v2337 = vrot.slane %v2329, %v2336
    %v2339 = vunpack.c.l.s4 1934713408
    %v2340 = vunpack.c.0.s8 %v2339
    %v2341 = vlaneseq
    %v2342 = vshrl.u32 %v2341, 7
    %v2343 = vsub.s32 %v2340, %v2342
    %v2344 = vrot.slane %v2330, %v2343
    %v2345 = vcombine.low %v2289, %v2305
    %v2346 = vcombine.high %v2289, %v2305
    %v2348 = vunpack.c.l.s4 1934713408
    %v2349 = vunpack.c.0.s8 %v2348
    %v2350 = vlaneseq
    %v2351 = vshrl.u32 %v2350, 7
    %v2352 = vsub.s32 %v2349, %v2351
    %v2353 = vrot.slane %v2345, %v2352
    %v2355 = vunpack.c.l.s4 1934713408
    %v2356 = vunpack.c.0.s8 %v2355
    %v2357 = vlaneseq
    %v2358 = vshrl.u32 %v2357, 7
    %v2359 = vsub.s32 %v2356, %v2358
    %v2360 = vrot.slane %v2346, %v2359
    %v2361 = vcombine.low %v2296, %v2312
    %v2362 = vcombine.high %v2296, %v2312
    %v2364 = vunpack.c.l.s4 1934713408
    %v2365 = vunpack.c.0.s8 %v2364
    %v2366 = vlaneseq
    %v2367 = vshrl.u32 %v2366, 7
    %v2368 = vsub.s32 %v2365, %v2367
    %v2369 = vrot.slane %v2361, %v2368
    %v2371 = vunpack.c.l.s4 1934713408
    %v2372 = vunpack.c.0.s8 %v2371
    %v2373 = vlaneseq
    %v2374 = vshrl.u32 %v2373, 7
    %v2375 = vsub.s32 %v2372, %v2374
    %v2376 = vrot.slane %v2362, %v2375
    %v2377 = vcombine.low %v2321, %v2353
    %v2378 = vcombine.high %v2321, %v2353
    %v2379 = vcombine.low %v2328, %v2360
    %v2380 = vcombine.high %v2328, %v2360
    %v2381 = vcombine.low %v2337, %v2369
    %v2382 = vcombine.high %v2337, %v2369
    %v2383 = vcombine.low %v2344, %v2376
    %v2384 = vcombine.high %v2344, %v2376
    %v2385 = vcombine.low %v2226, %v2238
    %v2386 = vcombine.high %v2226, %v2238
    %v2388 = vunpack.c.l.s4 1983009808
    %v2389 = vunpack.c.0.s8 %v2388
    %v2390 = vlaneseq
    %v2391 = vshrl.u32 %v2390, 7
    %v2392 = vsub.s32 %v2389, %v2391
    %v2393 = vrot.slane %v2385, %v2392
    %v2395 = vunpack.c.l.s4 1983009808
    %v2396 = vunpack.c.0.s8 %v2395
    %v2397 = vlaneseq
    %v2398 = vshrl.u32 %v2397, 7
    %v2399 = vsub.s32 %v2396, %v2398
    %v2400 = vrot.slane %v2386, %v2399
    %v2401 = vcombine.low %v2232, %v2244
    %v2402 = vcombine.high %v2232, %v2244
    %v2404 = vunpack.c.l.s4 1983009808
    %v2405 = vunpack.c.0.s8 %v2404
    %v2406 = vlaneseq
    %v2407 = vshrl.u32 %v2406, 7
    %v2408 = vsub.s32 %v2405, %v2407
    %v2409 = vrot.slane %v2401, %v2408
    %v2411 = vunpack.c.l.s4 1983009808
    %v2412 = vunpack.c.0.s8 %v2411
    %v2413 = vlaneseq
    %v2414 = vshrl.u32 %v2413, 7
    %v2415 = vsub.s32 %v2412, %v2414
    %v2416 = vrot.slane %v2402, %v2415
    %v2417 = vcombine.low %v2393, %v2409
    %v2418 = vcombine.high %v2393, %v2409
    %v2420 = vunpack.c.l.s4 1934713408
    %v2421 = vunpack.c.0.s8 %v2420
    %v2422 = vlaneseq
    %v2423 = vshrl.u32 %v2422, 7
    %v2424 = vsub.s32 %v2421, %v2423
    %v2425 = vrot.slane %v2417, %v2424
    %v2427 = vunpack.c.l.s4 1934713408
    %v2428 = vunpack.c.0.s8 %v2427
    %v2429 = vlaneseq
    %v2430 = vshrl.u32 %v2429, 7
    %v2431 = vsub.s32 %v2428, %v2430
    %v2432 = vrot.slane %v2418, %v2431
    %v2433 = vcombine.low %v2400, %v2416
    %v2434 = vcombine.high %v2400, %v2416
    %v2436 = vunpack.c.l.s4 1934713408
    %v2437 = vunpack.c.0.s8 %v2436
    %v2438 = vlaneseq
    %v2439 = vshrl.u32 %v2438, 7
    %v2440 = vsub.s32 %v2437, %v2439
    %v2441 = vrot.slane %v2433, %v2440
    %v2443 = vunpack.c.l.s4 1934713408
    %v2444 = vunpack.c.0.s8 %v2443
    %v2445 = vlaneseq
    %v2446 = vshrl.u32 %v2445, 7
    %v2447 = vsub.s32 %v2444, %v2446
    %v2448 = vrot.slane %v2434, %v2447
    %v2449 = vcombine.high %v2425, 0.0
    %v2450 = vcombine.high %v2432, 0.0
    %v2451 = vcombine.high %v2441, 0.0
    %v2452 = vcombine.high %v2448, 0.0
    %v2453 = vcombine.low %v2178, %v2192
    %v2454 = vcombine.high %v2178, %v2192
    %v2456 = vunpack.c.l.s4 1983009808
    %v2457 = vunpack.c.0.s8 %v2456
    %v2458 = vlaneseq
    %v2459 = vshrl.u32 %v2458, 7
    %v2460 = vsub.s32 %v2457, %v2459
    %v2461 = vrot.slane %v2453, %v2460
    %v2463 = vunpack.c.l.s4 1983009808
    %v2464 = vunpack.c.0.s8 %v2463
    %v2465 = vlaneseq
    %v2466 = vshrl.u32 %v2465, 7
    %v2467 = vsub.s32 %v2464, %v2466
    %v2468 = vrot.slane %v2454, %v2467
    %v2469 = vcombine.low %v2186, %v2198
    %v2470 = vcombine.high %v2186, %v2198
    %v2472 = vunpack.c.l.s4 1983009808
    %v2473 = vunpack.c.0.s8 %v2472
    %v2474 = vlaneseq
    %v2475 = vshrl.u32 %v2474, 7
    %v2476 = vsub.s32 %v2473, %v2475
    %v2477 = vrot.slane %v2469, %v2476
    %v2479 = vunpack.c.l.s4 1983009808
    %v2480 = vunpack.c.0.s8 %v2479
    %v2481 = vlaneseq
    %v2482 = vshrl.u32 %v2481, 7
    %v2483 = vsub.s32 %v2480, %v2482
    %v2484 = vrot.slane %v2470, %v2483
    %v2485 = vcombine.low %v2204, %v2216
    %v2486 = vcombine.high %v2204, %v2216
    %v2488 = vunpack.c.l.s4 1983009808
    %v2489 = vunpack.c.0.s8 %v2488
    %v2490 = vlaneseq
    %v2491 = vshrl.u32 %v2490, 7
    %v2492 = vsub.s32 %v2489, %v2491
    %v2493 = vrot.slane %v2485, %v2492
    %v2495 = vunpack.c.l.s4 1983009808
    %v2496 = vunpack.c.0.s8 %v2495
    %v2497 = vlaneseq
    %v2498 = vshrl.u32 %v2497, 7
    %v2499 = vsub.s32 %v2496, %v2498
    %v2500 = vrot.slane %v2486, %v2499
    %v2501 = vcombine.low %v2210, %v2222
    %v2502 = vcombine.high %v2210, %v2222
    %v2504 = vunpack.c.l.s4 1983009808
    %v2505 = vunpack.c.0.s8 %v2504
    %v2506 = vlaneseq
    %v2507 = vshrl.u32 %v2506, 7
    %v2508 = vsub.s32 %v2505, %v2507
    %v2509 = vrot.slane %v2501, %v2508
    %v2511 = vunpack.c.l.s4 1983009808
    %v2512 = vunpack.c.0.s8 %v2511
    %v2513 = vlaneseq
    %v2514 = vshrl.u32 %v2513, 7
    %v2515 = vsub.s32 %v2512, %v2514
    %v2516 = vrot.slane %v2502, %v2515
    %v2517 = vcombine.low %v2461, %v2477
    %v2518 = vcombine.high %v2461, %v2477
    %v2520 = vunpack.c.l.s4 1934713408
    %v2521 = vunpack.c.0.s8 %v2520
    %v2522 = vlaneseq
    %v2523 = vshrl.u32 %v2522, 7
    %v2524 = vsub.s32 %v2521, %v2523
    %v2525 = vrot.slane %v2517, %v2524
    %v2527 = vunpack.c.l.s4 1934713408
    %v2528 = vunpack.c.0.s8 %v2527
    %v2529 = vlaneseq
    %v2530 = vshrl.u32 %v2529, 7
    %v2531 = vsub.s32 %v2528, %v2530
    %v2532 = vrot.slane %v2518, %v2531
    %v2533 = vcombine.low %v2468, %v2484
    %v2534 = vcombine.high %v2468, %v2484
    %v2536 = vunpack.c.l.s4 1934713408
    %v2537 = vunpack.c.0.s8 %v2536
    %v2538 = vlaneseq
    %v2539 = vshrl.u32 %v2538, 7
    %v2540 = vsub.s32 %v2537, %v2539
    %v2541 = vrot.slane %v2533, %v2540
    %v2543 = vunpack.c.l.s4 1934713408
    %v2544 = vunpack.c.0.s8 %v2543
    %v2545 = vlaneseq
    %v2546 = vshrl.u32 %v2545, 7
    %v2547 = vsub.s32 %v2544, %v2546
    %v2548 = vrot.slane %v2534, %v2547
    %v2549 = vcombine.low %v2493, %v2509
    %v2550 = vcombine.high %v2493, %v2509
    %v2552 = vunpack.c.l.s4 1934713408
    %v2553 = vunpack.c.0.s8 %v2552
    %v2554 = vlaneseq
    %v2555 = vshrl.u32 %v2554, 7
    %v2556 = vsub.s32 %v2553, %v2555
    %v2557 = vrot.slane %v2549, %v2556
    %v2559 = vunpack.c.l.s4 1934713408
    %v2560 = vunpack.c.0.s8 %v2559
    %v2561 = vlaneseq
    %v2562 = vshrl.u32 %v2561, 7
    %v2563 = vsub.s32 %v2560, %v2562
    %v2564 = vrot.slane %v2550, %v2563
    %v2565 = vcombine.low %v2500, %v2516
    %v2566 = vcombine.high %v2500, %v2516
    %v2568 = vunpack.c.l.s4 1934713408
    %v2569 = vunpack.c.0.s8 %v2568
    %v2570 = vlaneseq
    %v2571 = vshrl.u32 %v2570, 7
    %v2572 = vsub.s32 %v2569, %v2571
    %v2573 = vrot.slane %v2565, %v2572
    %v2575 = vunpack.c.l.s4 1934713408
    %v2576 = vunpack.c.0.s8 %v2575
    %v2577 = vlaneseq
    %v2578 = vshrl.u32 %v2577, 7
    %v2579 = vsub.s32 %v2576, %v2578
    %v2580 = vrot.slane %v2566, %v2579
    %v2581 = vcombine.low %v2525, %v2557
    %v2582 = vcombine.high %v2525, %v2557
    %v2583 = vcombine.low %v2532, %v2564
    %v2584 = vcombine.high %v2532, %v2564
    %v2585 = vcombine.low %v2541, %v2573
    %v2586 = vcombine.high %v2541, %v2573
    %v2587 = vcombine.low %v2548, %v2580
    %v2588 = vcombine.high %v2548, %v2580
    %v2589 = vcombine.low %v2228, %v2240
    %v2590 = vcombine.high %v2228, %v2240
    %v2592 = vunpack.c.l.s4 1983009808
    %v2593 = vunpack.c.0.s8 %v2592
    %v2594 = vlaneseq
    %v2595 = vshrl.u32 %v2594, 7
    %v2596 = vsub.s32 %v2593, %v2595
    %v2597 = vrot.slane %v2589, %v2596
    %v2599 = vunpack.c.l.s4 1983009808
    %v2600 = vunpack.c.0.s8 %v2599
    %v2601 = vlaneseq
    %v2602 = vshrl.u32 %v2601, 7
    %v2603 = vsub.s32 %v2600, %v2602
    %v2604 = vrot.slane %v2590, %v2603
    %v2605 = vcombine.low %v2234, %v2246
    %v2606 = vcombine.high %v2234, %v2246
    %v2608 = vunpack.c.l.s4 1983009808
    %v2609 = vunpack.c.0.s8 %v2608
    %v2610 = vlaneseq
    %v2611 = vshrl.u32 %v2610, 7
    %v2612 = vsub.s32 %v2609, %v2611
    %v2613 = vrot.slane %v2605, %v2612
    %v2615 = vunpack.c.l.s4 1983009808
    %v2616 = vunpack.c.0.s8 %v2615
    %v2617 = vlaneseq
    %v2618 = vshrl.u32 %v2617, 7
    %v2619 = vsub.s32 %v2616, %v2618
    %v2620 = vrot.slane %v2606, %v2619
    %v2621 = vcombine.low %v2597, %v2613
    %v2622 = vcombine.high %v2597, %v2613
    %v2624 = vunpack.c.l.s4 1934713408
    %v2625 = vunpack.c.0.s8 %v2624
    %v2626 = vlaneseq
    %v2627 = vshrl.u32 %v2626, 7
    %v2628 = vsub.s32 %v2625, %v2627
    %v2629 = vrot.slane %v2621, %v2628
    %v2631 = vunpack.c.l.s4 1934713408
    %v2632 = vunpack.c.0.s8 %v2631
    %v2633 = vlaneseq
    %v2634 = vshrl.u32 %v2633, 7
    %v2635 = vsub.s32 %v2632, %v2634
    %v2636 = vrot.slane %v2622, %v2635
    %v2637 = vcombine.low %v2604, %v2620
    %v2638 = vcombine.high %v2604, %v2620
    %v2640 = vunpack.c.l.s4 1934713408
    %v2641 = vunpack.c.0.s8 %v2640
    %v2642 = vlaneseq
    %v2643 = vshrl.u32 %v2642, 7
    %v2644 = vsub.s32 %v2641, %v2643
    %v2645 = vrot.slane %v2637, %v2644
    %v2647 = vunpack.c.l.s4 1934713408
    %v2648 = vunpack.c.0.s8 %v2647
    %v2649 = vlaneseq
    %v2650 = vshrl.u32 %v2649, 7
    %v2651 = vsub.s32 %v2648, %v2650
    %v2652 = vrot.slane %v2638, %v2651
    %v2653 = vcombine.high %v2629, 0.0
    %v2654 = vcombine.high %v2636, 0.0
    %v2655 = vcombine.high %v2645, 0.0
    %v2656 = vcombine.high %v2652, 0.0
    %v2657 = vcombine.low %v2377, %v2379
    %v2658 = vcombine.high %v2377, %v2379
    %v2660 = vunpack.c.l.s4 1983009808
    %v2661 = vunpack.c.0.s8 %v2660
    %v2662 = vlaneseq
    %v2663 = vshrl.u32 %v2662, 7
    %v2664 = vsub.s32 %v2661, %v2663
    %v2665 = vrot.slane %v2657, %v2664
    %v2667 = vunpack.c.l.s4 1983009808
    %v2668 = vunpack.c.0.s8 %v2667
    %v2669 = vlaneseq
    %v2670 = vshrl.u32 %v2669, 7
    %v2671 = vsub.s32 %v2668, %v2670
    %v2672 = vrot.slane %v2658, %v2671
    %v2673 = vcombine.low %v2378, %v2380
    %v2674 = vcombine.high %v2378, %v2380
    %v2676 = vunpack.c.l.s4 1983009808
    %v2677 = vunpack.c.0.s8 %v2676
    %v2678 = vlaneseq
    %v2679 = vshrl.u32 %v2678, 7
    %v2680 = vsub.s32 %v2677, %v2679
    %v2681 = vrot.slane %v2673, %v2680
    %v2683 = vunpack.c.l.s4 1983009808
    %v2684 = vunpack.c.0.s8 %v2683
    %v2685 = vlaneseq
    %v2686 = vshrl.u32 %v2685, 7
    %v2687 = vsub.s32 %v2684, %v2686
    %v2688 = vrot.slane %v2674, %v2687
    %v2689 = vcombine.low %v2381, %v2383
    %v2690 = vcombine.high %v2381, %v2383
    %v2692 = vunpack.c.l.s4 1983009808
    %v2693 = vunpack.c.0.s8 %v2692
    %v2694 = vlaneseq
    %v2695 = vshrl.u32 %v2694, 7
    %v2696 = vsub.s32 %v2693, %v2695
    %v2697 = vrot.slane %v2689, %v2696
    %v2699 = vunpack.c.l.s4 1983009808
    %v2700 = vunpack.c.0.s8 %v2699
    %v2701 = vlaneseq
    %v2702 = vshrl.u32 %v2701, 7
    %v2703 = vsub.s32 %v2700, %v2702
    %v2704 = vrot.slane %v2690, %v2703
    %v2705 = vcombine.low %v2382, %v2384
    %v2706 = vcombine.high %v2382, %v2384
    %v2708 = vunpack.c.l.s4 1983009808
    %v2709 = vunpack.c.0.s8 %v2708
    %v2710 = vlaneseq
    %v2711 = vshrl.u32 %v2710, 7
    %v2712 = vsub.s32 %v2709, %v2711
    %v2713 = vrot.slane %v2705, %v2712
    %v2715 = vunpack.c.l.s4 1983009808
    %v2716 = vunpack.c.0.s8 %v2715
    %v2717 = vlaneseq
    %v2718 = vshrl.u32 %v2717, 7
    %v2719 = vsub.s32 %v2716, %v2718
    %v2720 = vrot.slane %v2706, %v2719
    %v2721 = vcombine.low %v2665, %v2681
    %v2722 = vcombine.high %v2665, %v2681
    %v2724 = vunpack.c.l.s4 1934713408
    %v2725 = vunpack.c.0.s8 %v2724
    %v2726 = vlaneseq
    %v2727 = vshrl.u32 %v2726, 7
    %v2728 = vsub.s32 %v2725, %v2727
    %v2729 = vrot.slane %v2721, %v2728
    %v2731 = vunpack.c.l.s4 1934713408
    %v2732 = vunpack.c.0.s8 %v2731
    %v2733 = vlaneseq
    %v2734 = vshrl.u32 %v2733, 7
    %v2735 = vsub.s32 %v2732, %v2734
    %v2736 = vrot.slane %v2722, %v2735
    %v2737 = vcombine.low %v2672, %v2688
    %v2738 = vcombine.high %v2672, %v2688
    %v2740 = vunpack.c.l.s4 1934713408
    %v2741 = vunpack.c.0.s8 %v2740
    %v2742 = vlaneseq
    %v2743 = vshrl.u32 %v2742, 7
    %v2744 = vsub.s32 %v2741, %v2743
    %v2745 = vrot.slane %v2737, %v2744
    %v2747 = vunpack.c.l.s4 1934713408
    %v2748 = vunpack.c.0.s8 %v2747
    %v2749 = vlaneseq
    %v2750 = vshrl.u32 %v2749, 7
    %v2751 = vsub.s32 %v2748, %v2750
    %v2752 = vrot.slane %v2738, %v2751
    %v2753 = vcombine.low %v2697, %v2713
    %v2754 = vcombine.high %v2697, %v2713
    %v2756 = vunpack.c.l.s4 1934713408
    %v2757 = vunpack.c.0.s8 %v2756
    %v2758 = vlaneseq
    %v2759 = vshrl.u32 %v2758, 7
    %v2760 = vsub.s32 %v2757, %v2759
    %v2761 = vrot.slane %v2753, %v2760
    %v2763 = vunpack.c.l.s4 1934713408
    %v2764 = vunpack.c.0.s8 %v2763
    %v2765 = vlaneseq
    %v2766 = vshrl.u32 %v2765, 7
    %v2767 = vsub.s32 %v2764, %v2766
    %v2768 = vrot.slane %v2754, %v2767
    %v2769 = vcombine.low %v2704, %v2720
    %v2770 = vcombine.high %v2704, %v2720
    %v2772 = vunpack.c.l.s4 1934713408
    %v2773 = vunpack.c.0.s8 %v2772
    %v2774 = vlaneseq
    %v2775 = vshrl.u32 %v2774, 7
    %v2776 = vsub.s32 %v2773, %v2775
    %v2777 = vrot.slane %v2769, %v2776
    %v2779 = vunpack.c.l.s4 1934713408
    %v2780 = vunpack.c.0.s8 %v2779
    %v2781 = vlaneseq
    %v2782 = vshrl.u32 %v2781, 7
    %v2783 = vsub.s32 %v2780, %v2782
    %v2784 = vrot.slane %v2770, %v2783
    %v2785 = vcombine.low %v2729, %v2761
    %v2786 = vcombine.high %v2729, %v2761
    %v2787 = vcombine.low %v2736, %v2768
    %v2788 = vcombine.high %v2736, %v2768
    %v2789 = vcombine.low %v2745, %v2777
    %v2790 = vcombine.high %v2745, %v2777
    %v2791 = vcombine.low %v2752, %v2784
    %v2792 = vcombine.high %v2752, %v2784
    %v2793 = vcombine.low %v2581, %v2583
    %v2794 = vcombine.high %v2581, %v2583
    %v2796 = vunpack.c.l.s4 1983009808
    %v2797 = vunpack.c.0.s8 %v2796
    %v2798 = vlaneseq
    %v2799 = vshrl.u32 %v2798, 7
    %v2800 = vsub.s32 %v2797, %v2799
    %v2801 = vrot.slane %v2793, %v2800
    %v2803 = vunpack.c.l.s4 1983009808
    %v2804 = vunpack.c.0.s8 %v2803
    %v2805 = vlaneseq
    %v2806 = vshrl.u32 %v2805, 7
    %v2807 = vsub.s32 %v2804, %v2806
    %v2808 = vrot.slane %v2794, %v2807
    %v2809 = vcombine.low %v2582, %v2584
    %v2810 = vcombine.high %v2582, %v2584
    %v2812 = vunpack.c.l.s4 1983009808
    %v2813 = vunpack.c.0.s8 %v2812
    %v2814 = vlaneseq
    %v2815 = vshrl.u32 %v2814, 7
    %v2816 = vsub.s32 %v2813, %v2815
    %v2817 = vrot.slane %v2809, %v2816
    %v2819 = vunpack.c.l.s4 1983009808
    %v2820 = vunpack.c.0.s8 %v2819
    %v2821 = vlaneseq
    %v2822 = vshrl.u32 %v2821, 7
    %v2823 = vsub.s32 %v2820, %v2822
    %v2824 = vrot.slane %v2810, %v2823
    %v2825 = vcombine.low %v2585, %v2587
    %v2826 = vcombine.high %v2585, %v2587
    %v2828 = vunpack.c.l.s4 1983009808
    %v2829 = vunpack.c.0.s8 %v2828
    %v2830 = vlaneseq
    %v2831 = vshrl.u32 %v2830, 7
    %v2832 = vsub.s32 %v2829, %v2831
    %v2833 = vrot.slane %v2825, %v2832
    %v2835 = vunpack.c.l.s4 1983009808
    %v2836 = vunpack.c.0.s8 %v2835
    %v2837 = vlaneseq
    %v2838 = vshrl.u32 %v2837, 7
    %v2839 = vsub.s32 %v2836, %v2838
    %v2840 = vrot.slane %v2826, %v2839
    %v2841 = vcombine.low %v2586, %v2588
    %v2842 = vcombine.high %v2586, %v2588
    %v2844 = vunpack.c.l.s4 1983009808
    %v2845 = vunpack.c.0.s8 %v2844
    %v2846 = vlaneseq
    %v2847 = vshrl.u32 %v2846, 7
    %v2848 = vsub.s32 %v2845, %v2847
    %v2849 = vrot.slane %v2841, %v2848
    %v2851 = vunpack.c.l.s4 1983009808
    %v2852 = vunpack.c.0.s8 %v2851
    %v2853 = vlaneseq
    %v2854 = vshrl.u32 %v2853, 7
    %v2855 = vsub.s32 %v2852, %v2854
    %v2856 = vrot.slane %v2842, %v2855
    %v2857 = vcombine.low %v2801, %v2817
    %v2858 = vcombine.high %v2801, %v2817
    %v2860 = vunpack.c.l.s4 1934713408
    %v2861 = vunpack.c.0.s8 %v2860
    %v2862 = vlaneseq
    %v2863 = vshrl.u32 %v2862, 7
    %v2864 = vsub.s32 %v2861, %v2863
    %v2865 = vrot.slane %v2857, %v2864
    %v2867 = vunpack.c.l.s4 1934713408
    %v2868 = vunpack.c.0.s8 %v2867
    %v2869 = vlaneseq
    %v2870 = vshrl.u32 %v2869, 7
    %v2871 = vsub.s32 %v2868, %v2870
    %v2872 = vrot.slane %v2858, %v2871
    %v2873 = vcombine.low %v2808, %v2824
    %v2874 = vcombine.high %v2808, %v2824
    %v2876 = vunpack.c.l.s4 1934713408
    %v2877 = vunpack.c.0.s8 %v2876
    %v2878 = vlaneseq
    %v2879 = vshrl.u32 %v2878, 7
    %v2880 = vsub.s32 %v2877, %v2879
    %v2881 = vrot.slane %v2873, %v2880
    %v2883 = vunpack.c.l.s4 1934713408
    %v2884 = vunpack.c.0.s8 %v2883
    %v2885 = vlaneseq
    %v2886 = vshrl.u32 %v2885, 7
    %v2887 = vsub.s32 %v2884, %v2886
    %v2888 = vrot.slane %v2874, %v2887
    %v2889 = vcombine.low %v2833, %v2849
    %v2890 = vcombine.high %v2833, %v2849
    %v2892 = vunpack.c.l.s4 1934713408
    %v2893 = vunpack.c.0.s8 %v2892
    %v2894 = vlaneseq
    %v2895 = vshrl.u32 %v2894, 7
    %v2896 = vsub.s32 %v2893, %v2895
    %v2897 = vrot.slane %v2889, %v2896
    %v2899 = vunpack.c.l.s4 1934713408
    %v2900 = vunpack.c.0.s8 %v2899
    %v2901 = vlaneseq
    %v2902 = vshrl.u32 %v2901, 7
    %v2903 = vsub.s32 %v2900, %v2902
    %v2904 = vrot.slane %v2890, %v2903
    %v2905 = vcombine.low %v2840, %v2856
    %v2906 = vcombine.high %v2840, %v2856
    %v2908 = vunpack.c.l.s4 1934713408
    %v2909 = vunpack.c.0.s8 %v2908
    %v2910 = vlaneseq
    %v2911 = vshrl.u32 %v2910, 7
    %v2912 = vsub.s32 %v2909, %v2911
    %v2913 = vrot.slane %v2905, %v2912
    %v2915 = vunpack.c.l.s4 1934713408
    %v2916 = vunpack.c.0.s8 %v2915
    %v2917 = vlaneseq
    %v2918 = vshrl.u32 %v2917, 7
    %v2919 = vsub.s32 %v2916, %v2918
    %v2920 = vrot.slane %v2906, %v2919
    %v2921 = vcombine.low %v2865, %v2897
    %v2922 = vcombine.high %v2865, %v2897
    %v2923 = vcombine.low %v2872, %v2904
    %v2924 = vcombine.high %v2872, %v2904
    %v2925 = vcombine.low %v2881, %v2913
    %v2926 = vcombine.high %v2881, %v2913
    %v2927 = vcombine.low %v2888, %v2920
    %v2928 = vcombine.high %v2888, %v2920
    %v2929 = vcombine.low %v2425, %v2432
    %v2931 = vunpack.c.l.s4 1983009808
    %v2932 = vunpack.c.0.s8 %v2931
    %v2933 = vlaneseq
    %v2934 = vshrl.u32 %v2933, 7
    %v2935 = vsub.s32 %v2932, %v2934
    %v2936 = vrot.slane %v2929, %v2935
    %v2937 = vcombine.low %v2449, %v2450
    %v2939 = vunpack.c.l.s4 1983009808
    %v2940 = vunpack.c.0.s8 %v2939
    %v2941 = vlaneseq
    %v2942 = vshrl.u32 %v2941, 7
    %v2943 = vsub.s32 %v2940, %v2942
    %v2944 = vrot.slane %v2937, %v2943
    %v2945 = vcombine.low %v2441, %v2448
    %v2947 = vunpack.c.l.s4 1983009808
    %v2948 = vunpack.c.0.s8 %v2947
    %v2949 = vlaneseq
    %v2950 = vshrl.u32 %v2949, 7
    %v2951 = vsub.s32 %v2948, %v2950
    %v2952 = vrot.slane %v2945, %v2951
    %v2953 = vcombine.low %v2451, %v2452
    %v2955 = vunpack.c.l.s4 1983009808
    %v2956 = vunpack.c.0.s8 %v2955
    %v2957 = vlaneseq
    %v2958 = vshrl.u32 %v2957, 7
    %v2959 = vsub.s32 %v2956, %v2958
    %v2960 = vrot.slane %v2953, %v2959
    %v2961 = vcombine.low %v2936, %v2944
    %v2962 = vcombine.high %v2936, %v2944
    %v2964 = vunpack.c.l.s4 1934713408
    %v2965 = vunpack.c.0.s8 %v2964
    %v2966 = vlaneseq
    %v2967 = vshrl.u32 %v2966, 7
    %v2968 = vsub.s32 %v2965, %v2967
    %v2969 = vrot.slane %v2961, %v2968
    %v2971 = vunpack.c.l.s4 1934713408
    %v2972 = vunpack.c.0.s8 %v2971
    %v2973 = vlaneseq
    %v2974 = vshrl.u32 %v2973, 7
    %v2975 = vsub.s32 %v2972, %v2974
    %v2976 = vrot.slane %v2962, %v2975
    %v2977 = vcombine.low %v2952, %v2960
    %v2978 = vcombine.high %v2952, %v2960
    %v2980 = vunpack.c.l.s4 1934713408
    %v2981 = vunpack.c.0.s8 %v2980
    %v2982 = vlaneseq
    %v2983 = vshrl.u32 %v2982, 7
    %v2984 = vsub.s32 %v2981, %v2983
    %v2985 = vrot.slane %v2977, %v2984
    %v2987 = vunpack.c.l.s4 1934713408
    %v2988 = vunpack.c.0.s8 %v2987
    %v2989 = vlaneseq
    %v2990 = vshrl.u32 %v2989, 7
    %v2991 = vsub.s32 %v2988, %v2990
    %v2992 = vrot.slane %v2978, %v2991
    %v2993 = vcombine.low %v2969, %v2985
    %v2994 = vcombine.high %v2969, %v2985
    %v2995 = vcombine.low %v2976, %v2992
    %v2996 = vcombine.high %v2976, %v2992
    %v2997 = vcombine.low %v2629, %v2636
    %v2999 = vunpack.c.l.s4 1983009808
    %v3000 = vunpack.c.0.s8 %v2999
    %v3001 = vlaneseq
    %v3002 = vshrl.u32 %v3001, 7
    %v3003 = vsub.s32 %v3000, %v3002
    %v3004 = vrot.slane %v2997, %v3003
    %v3005 = vcombine.low %v2653, %v2654
    %v3007 = vunpack.c.l.s4 1983009808
    %v3008 = vunpack.c.0.s8 %v3007
    %v3009 = vlaneseq
    %v3010 = vshrl.u32 %v3009, 7
    %v3011 = vsub.s32 %v3008, %v3010
    %v3012 = vrot.slane %v3005, %v3011
    %v3013 = vcombine.low %v2645, %v2652
    %v3015 = vunpack.c.l.s4 1983009808
    %v3016 = vunpack.c.0.s8 %v3015
    %v3017 = vlaneseq
    %v3018 = vshrl.u32 %v3017, 7
    %v3019 = vsub.s32 %v3016, %v3018
    %v3020 = vrot.slane %v3013, %v3019
    %v3021 = vcombine.low %v2655, %v2656
    %v3023 = vunpack.c.l.s4 1983009808
    %v3024 = vunpack.c.0.s8 %v3023
    %v3025 = vlaneseq
    %v3026 = vshrl.u32 %v3025, 7
    %v3027 = vsub.s32 %v3024, %v3026
    %v3028 = vrot.slane %v3021, %v3027
    %v3029 = vcombine.low %v3004, %v3012
    %v3030 = vcombine.high %v3004, %v3012
    %v3032 = vunpack.c.l.s4 1934713408
    %v3033 = vunpack.c.0.s8 %v3032
    %v3034 = vlaneseq
    %v3035 = vshrl.u32 %v3034, 7
    %v3036 = vsub.s32 %v3033, %v3035
    %v3037 = vrot.slane %v3029, %v3036
    %v3039 = vunpack.c.l.s4 1934713408
    %v3040 = vunpack.c.0.s8 %v3039
    %v3041 = vlaneseq
    %v3042 = vshrl.u32 %v3041, 7
    %v3043 = vsub.s32 %v3040, %v3042
    %v3044 = vrot.slane %v3030, %v3043
    %v3045 = vcombine.low %v3020, %v3028
    %v3046 = vcombine.high %v3020, %v3028
    %v3048 = vunpack.c.l.s4 1934713408
    %v3049 = vunpack.c.0.s8 %v3048
    %v3050 = vlaneseq
    %v3051 = vshrl.u32 %v3050, 7
    %v3052 = vsub.s32 %v3049, %v3051
    %v3053 = vrot.slane %v3045, %v3052
    %v3055 = vunpack.c.l.s4 1934713408
    %v3056 = vunpack.c.0.s8 %v3055
    %v3057 = vlaneseq
    %v3058 = vshrl.u32 %v3057, 7
    %v3059 = vsub.s32 %v3056, %v3058
    %v3060 = vrot.slane %v3046, %v3059
    %v3061 = vcombine.low %v3037, %v3053
    %v3062 = vcombine.high %v3037, %v3053
    %v3063 = vcombine.low %v3044, %v3060
    %v3064 = vcombine.high %v3044, %v3060
    %v3066 = vsel %vm1144, %v2785, 0
    %v3069 = vsel %vm1144, %v2921, 0
    %v3072 = vsel %vm1144, %v2786, 0
    %v3075 = vsel %vm1144, %v2922, 0
    %v3078 = vsel %vm1144, %v2787, 0
    %v3081 = vsel %vm1144, %v2923, 0
    %v3084 = vsel %vm1144, %v2788, 0
    %v3087 = vsel %vm1144, %v2924, 0
    %v3090 = vsel %vm1144, %v2789, 0
    %v3093 = vsel %vm1144, %v2925, 0
    %v3096 = vsel %vm1144, %v2790, 0
    %v3099 = vsel %vm1144, %v2926, 0
    %v3102 = vsel %vm1144, %v2791, 0
    %v3105 = vsel %vm1144, %v2927, 0
    %v3108 = vsel %vm1144, %v2792, 0
    %v3111 = vsel %vm1144, %v2928, 0
    %3113 = vmatprep.subr.mxu0 0.0
    %3114 = vmatpush1.xpose.msra.mxu0 %v3090
    %3115 = vmatprep.subr.mxu0 0.0
    %3116 = vmatpush1.xpose.msra.mxu0 %v3093
    %3117 = vmatprep.subr.mxu0 0.0
    %3118 = vmatpush1.xpose.msra.mxu0 %v3096
    %3119 = vmatprep.subr.mxu0 0.0
    %3120 = vmatpush1.xpose.msra.mxu0 %v3099
    %3121 = vmatprep.subr.mxu0 0.0
    %3122 = vmatpush1.xpose.msra.mxu0 %v3102
    %3123 = vmatprep.subr.mxu0 0.0
    %3124 = vmatpush1.xpose.msra.mxu0 %v3105
    %3125 = vmatprep.subr.mxu0 0.0
    %3126 = vmatpush1.xpose.msra.mxu0 %v3108
    %3127 = vmatprep.subr.mxu0 0.0
    %3128 = vmatpush1.xpose.msra.mxu0 %v3111
    %3129 = vmatprep.subr.mxu0 0.0
    %3130 = vmatpush1.xpose.msra.mxu0 0.0
    %3131 = vmatprep.subr.mxu0 0.0
    %3132 = vmatpush1.xpose.msra.mxu0 0.0
    %3133 = vmatprep.subr.mxu0 0.0
    %3134 = vmatpush1.xpose.msra.mxu0 0.0
    %3135 = vmatprep.subr.mxu0 0.0
    %3136 = vmatpush1.xpose.msra.mxu0 0.0
    %3137 = vmatprep.subr.mxu0 0.0
    %3138 = vmatpush1.xpose.msra.mxu0 0.0
    %3139 = vmatprep.subr.mxu0 0.0
    %3140 = vmatpush1.xpose.msra.mxu0 0.0
    %3141 = vmatprep.subr.mxu0 0.0
    %3142 = vmatpush1.xpose.msra.mxu0 0.0
    %3143 = vmatprep.subr.mxu0 0.0
    %3144 = vmatpush1.xpose.msra.mxu0 0.0
    %3145 = vmatprep.subr.mxu0 0.0
    %3146 = vmatpush1.xpose.msra.mxu0 0.0
    %3147 = vmatprep.subr.mxu0 0.0
    %3148 = vmatpush1.xpose.msra.mxu0 0.0
    %3149 = vmatprep.subr.mxu0 0.0
    %3150 = vmatpush1.xpose.msra.mxu0 0.0
    %3151 = vmatprep.subr.mxu0 0.0
    %3152 = vmatpush1.xpose.msra.mxu0 0.0
    %3153 = vmatprep.subr.mxu0 0.0
    %3154 = vmatpush1.xpose.msra.mxu0 0.0
    %3155 = vmatprep.subr.mxu0 0.0
    %3156 = vmatpush1.xpose.msra.mxu0 0.0
    %3157 = vmatprep.subr.mxu0 0.0
    %3158 = vmatpush1.xpose.msra.mxu0 0.0
    %3159 = vmatprep.subr.mxu0 0.0
    %3160 = vmatpush1.xpose.msra.mxu0 0.0
    %3161 = vmatprep.subr.mxu0 0.0
    %3162 = vmatpush1.xpose.msra.mxu0 0.0
    %3163 = vmatprep.subr.mxu0 0.0
    %3164 = vmatpush1.xpose.msra.mxu0 0.0
    %3165 = vmatprep.subr.mxu0 0.0
    %3166 = vmatpush1.xpose.msra.mxu0 0.0
    %3167 = vmatprep.subr.mxu0 0.0
    %3168 = vmatpush1.xpose.msra.mxu0 0.0
    %3169 = vmatprep.subr.mxu0 0.0
    %3170 = vmatpush1.xpose.msra.mxu0 0.0
    %3171 = vmatprep.subr.mxu0 0.0
    %3172 = vmatpush1.xpose.msra.mxu0 0.0
    %3173 = vmatprep.subr.mxu0 0.0
    %3174 = vmatpush1.xpose.msra.mxu0 0.0
    %3175 = vmatprep.subr.mxu0 0.0
    %3176 = vmatpush1.xpose.msra.mxu0 0.0
    %3177 = vmatprep.mubr.f32.mxu0 0.0
    %3178 = vmatmul.mubr.f32.gmra.mrb[0].mxu0 %v3066
    %v3179 = vpop.f32.mrb[0].mxu0
    %v3180 = vadd.f32 %v12, %v3179
    %v3181 = vpop.f32.mrb[0].mxu0
    %3182 = vmatprep.mubr.f32.mxu0 0.0
    %3183 = vmatmul.mubr.f32.gmra.mrb[0].mxu0 %v3069
    %v3184 = vpop.f32.mrb[0].mxu0
    %v3185 = vadd.f32 %v13, %v3184
    %v3186 = vpop.f32.mrb[0].mxu0
    %3187 = vmatprep.mubr.f32.mxu0 0.0
    %3188 = vmatmul.mubr.f32.gmra.mrb[0].mxu0 %v3072
    %v3189 = vpop.f32.mrb[0].mxu0
    %v3190 = vadd.f32 %v14, %v3189
    %v3191 = vpop.f32.mrb[0].mxu0
    %3192 = vmatprep.mubr.f32.mxu0 0.0
    %3193 = vmatmul.mubr.f32.gmra.mrb[0].mxu0 %v3075
    %v3194 = vpop.f32.mrb[0].mxu0
    %v3195 = vadd.f32 %v15, %v3194
    %v3196 = vpop.f32.mrb[0].mxu0
    %3197 = vmatprep.mubr.f32.mxu0 0.0
    %3198 = vmatmul.mubr.f32.gmra.mrb[0].mxu0 %v3078
    %v3199 = vpop.f32.mrb[0].mxu0
    %v3200 = vadd.f32 %v16, %v3199
    %v3201 = vpop.f32.mrb[0].mxu0
    %3202 = vmatprep.mubr.f32.mxu0 0.0
    %3203 = vmatmul.mubr.f32.gmra.mrb[0].mxu0 %v3081
    %v3204 = vpop.f32.mrb[0].mxu0
    %v3205 = vadd.f32 %v17, %v3204
    %v3206 = vpop.f32.mrb[0].mxu0
    %3207 = vmatprep.mubr.f32.mxu0 0.0
    %3208 = vmatmul.mubr.f32.gmra.mrb[0].mxu0 %v3084
    %v3209 = vpop.f32.mrb[0].mxu0
    %v3210 = vadd.f32 %v18, %v3209
    %v3211 = vpop.f32.mrb[0].mxu0
    %3212 = vmatprep.mubr.f32.mxu0 0.0
    %3213 = vmatmul.mubr.f32.gmra.mrb[0].mxu0 %v3087
    %v3214 = vpop.f32.mrb[0].mxu0
    %v3215 = vadd.f32 %v19, %v3214
    %v3216 = vpop.f32.mrb[0].mxu0
    %3217 = vdwg.mxu0
    %v3218 = vsel %vm1298, %v3180, -inf
    %3219 = vmax.xlane.f32.xlu0 %v3218
    %v3220 = vpop.xlane.xlu0 %3219
    %v3221 = vsel %vm1298, %v3185, -inf
    %3222 = vmax.xlane.f32.xlu0 %v3221
    %v3223 = vpop.xlane.xlu0 %3222
    %v3224 = vsel %vm1298, %v3190, -inf
    %3225 = vmax.xlane.f32.xlu0 %v3224
    %v3226 = vpop.xlane.xlu0 %3225
    %v3227 = vsel %vm1298, %v3195, -inf
    %3228 = vmax.xlane.f32.xlu0 %v3227
    %v3229 = vpop.xlane.xlu0 %3228
    %v3230 = vsel %vm1298, %v3200, -inf
    %3231 = vmax.xlane.f32.xlu0 %v3230
    %v3232 = vpop.xlane.xlu0 %3231
    %v3233 = vsel %vm1298, %v3205, -inf
    %3234 = vmax.xlane.f32.xlu0 %v3233
    %v3235 = vpop.xlane.xlu0 %3234
    %v3236 = vsel %vm1298, %v3210, -inf
    %3237 = vmax.xlane.f32.xlu0 %v3236
    %v3238 = vpop.xlane.xlu0 %3237
    %v3239 = vsel %vm1298, %v3215, -inf
    %3240 = vmax.xlane.f32.xlu0 %v3239
    %v3241 = vpop.xlane.xlu0 %3240
    %v3242 = vsub.f32 %v3180, %v3220
    %v3243 = vsub.f32 %v3185, %v3223
    %v3244 = vsub.f32 %v3190, %v3226
    %v3245 = vsub.f32 %v3195, %v3229
    %v3246 = vsub.f32 %v3200, %v3232
    %v3247 = vsub.f32 %v3205, %v3235
    %v3248 = vsub.f32 %v3210, %v3238
    %v3249 = vsub.f32 %v3215, %v3241
    %v3250 = vmul.f32 %v3242, 1.442695
    %v3251 = vpow.pop %v3250
    %v3252 = vmul.f32 %v3243, 1.442695
    %v3253 = vpow.pop %v3252
    %v3254 = vmul.f32 %v3244, 1.442695
    %v3255 = vpow.pop %v3254
    %v3256 = vmul.f32 %v3245, 1.442695
    %v3257 = vpow.pop %v3256
    %v3258 = vmul.f32 %v3246, 1.442695
    %v3259 = vpow.pop %v3258
    %v3260 = vmul.f32 %v3247, 1.442695
    %v3261 = vpow.pop %v3260
    %v3262 = vmul.f32 %v3248, 1.442695
    %v3263 = vpow.pop %v3262
    %v3264 = vmul.f32 %v3249, 1.442695
    %v3265 = vpow.pop %v3264
    %v3266 = vsel %vm1298, %v3251, 0.0
    %3267 = vadd.xlane.f32.xlu0 %v3266
    %v3268 = vpop.xlane.xlu0 %3267
    %v3269 = vsel %vm1298, %v3253, 0.0
    %3270 = vadd.xlane.f32.xlu0 %v3269
    %v3271 = vpop.xlane.xlu0 %3270
    %v3272 = vsel %vm1298, %v3255, 0.0
    %3273 = vadd.xlane.f32.xlu0 %v3272
    %v3274 = vpop.xlane.xlu0 %3273
    %v3275 = vsel %vm1298, %v3257, 0.0
    %3276 = vadd.xlane.f32.xlu0 %v3275
    %v3277 = vpop.xlane.xlu0 %3276
    %v3278 = vsel %vm1298, %v3259, 0.0
    %3279 = vadd.xlane.f32.xlu0 %v3278
    %v3280 = vpop.xlane.xlu0 %3279
    %v3281 = vsel %vm1298, %v3261, 0.0
    %3282 = vadd.xlane.f32.xlu0 %v3281
    %v3283 = vpop.xlane.xlu0 %3282
    %v3284 = vsel %vm1298, %v3263, 0.0
    %3285 = vadd.xlane.f32.xlu0 %v3284
    %v3286 = vpop.xlane.xlu0 %3285
    %v3287 = vsel %vm1298, %v3265, 0.0
    %3288 = vadd.xlane.f32.xlu0 %v3287
    %v3289 = vpop.xlane.xlu0 %3288
    %v3290 = vrcp.pop %v3268
    %v3291 = vrcp.pop %v3271
    %v3292 = vrcp.pop %v3274
    %v3293 = vrcp.pop %v3277
    %v3294 = vrcp.pop %v3280
    %v3295 = vrcp.pop %v3283
    %v3296 = vrcp.pop %v3286
    %v3297 = vrcp.pop %v3289
    %v3298 = vmul.f32 %v3251, %v3290
    %v3299 = vmul.f32 %v3253, %v3291
    %v3300 = vmul.f32 %v3255, %v3292
    %v3301 = vmul.f32 %v3257, %v3293
    %v3302 = vmul.f32 %v3259, %v3294
    %v3303 = vmul.f32 %v3261, %v3295
    %v3304 = vmul.f32 %v3263, %v3296
    %v3305 = vmul.f32 %v3265, %v3297
    %v3307 = vsel %vm1298, %v3298, 0
    %v3310 = vsel %vm1298, %v3299, 0
    %v3313 = vsel %vm1298, %v3300, 0
    %v3316 = vsel %vm1298, %v3301, 0
    %v3319 = vsel %vm1298, %v3302, 0
    %v3322 = vsel %vm1298, %v3303, 0
    %v3325 = vsel %vm1298, %v3304, 0
    %v3328 = vsel %vm1298, %v3305, 0
    %3330 = vmatprep.subr.mxu0 0.0
    %3331 = vmatpush1.msra.mxu0 %v2993
    %3332 = vmatprep.subr.mxu0 0.0
    %3333 = vmatpush1.msra.mxu0 %v3061
    %3334 = vmatprep.subr.mxu0 0.0
    %3335 = vmatpush1.msra.mxu0 %v2994
    %3336 = vmatprep.subr.mxu0 0.0
    %3337 = vmatpush1.msra.mxu0 %v3062
    %3338 = vmatprep.subr.mxu0 0.0
    %3339 = vmatpush1.msra.mxu0 %v2995
    %3340 = vmatprep.subr.mxu0 0.0
    %3341 = vmatpush1.msra.mxu0 %v3063
    %3342 = vmatprep.subr.mxu0 0.0
    %3343 = vmatpush1.msra.mxu0 %v2996
    %3344 = vmatprep.subr.mxu0 0.0
    %3345 = vmatpush1.msra.mxu0 %v3064
    %3346 = vmatprep.subr.mxu0 0.0
    %3347 = vmatpush1.msra.mxu0 0.0
    %3348 = vmatprep.subr.mxu0 0.0
    %3349 = vmatpush1.msra.mxu0 0.0
    %3350 = vmatprep.subr.mxu0 0.0
    %3351 = vmatpush1.msra.mxu0 0.0
    %3352 = vmatprep.subr.mxu0 0.0
    %3353 = vmatpush1.msra.mxu0 0.0
    %3354 = vmatprep.subr.mxu0 0.0
    %3355 = vmatpush1.msra.mxu0 0.0
    %3356 = vmatprep.subr.mxu0 0.0
    %3357 = vmatpush1.msra.mxu0 0.0
    %3358 = vmatprep.subr.mxu0 0.0
    %3359 = vmatpush1.msra.mxu0 0.0
    %3360 = vmatprep.subr.mxu0 0.0
    %3361 = vmatpush1.msra.mxu0 0.0
    %3362 = vmatprep.subr.mxu0 0.0
    %3363 = vmatpush1.msra.mxu0 0.0
    %3364 = vmatprep.subr.mxu0 0.0
    %3365 = vmatpush1.msra.mxu0 0.0
    %3366 = vmatprep.subr.mxu0 0.0
    %3367 = vmatpush1.msra.mxu0 0.0
    %3368 = vmatprep.subr.mxu0 0.0
    %3369 = vmatpush1.msra.mxu0 0.0
    %3370 = vmatprep.subr.mxu0 0.0
    %3371 = vmatpush1.msra.mxu0 0.0
    %3372 = vmatprep.subr.mxu0 0.0
    %3373 = vmatpush1.msra.mxu0 0.0
    %3374 = vmatprep.subr.mxu0 0.0
    %3375 = vmatpush1.msra.mxu0 0.0
    %3376 = vmatprep.subr.mxu0 0.0
    %3377 = vmatpush1.msra.mxu0 0.0
    %3378 = vmatprep.subr.mxu0 0.0
    %3379 = vmatpush1.msra.mxu0 0.0
    %3380 = vmatprep.subr.mxu0 0.0
    %3381 = vmatpush1.msra.mxu0 0.0
    %3382 = vmatprep.subr.mxu0 0.0
    %3383 = vmatpush1.msra.mxu0 0.0
    %3384 = vmatprep.subr.mxu0 0.0
    %3385 = vmatpush1.msra.mxu0 0.0
    %3386 = vmatprep.subr.mxu0 0.0
    %3387 = vmatpush1.msra.mxu0 0.0
    %3388 = vmatprep.subr.mxu0 0.0
    %3389 = vmatpush1.msra.mxu0 0.0
    %3390 = vmatprep.subr.mxu0 0.0
    %3391 = vmatpush1.msra.mxu0 0.0
    %3392 = vmatprep.subr.mxu0 0.0
    %3393 = vmatpush1.msra.mxu0 0.0
    %3394 = vmatprep.mubr.f32.mxu0 0.0
    %3395 = vmatmul.mubr.f32.gmra.mrb[0].mxu0 %v3307
    %v3396 = vpop.f32.mrb[0].mxu0
    %v3397 = vadd.f32 0.0, %v3396
    %v3398 = vpop.f32.mrb[0].mxu0
    %3399 = vmatprep.mubr.f32.mxu0 0.0
    %3400 = vmatmul.mubr.f32.gmra.mrb[0].mxu0 %v3310
    %v3401 = vpop.f32.mrb[0].mxu0
    %v3402 = vadd.f32 0.0, %v3401
    %v3403 = vpop.f32.mrb[0].mxu0
    %3404 = vmatprep.mubr.f32.mxu0 0.0
    %3405 = vmatmul.mubr.f32.gmra.mrb[0].mxu0 %v3313
    %v3406 = vpop.f32.mrb[0].mxu0
    %v3407 = vadd.f32 0.0, %v3406
    %v3408 = vpop.f32.mrb[0].mxu0
    %3409 = vmatprep.mubr.f32.mxu0 0.0
    %3410 = vmatmul.mubr.f32.gmra.mrb[0].mxu0 %v3316
    %v3411 = vpop.f32.mrb[0].mxu0
    %v3412 = vadd.f32 0.0, %v3411
    %v3413 = vpop.f32.mrb[0].mxu0
    %3414 = vmatprep.mubr.f32.mxu0 0.0
    %3415 = vmatmul.mubr.f32.gmra.mrb[0].mxu0 %v3319
    %v3416 = vpop.f32.mrb[0].mxu0
    %v3417 = vadd.f32 0.0, %v3416
    %v3418 = vpop.f32.mrb[0].mxu0
    %3419 = vmatprep.mubr.f32.mxu0 0.0
    %3420 = vmatmul.mubr.f32.gmra.mrb[0].mxu0 %v3322
    %v3421 = vpop.f32.mrb[0].mxu0
    %v3422 = vadd.f32 0.0, %v3421
    %v3423 = vpop.f32.mrb[0].mxu0
    %3424 = vmatprep.mubr.f32.mxu0 0.0
    %3425 = vmatmul.mubr.f32.gmra.mrb[0].mxu0 %v3325
    %v3426 = vpop.f32.mrb[0].mxu0
    %v3427 = vadd.f32 0.0, %v3426
    %v3428 = vpop.f32.mrb[0].mxu0
    %3429 = vmatprep.mubr.f32.mxu0 0.0
    %3430 = vmatmul.mubr.f32.gmra.mrb[0].mxu0 %v3328
    %v3431 = vpop.f32.mrb[0].mxu0
    %v3432 = vadd.f32 0.0, %v3431
    %v3433 = vpop.f32.mrb[0].mxu0
    %3434 = vdwg.mxu0
    %v3435 = vcombine.low %v3397, %v3417
    %v3436 = vcombine.high %v3397, %v3417
    %v3438 = vunpack.c.l.s4 1983009808
    %v3439 = vunpack.c.0.s8 %v3438
    %v3440 = vlaneseq
    %v3441 = vshrl.u32 %v3440, 7
    %v3442 = vsub.s32 %v3439, %v3441
    %v3443 = vrot.slane %v3435, %v3442
    %v3445 = vunpack.c.l.s4 1983009808
    %v3446 = vunpack.c.0.s8 %v3445
    %v3447 = vlaneseq
    %v3448 = vshrl.u32 %v3447, 7
    %v3449 = vsub.s32 %v3446, %v3448
    %v3450 = vrot.slane %v3436, %v3449
    %v3451 = vcombine.low %v3407, %v3427
    %v3452 = vcombine.high %v3407, %v3427
    %v3454 = vunpack.c.l.s4 1983009808
    %v3455 = vunpack.c.0.s8 %v3454
    %v3456 = vlaneseq
    %v3457 = vshrl.u32 %v3456, 7
    %v3458 = vsub.s32 %v3455, %v3457
    %v3459 = vrot.slane %v3451, %v3458
    %v3461 = vunpack.c.l.s4 1983009808
    %v3462 = vunpack.c.0.s8 %v3461
    %v3463 = vlaneseq
    %v3464 = vshrl.u32 %v3463, 7
    %v3465 = vsub.s32 %v3462, %v3464
    %v3466 = vrot.slane %v3452, %v3465
    %v3467 = vcombine.low %v3443, %v3459
    %v3468 = vcombine.high %v3443, %v3459
    %v3470 = vunpack.c.l.s4 1934713408
    %v3471 = vunpack.c.0.s8 %v3470
    %v3472 = vlaneseq
    %v3473 = vshrl.u32 %v3472, 7
    %v3474 = vsub.s32 %v3471, %v3473
    %v3475 = vrot.slane %v3467, %v3474
    %v3477 = vunpack.c.l.s4 1934713408
    %v3478 = vunpack.c.0.s8 %v3477
    %v3479 = vlaneseq
    %v3480 = vshrl.u32 %v3479, 7
    %v3481 = vsub.s32 %v3478, %v3480
    %v3482 = vrot.slane %v3468, %v3481
    %v3483 = vcombine.low %v3450, %v3466
    %v3484 = vcombine.high %v3450, %v3466
    %v3486 = vunpack.c.l.s4 1934713408
    %v3487 = vunpack.c.0.s8 %v3486
    %v3488 = vlaneseq
    %v3489 = vshrl.u32 %v3488, 7
    %v3490 = vsub.s32 %v3487, %v3489
    %v3491 = vrot.slane %v3483, %v3490
    %v3493 = vunpack.c.l.s4 1934713408
    %v3494 = vunpack.c.0.s8 %v3493
    %v3495 = vlaneseq
    %v3496 = vshrl.u32 %v3495, 7
    %v3497 = vsub.s32 %v3494, %v3496
    %v3498 = vrot.slane %v3484, %v3497
    %v3499 = vcombine.high %v3475, 0.0
    %v3500 = vcombine.high %v3482, 0.0
    %v3501 = vcombine.high %v3491, 0.0
    %v3502 = vcombine.high %v3498, 0.0
    %v3503 = vcombine.low %v3402, %v3422
    %v3504 = vcombine.high %v3402, %v3422
    %v3506 = vunpack.c.l.s4 1983009808
    %v3507 = vunpack.c.0.s8 %v3506
    %v3508 = vlaneseq
    %v3509 = vshrl.u32 %v3508, 7
    %v3510 = vsub.s32 %v3507, %v3509
    %v3511 = vrot.slane %v3503, %v3510
    %v3513 = vunpack.c.l.s4 1983009808
    %v3514 = vunpack.c.0.s8 %v3513
    %v3515 = vlaneseq
    %v3516 = vshrl.u32 %v3515, 7
    %v3517 = vsub.s32 %v3514, %v3516
    %v3518 = vrot.slane %v3504, %v3517
    %v3519 = vcombine.low %v3412, %v3432
    %v3520 = vcombine.high %v3412, %v3432
    %v3522 = vunpack.c.l.s4 1983009808
    %v3523 = vunpack.c.0.s8 %v3522
    %v3524 = vlaneseq
    %v3525 = vshrl.u32 %v3524, 7
    %v3526 = vsub.s32 %v3523, %v3525
    %v3527 = vrot.slane %v3519, %v3526
    %v3529 = vunpack.c.l.s4 1983009808
    %v3530 = vunpack.c.0.s8 %v3529
    %v3531 = vlaneseq
    %v3532 = vshrl.u32 %v3531, 7
    %v3533 = vsub.s32 %v3530, %v3532
    %v3534 = vrot.slane %v3520, %v3533
    %v3535 = vcombine.low %v3511, %v3527
    %v3536 = vcombine.high %v3511, %v3527
    %v3538 = vunpack.c.l.s4 1934713408
    %v3539 = vunpack.c.0.s8 %v3538
    %v3540 = vlaneseq
    %v3541 = vshrl.u32 %v3540, 7
    %v3542 = vsub.s32 %v3539, %v3541
    %v3543 = vrot.slane %v3535, %v3542
    %v3545 = vunpack.c.l.s4 1934713408
    %v3546 = vunpack.c.0.s8 %v3545
    %v3547 = vlaneseq
    %v3548 = vshrl.u32 %v3547, 7
    %v3549 = vsub.s32 %v3546, %v3548
    %v3550 = vrot.slane %v3536, %v3549
    %v3551 = vcombine.low %v3518, %v3534
    %v3552 = vcombine.high %v3518, %v3534
    %v3554 = vunpack.c.l.s4 1934713408
    %v3555 = vunpack.c.0.s8 %v3554
    %v3556 = vlaneseq
    %v3557 = vshrl.u32 %v3556, 7
    %v3558 = vsub.s32 %v3555, %v3557
    %v3559 = vrot.slane %v3551, %v3558
    %v3561 = vunpack.c.l.s4 1934713408
    %v3562 = vunpack.c.0.s8 %v3561
    %v3563 = vlaneseq
    %v3564 = vshrl.u32 %v3563, 7
    %v3565 = vsub.s32 %v3562, %v3564
    %v3566 = vrot.slane %v3552, %v3565
    %v3567 = vcombine.high %v3543, 0.0
    %v3568 = vcombine.high %v3550, 0.0
    %v3569 = vcombine.high %v3559, 0.0
    %v3570 = vcombine.high %v3566, 0.0
    %v3571 = vcombine.low %v3475, %v3482
    %v3573 = vunpack.c.l.s4 1983009808
    %v3574 = vunpack.c.0.s8 %v3573
    %v3575 = vlaneseq
    %v3576 = vshrl.u32 %v3575, 7
    %v3577 = vsub.s32 %v3574, %v3576
    %v3578 = vrot.slane %v3571, %v3577
    %v3579 = vcombine.low %v3499, %v3500
    %v3581 = vunpack.c.l.s4 1983009808
    %v3582 = vunpack.c.0.s8 %v3581
    %v3583 = vlaneseq
    %v3584 = vshrl.u32 %v3583, 7
    %v3585 = vsub.s32 %v3582, %v3584
    %v3586 = vrot.slane %v3579, %v3585
    %v3587 = vcombine.low %v3491, %v3498
    %v3589 = vunpack.c.l.s4 1983009808
    %v3590 = vunpack.c.0.s8 %v3589
    %v3591 = vlaneseq
    %v3592 = vshrl.u32 %v3591, 7
    %v3593 = vsub.s32 %v3590, %v3592
    %v3594 = vrot.slane %v3587, %v3593
    %v3595 = vcombine.low %v3501, %v3502
    %v3597 = vunpack.c.l.s4 1983009808
    %v3598 = vunpack.c.0.s8 %v3597
    %v3599 = vlaneseq
    %v3600 = vshrl.u32 %v3599, 7
    %v3601 = vsub.s32 %v3598, %v3600
    %v3602 = vrot.slane %v3595, %v3601
    %v3603 = vcombine.low %v3578, %v3586
    %v3604 = vcombine.high %v3578, %v3586
    %v3606 = vunpack.c.l.s4 1934713408
    %v3607 = vunpack.c.0.s8 %v3606
    %v3608 = vlaneseq
    %v3609 = vshrl.u32 %v3608, 7
    %v3610 = vsub.s32 %v3607, %v3609
    %v3611 = vrot.slane %v3603, %v3610
    %v3613 = vunpack.c.l.s4 1934713408
    %v3614 = vunpack.c.0.s8 %v3613
    %v3615 = vlaneseq
    %v3616 = vshrl.u32 %v3615, 7
    %v3617 = vsub.s32 %v3614, %v3616
    %v3618 = vrot.slane %v3604, %v3617
    %v3619 = vcombine.low %v3594, %v3602
    %v3620 = vcombine.high %v3594, %v3602
    %v3622 = vunpack.c.l.s4 1934713408
    %v3623 = vunpack.c.0.s8 %v3622
    %v3624 = vlaneseq
    %v3625 = vshrl.u32 %v3624, 7
    %v3626 = vsub.s32 %v3623, %v3625
    %v3627 = vrot.slane %v3619, %v3626
    %v3629 = vunpack.c.l.s4 1934713408
    %v3630 = vunpack.c.0.s8 %v3629
    %v3631 = vlaneseq
    %v3632 = vshrl.u32 %v3631, 7
    %v3633 = vsub.s32 %v3630, %v3632
    %v3634 = vrot.slane %v3620, %v3633
    %v3635 = vcombine.low %v3611, %v3627
    %v3636 = vcombine.high %v3611, %v3627
    %v3637 = vcombine.low %v3618, %v3634
    %v3638 = vcombine.high %v3618, %v3634
    %v3639 = vcombine.low %v3543, %v3550
    %v3641 = vunpack.c.l.s4 1983009808
    %v3642 = vunpack.c.0.s8 %v3641
    %v3643 = vlaneseq
    %v3644 = vshrl.u32 %v3643, 7
    %v3645 = vsub.s32 %v3642, %v3644
    %v3646 = vrot.slane %v3639, %v3645
    %v3647 = vcombine.low %v3567, %v3568
    %v3649 = vunpack.c.l.s4 1983009808
    %v3650 = vunpack.c.0.s8 %v3649
    %v3651 = vlaneseq
    %v3652 = vshrl.u32 %v3651, 7
    %v3653 = vsub.s32 %v3650, %v3652
    %v3654 = vrot.slane %v3647, %v3653
    %v3655 = vcombine.low %v3559, %v3566
    %v3657 = vunpack.c.l.s4 1983009808
    %v3658 = vunpack.c.0.s8 %v3657
    %v3659 = vlaneseq
    %v3660 = vshrl.u32 %v3659, 7
    %v3661 = vsub.s32 %v3658, %v3660
    %v3662 = vrot.slane %v3655, %v3661
    %v3663 = vcombine.low %v3569, %v3570
    %v3665 = vunpack.c.l.s4 1983009808
    %v3666 = vunpack.c.0.s8 %v3665
    %v3667 = vlaneseq
    %v3668 = vshrl.u32 %v3667, 7
    %v3669 = vsub.s32 %v3666, %v3668
    %v3670 = vrot.slane %v3663, %v3669
    %v3671 = vcombine.low %v3646, %v3654
    %v3672 = vcombine.high %v3646, %v3654
    %v3674 = vunpack.c.l.s4 1934713408
    %v3675 = vunpack.c.0.s8 %v3674
    %v3676 = vlaneseq
    %v3677 = vshrl.u32 %v3676, 7
    %v3678 = vsub.s32 %v3675, %v3677
    %v3679 = vrot.slane %v3671, %v3678
    %v3681 = vunpack.c.l.s4 1934713408
    %v3682 = vunpack.c.0.s8 %v3681
    %v3683 = vlaneseq
    %v3684 = vshrl.u32 %v3683, 7
    %v3685 = vsub.s32 %v3682, %v3684
    %v3686 = vrot.slane %v3672, %v3685
    %v3687 = vcombine.low %v3662, %v3670
    %v3688 = vcombine.high %v3662, %v3670
    %v3690 = vunpack.c.l.s4 1934713408
    %v3691 = vunpack.c.0.s8 %v3690
    %v3692 = vlaneseq
    %v3693 = vshrl.u32 %v3692, 7
    %v3694 = vsub.s32 %v3691, %v3693
    %v3695 = vrot.slane %v3687, %v3694
    %v3697 = vunpack.c.l.s4 1934713408
    %v3698 = vunpack.c.0.s8 %v3697
    %v3699 = vlaneseq
    %v3700 = vshrl.u32 %v3699, 7
    %v3701 = vsub.s32 %v3698, %v3700
    %v3702 = vrot.slane %v3688, %v3701
    %v3703 = vcombine.low %v3679, %v3695
    %v3704 = vcombine.high %v3679, %v3695
    %v3705 = vcombine.low %v3686, %v3702
    %v3706 = vcombine.high %v3686, %v3702
    %3709 = vrot.lane.b32.xlu0 %v3636, 8
    %v3710 = vpop.permute.xlu0 %3709
    %3711 = vrot.lane.b32.xlu0 %v3704, 8
    %v3712 = vpop.permute.xlu0 %3711
    %3717 = vrot.lane.b32.xlu0 %v3637, 16
    %v3718 = vpop.permute.xlu0 %3717
    %3719 = vrot.lane.b32.xlu0 %v3705, 16
    %v3720 = vpop.permute.xlu0 %3719
    %3725 = vrot.lane.b32.xlu0 %v3638, 24
    %v3726 = vpop.permute.xlu0 %3725
    %3727 = vrot.lane.b32.xlu0 %v3706, 24
    %v3728 = vpop.permute.xlu0 %3727
    %v3731 = vsel %vm1144, %v3635, %v3710
    %v3732 = vsel %vm1144, %v3703, %v3712
    %v3733 = vsel %vm30, %v3731, %v3718
    %v3734 = vsel %vm30, %v3732, %v3720
    %v3735 = vsel %vm1816, %v3733, %v3726
    %v3736 = vsel %vm1816, %v3734, %v3728
    %v3737 = vadd.f32 %v2033, %v3735
    %v3738 = vadd.f32 %v2034, %v3736
    %v3739 = vsel %vm135, %v3737, 0.0
    %3740 = vadd.xlane.f32.xlu0 %v3739
    %v3741 = vpop.xlane.xlu0 %3740
    %v3742 = vsel %vm135, %v3738, 0.0
    %3743 = vadd.xlane.f32.xlu0 %v3742
    %v3744 = vpop.xlane.xlu0 %3743
    %v3745 = vmul.f32 %v3741, %v142
    %v3746 = vmul.f32 %v3744, %v142
    %v3747 = vsub.f32 %v3737, %v3745
    %v3748 = vsub.f32 %v3738, %v3746
    %v3749 = vmul.f32 %v3747, %v3747
    %v3750 = vmul.f32 %v3748, %v3748
    %v3751 = vsel %vm135, %v3749, 0.0
    %3752 = vadd.xlane.f32.xlu0 %v3751
    %v3753 = vpop.xlane.xlu0 %3752
    %v3754 = vsel %vm135, %v3750, 0.0
    %3755 = vadd.xlane.f32.xlu0 %v3754
    %v3756 = vpop.xlane.xlu0 %3755
    %v3757 = vmul.f32 %v3753, %v142
    %v3758 = vmul.f32 %v3756, %v142
    %v3759 = vadd.f32 %v3757, 1e-05
    %v3760 = vadd.f32 %v3758, 1e-05
    %v3761 = vrsqrt.pop %v3759
    %v3762 = vrsqrt.pop %v3760
    %v3763 = vmul.f32 %v3747, %v3761
    %v3764 = vmul.f32 %v3748, %v3762
    %v3765 = vlaneseq
    %v3766 = vshrl.u32 %v3765, 7
    %v3767 = vsub.s32 0, %v3766
    %v3768 = vrot.slane %v2042, %v3767
    %v3769 = vmul.f32 %v3763, %v3768
    %v3770 = vmul.f32 %v3764, %v3768
    %v3771 = vlaneseq
    %v3772 = vshrl.u32 %v3771, 7
    %v3773 = vsub.s32 0, %v3772
    %v3774 = vrot.slane %v2043, %v3773
    %v3775 = vadd.f32 %v3769, %v3774
    %v3776 = vadd.f32 %v3770, %v3774
    %v3777 = vlaneseq
    %v3778 = vshrl.u32 %v3777, 7
    %v3779 = vsub.s32 0, %v3778
    %v3780 = vrot.slane %v2048, %v3779
    %v3782 = vsel %vm135, %v3775, 0
    %v3785 = vsel %vm135, %v3776, 0
    %3787 = vmatprep.subr.mxu0 0.0
    %3788 = vmatpush1.msra.mxu0 %v2044
    %3789 = vmatprep.subr.mxu0 0.0
    %3790 = vmatpush1.msra.mxu0 %v2045
    %3791 = vmatprep.subr.mxu0 0.0
    %3792 = vmatpush1.msra.mxu0 %v2046
    %3793 = vmatprep.subr.mxu0 0.0
    %3794 = vmatpush1.msra.mxu0 %v2047
    %3795 = vmatprep.subr.mxu0 0.0
    %3796 = vmatpush1.msra.mxu0 0.0
    %3797 = vmatprep.subr.mxu0 0.0
    %3798 = vmatpush1.msra.mxu0 0.0
    %3799 = vmatprep.subr.mxu0 0.0
    %3800 = vmatpush1.msra.mxu0 0.0
    %3801 = vmatprep.subr.mxu0 0.0
    %3802 = vmatpush1.msra.mxu0 0.0
    %3803 = vmatprep.subr.mxu0 0.0
    %3804 = vmatpush1.msra.mxu0 0.0
    %3805 = vmatprep.subr.mxu0 0.0
    %3806 = vmatpush1.msra.mxu0 0.0
    %3807 = vmatprep.subr.mxu0 0.0
    %3808 = vmatpush1.msra.mxu0 0.0
    %3809 = vmatprep.subr.mxu0 0.0
    %3810 = vmatpush1.msra.mxu0 0.0
    %3811 = vmatprep.subr.mxu0 0.0
    %3812 = vmatpush1.msra.mxu0 0.0
    %3813 = vmatprep.subr.mxu0 0.0
    %3814 = vmatpush1.msra.mxu0 0.0
    %3815 = vmatprep.subr.mxu0 0.0
    %3816 = vmatpush1.msra.mxu0 0.0
    %3817 = vmatprep.subr.mxu0 0.0
    %3818 = vmatpush1.msra.mxu0 0.0
    %3819 = vmatprep.subr.mxu0 0.0
    %3820 = vmatpush1.msra.mxu0 0.0
    %3821 = vmatprep.subr.mxu0 0.0
    %3822 = vmatpush1.msra.mxu0 0.0
    %3823 = vmatprep.subr.mxu0 0.0
    %3824 = vmatpush1.msra.mxu0 0.0
    %3825 = vmatprep.subr.mxu0 0.0
    %3826 = vmatpush1.msra.mxu0 0.0
    %3827 = vmatprep.subr.mxu0 0.0
    %3828 = vmatpush1.msra.mxu0 0.0
    %3829 = vmatprep.subr.mxu0 0.0
    %3830 = vmatpush1.msra.mxu0 0.0
    %3831 = vmatprep.subr.mxu0 0.0
    %3832 = vmatpush1.msra.mxu0 0.0
    %3833 = vmatprep.subr.mxu0 0.0
    %3834 = vmatpush1.msra.mxu0 0.0
    %3835 = vmatprep.subr.mxu0 0.0
    %3836 = vmatpush1.msra.mxu0 0.0
    %3837 = vmatprep.subr.mxu0 0.0
    %3838 = vmatpush1.msra.mxu0 0.0
    %3839 = vmatprep.subr.mxu0 0.0
    %3840 = vmatpush1.msra.mxu0 0.0
    %3841 = vmatprep.subr.mxu0 0.0
    %3842 = vmatpush1.msra.mxu0 0.0
    %3843 = vmatprep.subr.mxu0 0.0
    %3844 = vmatpush1.msra.mxu0 0.0
    %3845 = vmatprep.subr.mxu0 0.0
    %3846 = vmatpush1.msra.mxu0 0.0
    %3847 = vmatprep.subr.mxu0 0.0
    %3848 = vmatpush1.msra.mxu0 0.0
    %3849 = vmatprep.subr.mxu0 0.0
    %3850 = vmatpush1.msra.mxu0 0.0
    %3851 = vmatprep.mubr.f32.mxu0 0.0
    %3852 = vmatmul.mubr.f32.gmra.mrb[0].mxu0 %v3782
    %v3853 = vpop.f32.mrb[0].mxu0
    %v3854 = vadd.f32 %v3780, %v3853
    %v3855 = vpop.f32.mrb[0].mxu0
    %3856 = vmatprep.mubr.f32.mxu0 0.0
    %3857 = vmatmul.mubr.f32.gmra.mrb[0].mxu0 %v3785
    %v3858 = vpop.f32.mrb[0].mxu0
    %v3859 = vadd.f32 %v3780, %v3858
    %v3860 = vpop.f32.mrb[0].mxu0
    %3861 = vdwg.mxu0
    %v3862 = vmax.f32 %v3854, 0.0
    %v3863 = vmax.f32 %v3859, 0.0
    %v3865 = vsel %vm1298, %v3862, 0
    %v3868 = vsel %vm1298, %v3863, 0
    %3870 = vmatprep.subr.mxu0 0.0
    %3871 = vmatpush1.msra.mxu0 %v2049
    %3872 = vmatprep.subr.mxu0 0.0
    %3873 = vmatpush1.msra.mxu0 %v2050
    %3874 = vmatprep.subr.mxu0 0.0
    %3875 = vmatpush1.msra.mxu0 %v2051
    %3876 = vmatprep.subr.mxu0 0.0
    %3877 = vmatpush1.msra.mxu0 %v2052
    %3878 = vmatprep.subr.mxu0 0.0
    %3879 = vmatpush1.msra.mxu0 %v2053
    %3880 = vmatprep.subr.mxu0 0.0
    %3881 = vmatpush1.msra.mxu0 %v2054
    %3882 = vmatprep.subr.mxu0 0.0
    %3883 = vmatpush1.msra.mxu0 %v2055
    %3884 = vmatprep.subr.mxu0 0.0
    %3885 = vmatpush1.msra.mxu0 %v2056
    %3886 = vmatprep.subr.mxu0 0.0
    %3887 = vmatpush1.msra.mxu0 0.0
    %3888 = vmatprep.subr.mxu0 0.0
    %3889 = vmatpush1.msra.mxu0 0.0
    %3890 = vmatprep.subr.mxu0 0.0
    %3891 = vmatpush1.msra.mxu0 0.0
    %3892 = vmatprep.subr.mxu0 0.0
    %3893 = vmatpush1.msra.mxu0 0.0
    %3894 = vmatprep.subr.mxu0 0.0
    %3895 = vmatpush1.msra.mxu0 0.0
    %3896 = vmatprep.subr.mxu0 0.0
    %3897 = vmatpush1.msra.mxu0 0.0
    %3898 = vmatprep.subr.mxu0 0.0
    %3899 = vmatpush1.msra.mxu0 0.0
    %3900 = vmatprep.subr.mxu0 0.0
    %3901 = vmatpush1.msra.mxu0 0.0
    %3902 = vmatprep.subr.mxu0 0.0
    %3903 = vmatpush1.msra.mxu0 0.0
    %3904 = vmatprep.subr.mxu0 0.0
    %3905 = vmatpush1.msra.mxu0 0.0
    %3906 = vmatprep.subr.mxu0 0.0
    %3907 = vmatpush1.msra.mxu0 0.0
    %3908 = vmatprep.subr.mxu0 0.0
    %3909 = vmatpush1.msra.mxu0 0.0
    %3910 = vmatprep.subr.mxu0 0.0
    %3911 = vmatpush1.msra.mxu0 0.0
    %3912 = vmatprep.subr.mxu0 0.0
    %3913 = vmatpush1.msra.mxu0 0.0
    %3914 = vmatprep.subr.mxu0 0.0
    %3915 = vmatpush1.msra.mxu0 0.0
    %3916 = vmatprep.subr.mxu0 0.0
    %3917 = vmatpush1.msra.mxu0 0.0
    %3918 = vmatprep.subr.mxu0 0.0
    %3919 = vmatpush1.msra.mxu0 0.0
    %3920 = vmatprep.subr.mxu0 0.0
    %3921 = vmatpush1.msra.mxu0 0.0
    %3922 = vmatprep.subr.mxu0 0.0
    %3923 = vmatpush1.msra.mxu0 0.0
    %3924 = vmatprep.subr.mxu0 0.0
    %3925 = vmatpush1.msra.mxu0 0.0
    %3926 = vmatprep.subr.mxu0 0.0
    %3927 = vmatpush1.msra.mxu0 0.0
    %3928 = vmatprep.subr.mxu0 0.0
    %3929 = vmatpush1.msra.mxu0 0.0
    %3930 = vmatprep.subr.mxu0 0.0
    %3931 = vmatpush1.msra.mxu0 0.0
    %3932 = vmatprep.subr.mxu0 0.0
    %3933 = vmatpush1.msra.mxu0 0.0
    %3934 = vmatprep.mubr.f32.mxu0 0.0
    %3935 = vmatmul.mubr.f32.gmra.mrb[0].mxu0 %v3865
    %v3936 = vpop.f32.mrb[0].mxu0
    %v3937 = vadd.f32 0.0, %v3936
    %v3938 = vpop.f32.mrb[0].mxu0
    %3939 = vmatprep.mubr.f32.mxu0 0.0
    %3940 = vmatmul.mubr.f32.gmra.mrb[0].mxu0 %v3868
    %v3941 = vpop.f32.mrb[0].mxu0
    %v3942 = vadd.f32 0.0, %v3941
    %v3943 = vpop.f32.mrb[0].mxu0
    %3944 = vdwg.mxu0
    %v3945 = vadd.f32 %v3737, %v3937
    %v3946 = vadd.f32 %v3738, %v3942
    %v3947 = vlaneseq
    %v3948 = vshrl.u32 %v3947, 7
    %v3949 = vsub.s32 0, %v3948
    %v3950 = vrot.slane %v2057, %v3949
    %v3951 = vadd.f32 %v3945, %v3950
    %v3952 = vadd.f32 %v3946, %v3950
    %v3954 = vsel %vm30, %v20, 0
    %3956 = vmatprep.subr.mxu0 0.0
    %3957 = vmatpush1.msra.mxu0 %v3951
    %3958 = vmatprep.subr.mxu0 0.0
    %3959 = vmatpush1.msra.mxu0 %v3952
    %3960 = vmatprep.subr.mxu0 0.0
    %3961 = vmatpush1.msra.mxu0 0.0
    %3962 = vmatprep.subr.mxu0 0.0
    %3963 = vmatpush1.msra.mxu0 0.0
    %3964 = vmatprep.subr.mxu0 0.0
    %3965 = vmatpush1.msra.mxu0 0.0
    %3966 = vmatprep.subr.mxu0 0.0
    %3967 = vmatpush1.msra.mxu0 0.0
    %3968 = vmatprep.subr.mxu0 0.0
    %3969 = vmatpush1.msra.mxu0 0.0
    %3970 = vmatprep.subr.mxu0 0.0
    %3971 = vmatpush1.msra.mxu0 0.0
    %3972 = vmatprep.subr.mxu0 0.0
    %3973 = vmatpush1.msra.mxu0 0.0
    %3974 = vmatprep.subr.mxu0 0.0
    %3975 = vmatpush1.msra.mxu0 0.0
    %3976 = vmatprep.subr.mxu0 0.0
    %3977 = vmatpush1.msra.mxu0 0.0
    %3978 = vmatprep.subr.mxu0 0.0
    %3979 = vmatpush1.msra.mxu0 0.0
    %3980 = vmatprep.subr.mxu0 0.0
    %3981 = vmatpush1.msra.mxu0 0.0
    %3982 = vmatprep.subr.mxu0 0.0
    %3983 = vmatpush1.msra.mxu0 0.0
    %3984 = vmatprep.subr.mxu0 0.0
    %3985 = vmatpush1.msra.mxu0 0.0
    %3986 = vmatprep.subr.mxu0 0.0
    %3987 = vmatpush1.msra.mxu0 0.0
    %3988 = vmatprep.subr.mxu0 0.0
    %3989 = vmatpush1.msra.mxu0 0.0
    %3990 = vmatprep.subr.mxu0 0.0
    %3991 = vmatpush1.msra.mxu0 0.0
    %3992 = vmatprep.subr.mxu0 0.0
    %3993 = vmatpush1.msra.mxu0 0.0
    %3994 = vmatprep.subr.mxu0 0.0
    %3995 = vmatpush1.msra.mxu0 0.0
    %3996 = vmatprep.subr.mxu0 0.0
    %3997 = vmatpush1.msra.mxu0 0.0
    %3998 = vmatprep.subr.mxu0 0.0
    %3999 = vmatpush1.msra.mxu0 0.0
    %4000 = vmatprep.subr.mxu0 0.0
    %4001 = vmatpush1.msra.mxu0 0.0
    %4002 = vmatprep.subr.mxu0 0.0
    %4003 = vmatpush1.msra.mxu0 0.0
    %4004 = vmatprep.subr.mxu0 0.0
    %4005 = vmatpush1.msra.mxu0 0.0
    %4006 = vmatprep.subr.mxu0 0.0
    %4007 = vmatpush1.msra.mxu0 0.0
    %4008 = vmatprep.subr.mxu0 0.0
    %4009 = vmatpush1.msra.mxu0 0.0
    %4010 = vmatprep.subr.mxu0 0.0
    %4011 = vmatpush1.msra.mxu0 0.0
    %4012 = vmatprep.subr.mxu0 0.0
    %4013 = vmatpush1.msra.mxu0 0.0
    %4014 = vmatprep.subr.mxu0 0.0
    %4015 = vmatpush1.msra.mxu0 0.0
    %4016 = vmatprep.subr.mxu0 0.0
    %4017 = vmatpush1.msra.mxu0 0.0
    %4018 = vmatprep.subr.mxu0 0.0
    %4019 = vmatpush1.msra.mxu0 0.0
    %4020 = vmatprep.mubr.f32.mxu0 0.0
    %4021 = vmatmul.mubr.f32.gmra.mrb[0].mxu0 %v3954
    %v4022 = vpop.f32.mrb[0].mxu0
    %v4023 = vadd.f32 0.0, %v4022
    %v4024 = vpop.f32.mrb[0].mxu0
    %4025 = vdwg.mxu0
    %v4026 = vld [vmem:[%s1 + $0x110] sm:$0xff]
    %v4027 = vld [vmem:[%s1 + $0x118] sm:$0xff]
    %v4028 = vld [vmem:[%s1 + $0x120] sm:$0xff]
    %v4029 = vld [vmem:[%s1 + $0x128] sm:$0xff]
    %v4030 = vld [vmem:[%s1 + $0x15f] sm:$0x1]
    %v4031 = vlaneseq
    %v4032 = vshrl.u32 %v4031, 7
    %v4033 = vsub.s32 0, %v4032
    %v4034 = vrot.slane %v4030, %v4033
    %v4036 = vsel %vm135, %v4023, 0
    %4038 = vmatprep.subr.mxu0 0.0
    %4039 = vmatpush1.msra.mxu0 %v4026
    %4040 = vmatprep.subr.mxu0 0.0
    %4041 = vmatpush1.msra.mxu0 %v4027
    %4042 = vmatprep.subr.mxu0 0.0
    %4043 = vmatpush1.msra.mxu0 %v4028
    %4044 = vmatprep.subr.mxu0 0.0
    %4045 = vmatpush1.msra.mxu0 %v4029
    %4046 = vmatprep.subr.mxu0 0.0
    %4047 = vmatpush1.msra.mxu0 0.0
    %4048 = vmatprep.subr.mxu0 0.0
    %4049 = vmatpush1.msra.mxu0 0.0
    %4050 = vmatprep.subr.mxu0 0.0
    %4051 = vmatpush1.msra.mxu0 0.0
    %4052 = vmatprep.subr.mxu0 0.0
    %4053 = vmatpush1.msra.mxu0 0.0
    %4054 = vmatprep.subr.mxu0 0.0
    %4055 = vmatpush1.msra.mxu0 0.0
    %4056 = vmatprep.subr.mxu0 0.0
    %4057 = vmatpush1.msra.mxu0 0.0
    %4058 = vmatprep.subr.mxu0 0.0
    %4059 = vmatpush1.msra.mxu0 0.0
    %4060 = vmatprep.subr.mxu0 0.0
    %4061 = vmatpush1.msra.mxu0 0.0
    %4062 = vmatprep.subr.mxu0 0.0
    %4063 = vmatpush1.msra.mxu0 0.0
    %4064 = vmatprep.subr.mxu0 0.0
    %4065 = vmatpush1.msra.mxu0 0.0
    %4066 = vmatprep.subr.mxu0 0.0
    %4067 = vmatpush1.msra.mxu0 0.0
    %4068 = vmatprep.subr.mxu0 0.0
    %4069 = vmatpush1.msra.mxu0 0.0
    %4070 = vmatprep.subr.mxu0 0.0
    %4071 = vmatpush1.msra.mxu0 0.0
    %4072 = vmatprep.subr.mxu0 0.0
    %4073 = vmatpush1.msra.mxu0 0.0
    %4074 = vmatprep.subr.mxu0 0.0
    %4075 = vmatpush1.msra.mxu0 0.0
    %4076 = vmatprep.subr.mxu0 0.0
    %4077 = vmatpush1.msra.mxu0 0.0
    %4078 = vmatprep.subr.mxu0 0.0
    %4079 = vmatpush1.msra.mxu0 0.0
    %4080 = vmatprep.subr.mxu0 0.0
    %4081 = vmatpush1.msra.mxu0 0.0
    %4082 = vmatprep.subr.mxu0 0.0
    %4083 = vmatpush1.msra.mxu0 0.0
    %4084 = vmatprep.subr.mxu0 0.0
    %4085 = vmatpush1.msra.mxu0 0.0
    %4086 = vmatprep.subr.mxu0 0.0
    %4087 = vmatpush1.msra.mxu0 0.0
    %4088 = vmatprep.subr.mxu0 0.0
    %4089 = vmatpush1.msra.mxu0 0.0
    %4090 = vmatprep.subr.mxu0 0.0
    %4091 = vmatpush1.msra.mxu0 0.0
    %4092 = vmatprep.subr.mxu0 0.0
    %4093 = vmatpush1.msra.mxu0 0.0
    %4094 = vmatprep.subr.mxu0 0.0
    %4095 = vmatpush1.msra.mxu0 0.0
    %4096 = vmatprep.subr.mxu0 0.0
    %4097 = vmatpush1.msra.mxu0 0.0
    %4098 = vmatprep.subr.mxu0 0.0
    %4099 = vmatpush1.msra.mxu0 0.0
    %4100 = vmatprep.subr.mxu0 0.0
    %4101 = vmatpush1.msra.mxu0 0.0
    %4102 = vmatprep.mubr.f32.mxu0 0.0
    %4103 = vmatmul.mubr.f32.gmra.mrb[0].mxu0 %v4036
    %v4104 = vpop.f32.mrb[0].mxu0
    %v4105 = vadd.f32 %v4034, %v4104
    %v4106 = vpop.f32.mrb[0].mxu0
    %4107 = vdwg.mxu0
    %v4108 = vmax.f32 %v4105, 0.0
    %v4109 = vld [vmem:[%s1 + $0x130] sm:$0xff]
    %v4110 = vld [vmem:[%s1 + $0x138] sm:$0xff]
    %v4111 = vld [vmem:[%s1 + $0x140] sm:$0xff]
    %v4112 = vld [vmem:[%s1 + $0x148] sm:$0xff]
    %v4113 = vld [vmem:[%s1 + $0x160] sm:$0x1]
    %v4114 = vlaneseq
    %v4115 = vshrl.u32 %v4114, 7
    %v4116 = vsub.s32 0, %v4115
    %v4117 = vrot.slane %v4113, %v4116
    %v4119 = vsel %vm135, %v4108, 0
    %4121 = vmatprep.subr.mxu0 0.0
    %4122 = vmatpush1.msra.mxu0 %v4109
    %4123 = vmatprep.subr.mxu0 0.0
    %4124 = vmatpush1.msra.mxu0 %v4110
    %4125 = vmatprep.subr.mxu0 0.0
    %4126 = vmatpush1.msra.mxu0 %v4111
    %4127 = vmatprep.subr.mxu0 0.0
    %4128 = vmatpush1.msra.mxu0 %v4112
    %4129 = vmatprep.subr.mxu0 0.0
    %4130 = vmatpush1.msra.mxu0 0.0
    %4131 = vmatprep.subr.mxu0 0.0
    %4132 = vmatpush1.msra.mxu0 0.0
    %4133 = vmatprep.subr.mxu0 0.0
    %4134 = vmatpush1.msra.mxu0 0.0
    %4135 = vmatprep.subr.mxu0 0.0
    %4136 = vmatpush1.msra.mxu0 0.0
    %4137 = vmatprep.subr.mxu0 0.0
    %4138 = vmatpush1.msra.mxu0 0.0
    %4139 = vmatprep.subr.mxu0 0.0
    %4140 = vmatpush1.msra.mxu0 0.0
    %4141 = vmatprep.subr.mxu0 0.0
    %4142 = vmatpush1.msra.mxu0 0.0
    %4143 = vmatprep.subr.mxu0 0.0
    %4144 = vmatpush1.msra.mxu0 0.0
    %4145 = vmatprep.subr.mxu0 0.0
    %4146 = vmatpush1.msra.mxu0 0.0
    %4147 = vmatprep.subr.mxu0 0.0
    %4148 = vmatpush1.msra.mxu0 0.0
    %4149 = vmatprep.subr.mxu0 0.0
    %4150 = vmatpush1.msra.mxu0 0.0
    %4151 = vmatprep.subr.mxu0 0.0
    %4152 = vmatpush1.msra.mxu0 0.0
    %4153 = vmatprep.subr.mxu0 0.0
    %4154 = vmatpush1.msra.mxu0 0.0
    %4155 = vmatprep.subr.mxu0 0.0
    %4156 = vmatpush1.msra.mxu0 0.0
    %4157 = vmatprep.subr.mxu0 0.0
    %4158 = vmatpush1.msra.mxu0 0.0
    %4159 = vmatprep.subr.mxu0 0.0
    %4160 = vmatpush1.msra.mxu0 0.0
    %4161 = vmatprep.subr.mxu0 0.0
    %4162 = vmatpush1.msra.mxu0 0.0
    %4163 = vmatprep.subr.mxu0 0.0
    %4164 = vmatpush1.msra.mxu0 0.0
    %4165 = vmatprep.subr.mxu0 0.0
    %4166 = vmatpush1.msra.mxu0 0.0
    %4167 = vmatprep.subr.mxu0 0.0
    %4168 = vmatpush1.msra.mxu0 0.0
    %4169 = vmatprep.subr.mxu0 0.0
    %4170 = vmatpush1.msra.mxu0 0.0
    %4171 = vmatprep.subr.mxu0 0.0
    %4172 = vmatpush1.msra.mxu0 0.0
    %4173 = vmatprep.subr.mxu0 0.0
    %4174 = vmatpush1.msra.mxu0 0.0
    %4175 = vmatprep.subr.mxu0 0.0
    %4176 = vmatpush1.msra.mxu0 0.0
    %4177 = vmatprep.subr.mxu0 0.0
    %4178 = vmatpush1.msra.mxu0 0.0
    %4179 = vmatprep.subr.mxu0 0.0
    %4180 = vmatpush1.msra.mxu0 0.0
    %4181 = vmatprep.subr.mxu0 0.0
    %4182 = vmatpush1.msra.mxu0 0.0
    %4183 = vmatprep.subr.mxu0 0.0
    %4184 = vmatpush1.msra.mxu0 0.0
    %4185 = vmatprep.mubr.f32.mxu0 0.0
    %4186 = vmatmul.mubr.f32.gmra.mrb[0].mxu0 %v4119
    %v4187 = vpop.f32.mrb[0].mxu0
    %v4188 = vadd.f32 %v4117, %v4187
    %v4189 = vpop.f32.mrb[0].mxu0
    %4190 = vdwg.mxu0
    %vm4191 = vcmask 17408
    %4192 = vst.msk [vmem:[#allocation2] sm:$0x3] %vm4191, %v4188
    // Predicated region
    $region10: #{transformer_forward.1} parent=1 // pred_check
      _
    $region11: #{transformer_forward.1} parent=1 // pred_check_branch
      %4194 = sbr.rel (0) target = $region13
    $region12: #{transformer_forward.1} parent=1 // pred_region
      %s4196 = ssub.s32 32, 32
      %4197 = vsyncadd [#allocation3], %s4196
      %s4199 = sshll.u32 [#allocation2], 4
      %s4200 = int_to_ptr.vmem [resolvable:$true] %s4199
      %4202 = dma.vmem_to_hbm [thread:$0]  %s4200, 32, %s2, [#allocation3]
    $region13: #{transformer_forward.1} parent=1 // pred_fallthru
      _
    // Predicated region
    $region14: #{transformer_forward.1} parent=1 // pred_check
      _
    $region15: #{transformer_forward.1} parent=1 // pred_check_branch
      %4204 = sbr.rel (0) target = $region17
    $region16: #{transformer_forward.1} parent=1 // pred_region
      %4205 = dma.done [#allocation3], 32
    $region17: #{transformer_forward.1} parent=1 // pred_fallthru
      _
    %4206 = vsyncpa [#allocation3], 1

</llo_original>
